<compile_context>
chip_gen: v5e
topology: v5e:2x2
jax: 0.10.0
libtpu: 0.0.40
codegen_flags: <defaults>
</compile_context>

<pallas_src>
import jax
import jax.numpy as jnp
from jax import lax
from jax.experimental import pallas as pl
from jax.experimental.pallas import tpu as pltpu
import numpy as np


def residual_block_kernel(x_ref, w1_ref, w2_ref, out_ref, acc_ref, mid_ref):
    # x_ref:   (H+4, W+2, C)   bf16  zero-padded input, one batch element (resident)
    # w1_ref:  (3, 3*C, C)     bf16  conv1 weights, ky-major, kx folded into K
    # w2_ref:  (3, 3*C, C)     bf16  conv2 weights
    # out_ref: (TH, W, C)      bf16  output tile (rows [t*TH, t*TH + TH))
    # acc_ref: ((TH+2)*W, C)   f32   VMEM accumulator for conv1 (incl. 1-row halo)
    # mid_ref: (TH+2, W+16, C) bf16  VMEM, relu(conv1) stored at columns [8, 8+W)
    TH, W, C = out_ref.shape
    t = pl.program_id(1)
    r0 = pl.multiple_of(t * TH, TH)         # first padded-input row of this tile's slab
    M1 = (TH + 2) * W
    M2 = TH * W

    # ---- conv1 on TH+2 rows (1-row halo each side), kx folded into K --------
    for ky in range(3):
        rows = pl.ds(r0 + ky, TH + 2)
        patch = jnp.concatenate(
            [x_ref[rows, 0:W, :],            # kx = 0
             x_ref[rows, 1:W + 1, :],        # kx = 1
             x_ref[rows, 2:W + 2, :]],       # kx = 2
            axis=-1).reshape(M1, 3 * C)
        contrib = jnp.dot(patch, w1_ref[ky], preferred_element_type=jnp.float32)
        if ky == 0:
            acc_ref[...] = contrib           # first tap assigns: no zero-init store
        else:
            acc_ref[...] += contrib

    mid = jnp.maximum(acc_ref[...], 0.0).astype(jnp.bfloat16).reshape(TH + 2, W, C)

    # ---- stage relu(conv1) in the W-padded scratch: all stores are aligned ---
    mid_ref[:, 0:8, :] = jnp.zeros((TH + 2, 8, C), jnp.bfloat16)            # left pad
    mid_ref[:, 8 + W:16 + W, :] = jnp.zeros((TH + 2, 8, C), jnp.bfloat16)   # right pad
    mid_ref[:, 8:8 + W, :] = mid                                            # aligned vst

    # Halo rows that fall outside the image are conv2's zero padding, not conv1
    # outputs -> zero them on the boundary tiles only.
    @pl.when(t == 0)
    def _():
        mid_ref[0:1, 8:8 + W, :] = jnp.zeros((1, W, C), jnp.bfloat16)

    @pl.when(t == pl.num_programs(1) - 1)
    def _():
        mid_ref[TH + 1:TH + 2, 8:8 + W, :] = jnp.zeros((1, W, C), jnp.bfloat16)

    # ---- conv2, same folded structure, reading the padded scratch ------------
    acc2 = None
    for ky in range(3):
        patch = jnp.concatenate(
            [mid_ref[ky:ky + TH, 7:7 + W, :],     # kx = 0  (mid col w-1)
             mid_ref[ky:ky + TH, 8:8 + W, :],     # kx = 1  (mid col w)
             mid_ref[ky:ky + TH, 9:9 + W, :]],    # kx = 2  (mid col w+1)
            axis=-1).reshape(M2, 3 * C)
        d = jnp.dot(patch, w2_ref[ky], preferred_element_type=jnp.float32)
        acc2 = d if acc2 is None else acc2 + d

    # ---- residual add + ReLU, lane-dense bf16 store ---------------------------
    residual = x_ref[pl.ds(r0 + 2, TH), 1:W + 1, :].reshape(M2, C)
    out = jnp.maximum(acc2 + residual.astype(jnp.float32), 0.0)
    out_ref[...] = out.reshape(TH, W, C).astype(out_ref.dtype)


def _pick_tile_h(H, W):
    # Largest tile height that divides H while keeping the per-tap patch +
    # f32 accumulator comfortably inside the 64-vreg file.
    for th in (8, 4, 2, 1):
        if H % th == 0 and (th + 2) * W <= 128:
            return th
    return 1


def residual_block_no_batch(x_nchw, w1_hwio, w2_hwio):
    """x_nchw: (N, Cin, H, W) f32; weights in HWIO: (3,3,Cin,P), (3,3,P,P)."""
    # TODO(synk): stride != 1 and a non-None `downsample` submodule are not
    # implemented (the module's default path is stride=1, downsample=None).
    N, Cin, H, W = x_nchw.shape
    P = w1_hwio.shape[-1]
    assert Cin == P, "residual add without downsample requires inplanes == planes"
    assert W % 8 == 0, "W must be a multiple of 8 (sublane width)"
    # TODO(synk): remainder tiles for H not divisible by the tile height are not
    # needed for the shapes exercised here.

    C = max(128, ((max(Cin, P) + 127) // 128) * 128)   # lane-dense channel width
    TH = _pick_tile_h(H, W)

    # NCHW -> NHWC, bf16, channels zero-padded to C; spatial zero-pad:
    # 2 rows top/bottom (conv1 halo feeding conv2's 1-row halo), 1 col each side.
    x = jnp.transpose(x_nchw, (0, 2, 3, 1)).astype(jnp.bfloat16)
    x = jnp.pad(x, ((0, 0), (2, 2), (1, 1), (0, C - Cin)))

    def prep_w(w):
        w = w.astype(jnp.bfloat16)
        w = jnp.pad(w, ((0, 0), (0, 0), (0, C - w.shape[2]), (0, C - w.shape[3])))
        return w.reshape(3, 3 * C, C)                  # (ky, kx*C + cin, cout)

    w1 = prep_w(w1_hwio)
    w2 = prep_w(w2_hwio)

    grid = (N, H // TH)
    flops = 2 * 2 * N * H * W * 9 * C * C              # 2 convs, 2 flops per MAC
    bytes_accessed = (x.size + w1.size + w2.size + N * H * W * C) * 2   # bf16

    out = pl.pallas_call(
        residual_block_kernel,
        out_shape=jax.ShapeDtypeStruct((N, H, W, C), jnp.bfloat16),
        grid_spec=pltpu.PrefetchScalarGridSpec(
            num_scalar_prefetch=0,
            grid=grid,
            in_specs=[
                # full padded image; index constant along t -> resident across H tiles
                pl.BlockSpec((pl.Squeezed(), H + 4, W + 2, C),
                             lambda n, t: (n, 0, 0, 0)),
                # weights: constant index maps -> stay resident in VMEM
                pl.BlockSpec((3, 3 * C, C), lambda n, t: (0, 0, 0)),
                pl.BlockSpec((3, 3 * C, C), lambda n, t: (0, 0, 0)),
            ],
            out_specs=pl.BlockSpec((pl.Squeezed(), TH, W, C),
                                   lambda n, t: (n, t, 0, 0)),
            scratch_shapes=[
                pltpu.VMEM(((TH + 2) * W, C), jnp.float32),     # conv1 accumulator
                pltpu.VMEM((TH + 2, W + 16, C), jnp.bfloat16),  # W-padded relu(conv1)
            ],
        ),
        compiler_params=pltpu.CompilerParams(
            dimension_semantics=("parallel", "parallel"),
            vmem_limit_bytes=32 * 1024 * 1024,
        ),
        cost_estimate=pl.CostEstimate(flops=flops, transcendentals=0,
                                      bytes_accessed=bytes_accessed),
    )(x, w1, w2)

    out = out[..., :P].astype(x_nchw.dtype)            # drop channel padding
    return jnp.transpose(out, (0, 3, 1, 2))            # back to NCHW


# ---------------- pure-JAX reference (for correctness check) ----------------
def _conv3x3_same(x_nhwc, w_hwio):
    return lax.conv_general_dilated(
        x_nhwc, w_hwio, window_strides=(1, 1), padding="SAME",
        dimension_numbers=("NHWC", "HWIO", "NHWC"))


def reference(x_nchw, w1_hwio, w2_hwio):
    x = jnp.transpose(x_nchw, (0, 2, 3, 1))
    out = jax.nn.relu(_conv3x3_same(x, w1_hwio))
    out = _conv3x3_same(out, w2_hwio)
    out = jax.nn.relu(out + x)
    return jnp.transpose(out, (0, 3, 1, 2))


if __name__ == "__main__":
    key = jax.random.PRNGKey(0)
    k_x, k_w1, k_w2 = jax.random.split(key, 3)

    N, Cch, H, W = 2, 4, 16, 16          # NCHW, as a PyTorch Conv2d would see it
    inplanes = planes = Cch

    x = jax.random.normal(k_x, (N, Cch, H, W), dtype=jnp.float32)
    # Kaiming-style init, generated directly in HWIO = (3, 3, in, out).
    w1 = jax.random.normal(k_w1, (3, 3, inplanes, planes), jnp.float32) * \
        (2.0 / (inplanes * 9)) ** 0.5
    w2 = jax.random.normal(k_w2, (3, 3, planes, planes), jnp.float32) * \
        (2.0 / (planes * 9)) ** 0.5

    out = residual_block_no_batch(x, w1, w2)
    out = jax.block_until_ready(out)

    ref = reference(x, w1, w2)
    # bf16 activations/weights inside the kernel -> loosened tolerance.
    np.testing.assert_allclose(np.asarray(out), np.asarray(ref),
                               rtol=5e-2, atol=5e-2)
    print("KERNEL_OK")
</pallas_src>

<mosaic_0001>
module attributes {stable_mosaic.version = 11 : i64} {
  func.func @residual_block_kernel(%arg0: i32, %arg1: i32, %arg2: memref<1x20x18x128xbf16, #tpu.memory_space<vmem>>, %arg3: memref<3x384x128xbf16, #tpu.memory_space<vmem>>, %arg4: memref<3x384x128xbf16, #tpu.memory_space<vmem>>, %arg5: memref<1x4x16x128xbf16, #tpu.memory_space<vmem>>, %arg6: memref<96x128xf32, #tpu.memory_space<vmem>>, %arg7: memref<6x32x128xbf16, #tpu.memory_space<vmem>>) attributes {dimension_semantics = [#tpu.dimension_semantics<parallel>, #tpu.dimension_semantics<parallel>], iteration_bounds = array<i64: 2, 4>, scalar_prefetch = 0 : i64, scratch_operands = 2 : i64, tpu.core_type = #tpu.core_type<tc>, window_params = [{transform_indices = @transform_0, window_bounds = array<i64: 1, 20, 18, 128>}, {pipeline_mode = #tpu.pipeline_mode<synchronous>, transform_indices = @transform_1, window_bounds = array<i64: 3, 384, 128>}, {pipeline_mode = #tpu.pipeline_mode<synchronous>, transform_indices = @transform_2, window_bounds = array<i64: 3, 384, 128>}, {transform_indices = @transform_3, window_bounds = array<i64: 1, 4, 16, 128>}]} {
    %c4_i32 = arith.constant 4 : i32
    %0 = arith.muli %arg1, %c4_i32 : i32
    %1 = tpu.assume_multiple %0, 4 : i32
    %c0_i32 = arith.constant 0 : i32
    %2 = arith.addi %1, %c0_i32 : i32
    %c0 = arith.constant 0 : index
    %3 = arith.index_cast %2 : i32 to index
    %c0_0 = arith.constant 0 : index
    %c0_1 = arith.constant 0 : index
    %4 = vector.load %arg2[%c0, %3, %c0_0, %c0_1] : memref<1x20x18x128xbf16, #tpu.memory_space<vmem>>, vector<1x6x16x128xbf16>
    %5 = vector.shape_cast %4 : vector<1x6x16x128xbf16> to vector<6x16x128xbf16>
    %c0_2 = arith.constant 0 : index
    %6 = arith.index_cast %2 : i32 to index
    %c1 = arith.constant 1 : index
    %c0_3 = arith.constant 0 : index
    %7 = vector.load %arg2[%c0_2, %6, %c1, %c0_3] : memref<1x20x18x128xbf16, #tpu.memory_space<vmem>>, vector<1x6x16x128xbf16>
    %8 = vector.shape_cast %7 : vector<1x6x16x128xbf16> to vector<6x16x128xbf16>
    %c0_4 = arith.constant 0 : index
    %9 = arith.index_cast %2 : i32 to index
    %c2 = arith.constant 2 : index
    %c0_5 = arith.constant 0 : index
    %10 = vector.load %arg2[%c0_4, %9, %c2, %c0_5] : memref<1x20x18x128xbf16, #tpu.memory_space<vmem>>, vector<1x6x16x128xbf16>
    %11 = vector.shape_cast %10 : vector<1x6x16x128xbf16> to vector<6x16x128xbf16>
    %12 = tpu.concatenate %5, %8, %11 in 2 : vector<6x16x128xbf16>, vector<6x16x128xbf16>, vector<6x16x128xbf16> -> vector<6x16x384xbf16>
    %13 = vector.shape_cast %12 : vector<6x16x384xbf16> to vector<96x384xbf16>
    %c0_6 = arith.constant 0 : index
    %c0_7 = arith.constant 0 : index
    %c0_8 = arith.constant 0 : index
    %14 = vector.load %arg3[%c0_6, %c0_7, %c0_8] : memref<3x384x128xbf16, #tpu.memory_space<vmem>>, vector<1x384x128xbf16>
    %15 = vector.shape_cast %14 : vector<1x384x128xbf16> to vector<384x128xbf16>
    %cst = arith.constant dense<0.000000e+00> : vector<96x128xf32>
    %16 = tpu.matmul %13, %15, %cst {dimension_numbers = #tpu.dot_dimension_numbers<[1], [0], [0], [1], [0, 0, 1, 1], [], []>} : vector<96x384xbf16>, vector<384x128xbf16>, vector<96x128xf32> -> vector<96x128xf32>
    %c0_9 = arith.constant 0 : index
    %c0_10 = arith.constant 0 : index
    %17 = vector.load %arg6[%c0_9, %c0_10] : memref<96x128xf32, #tpu.memory_space<vmem>>, vector<96x128xf32>
    tpu.vector_store %arg6[%c0_9, %c0_10], %16 {strides = array<i32>} : memref<96x128xf32, #tpu.memory_space<vmem>>, vector<96x128xf32>,
    %c1_i32 = arith.constant 1 : i32
    %18 = arith.addi %1, %c1_i32 : i32
    %c0_11 = arith.constant 0 : index
    %19 = arith.index_cast %18 : i32 to index
    %c0_12 = arith.constant 0 : index
    %c0_13 = arith.constant 0 : index
    %20 = vector.load %arg2[%c0_11, %19, %c0_12, %c0_13] : memref<1x20x18x128xbf16, #tpu.memory_space<vmem>>, vector<1x6x16x128xbf16>
    %21 = vector.shape_cast %20 : vector<1x6x16x128xbf16> to vector<6x16x128xbf16>
    %c0_14 = arith.constant 0 : index
    %22 = arith.index_cast %18 : i32 to index
    %c1_15 = arith.constant 1 : index
    %c0_16 = arith.constant 0 : index
    %23 = vector.load %arg2[%c0_14, %22, %c1_15, %c0_16] : memref<1x20x18x128xbf16, #tpu.memory_space<vmem>>, vector<1x6x16x128xbf16>
    %24 = vector.shape_cast %23 : vector<1x6x16x128xbf16> to vector<6x16x128xbf16>
    %c0_17 = arith.constant 0 : index
    %25 = arith.index_cast %18 : i32 to index
    %c2_18 = arith.constant 2 : index
    %c0_19 = arith.constant 0 : index
    %26 = vector.load %arg2[%c0_17, %25, %c2_18, %c0_19] : memref<1x20x18x128xbf16, #tpu.memory_space<vmem>>, vector<1x6x16x128xbf16>
    %27 = vector.shape_cast %26 : vector<1x6x16x128xbf16> to vector<6x16x128xbf16>
    %28 = tpu.concatenate %21, %24, %27 in 2 : vector<6x16x128xbf16>, vector<6x16x128xbf16>, vector<6x16x128xbf16> -> vector<6x16x384xbf16>
    %29 = vector.shape_cast %28 : vector<6x16x384xbf16> to vector<96x384xbf16>
    %c1_20 = arith.constant 1 : index
    %c0_21 = arith.constant 0 : index
    %c0_22 = arith.constant 0 : index
    %30 = vector.load %arg3[%c1_20, %c0_21, %c0_22] : memref<3x384x128xbf16, #tpu.memory_space<vmem>>, vector<1x384x128xbf16>
    %31 = vector.shape_cast %30 : vector<1x384x128xbf16> to vector<384x128xbf16>
    %cst_23 = arith.constant dense<0.000000e+00> : vector<96x128xf32>
    %32 = tpu.matmul %29, %31, %cst_23 {dimension_numbers = #tpu.dot_dimension_numbers<[1], [0], [0], [1], [0, 0, 1, 1], [], []>} : vector<96x384xbf16>, vector<384x128xbf16>, vector<96x128xf32> -> vector<96x128xf32>
    %c0_24 = arith.constant 0 : index
    %c0_25 = arith.constant 0 : index
    %33 = vector.load %arg6[%c0_24, %c0_25] : memref<96x128xf32, #tpu.memory_space<vmem>>, vector<96x128xf32>
    %34 = arith.addf %33, %32 : vector<96x128xf32>
    %c0_26 = arith.constant 0 : index
    %c0_27 = arith.constant 0 : index
    %35 = vector.load %arg6[%c0_26, %c0_27] : memref<96x128xf32, #tpu.memory_space<vmem>>, vector<96x128xf32>
    tpu.vector_store %arg6[%c0_26, %c0_27], %34 {strides = array<i32>} : memref<96x128xf32, #tpu.memory_space<vmem>>, vector<96x128xf32>,
    %c2_i32 = arith.constant 2 : i32
    %36 = arith.addi %1, %c2_i32 : i32
    %c0_28 = arith.constant 0 : index
    %37 = arith.index_cast %36 : i32 to index
    %c0_29 = arith.constant 0 : index
    %c0_30 = arith.constant 0 : index
    %38 = vector.load %arg2[%c0_28, %37, %c0_29, %c0_30] : memref<1x20x18x128xbf16, #tpu.memory_space<vmem>>, vector<1x6x16x128xbf16>
    %39 = vector.shape_cast %38 : vector<1x6x16x128xbf16> to vector<6x16x128xbf16>
    %c0_31 = arith.constant 0 : index
    %40 = arith.index_cast %36 : i32 to index
    %c1_32 = arith.constant 1 : index
    %c0_33 = arith.constant 0 : index
    %41 = vector.load %arg2[%c0_31, %40, %c1_32, %c0_33] : memref<1x20x18x128xbf16, #tpu.memory_space<vmem>>, vector<1x6x16x128xbf16>
    %42 = vector.shape_cast %41 : vector<1x6x16x128xbf16> to vector<6x16x128xbf16>
    %c0_34 = arith.constant 0 : index
    %43 = arith.index_cast %36 : i32 to index
    %c2_35 = arith.constant 2 : index
    %c0_36 = arith.constant 0 : index
    %44 = vector.load %arg2[%c0_34, %43, %c2_35, %c0_36] : memref<1x20x18x128xbf16, #tpu.memory_space<vmem>>, vector<1x6x16x128xbf16>
    %45 = vector.shape_cast %44 : vector<1x6x16x128xbf16> to vector<6x16x128xbf16>
    %46 = tpu.concatenate %39, %42, %45 in 2 : vector<6x16x128xbf16>, vector<6x16x128xbf16>, vector<6x16x128xbf16> -> vector<6x16x384xbf16>
    %47 = vector.shape_cast %46 : vector<6x16x384xbf16> to vector<96x384xbf16>
    %c2_37 = arith.constant 2 : index
    %c0_38 = arith.constant 0 : index
    %c0_39 = arith.constant 0 : index
    %48 = vector.load %arg3[%c2_37, %c0_38, %c0_39] : memref<3x384x128xbf16, #tpu.memory_space<vmem>>, vector<1x384x128xbf16>
    %49 = vector.shape_cast %48 : vector<1x384x128xbf16> to vector<384x128xbf16>
    %cst_40 = arith.constant dense<0.000000e+00> : vector<96x128xf32>
    %50 = tpu.matmul %47, %49, %cst_40 {dimension_numbers = #tpu.dot_dimension_numbers<[1], [0], [0], [1], [0, 0, 1, 1], [], []>} : vector<96x384xbf16>, vector<384x128xbf16>, vector<96x128xf32> -> vector<96x128xf32>
    %c0_41 = arith.constant 0 : index
    %c0_42 = arith.constant 0 : index
    %51 = vector.load %arg6[%c0_41, %c0_42] : memref<96x128xf32, #tpu.memory_space<vmem>>, vector<96x128xf32>
    %52 = arith.addf %51, %50 : vector<96x128xf32>
    %c0_43 = arith.constant 0 : index
    %c0_44 = arith.constant 0 : index
    %53 = vector.load %arg6[%c0_43, %c0_44] : memref<96x128xf32, #tpu.memory_space<vmem>>, vector<96x128xf32>
    tpu.vector_store %arg6[%c0_43, %c0_44], %52 {strides = array<i32>} : memref<96x128xf32, #tpu.memory_space<vmem>>, vector<96x128xf32>,
    %c0_45 = arith.constant 0 : index
    %c0_46 = arith.constant 0 : index
    %54 = vector.load %arg6[%c0_45, %c0_46] : memref<96x128xf32, #tpu.memory_space<vmem>>, vector<96x128xf32>
    %cst_47 = arith.constant 0.000000e+00 : f32
    %55 = vector.broadcast %cst_47 : f32 to vector<96x128xf32>
    %56 = arith.maximumf %54, %55 : vector<96x128xf32>
    %57 = arith.truncf %56 : vector<96x128xf32> to vector<96x128xbf16>
    %58 = vector.shape_cast %57 : vector<96x128xbf16> to vector<6x16x128xbf16>
    %cst_48 = arith.constant 0.000000e+00 : bf16
    %59 = vector.broadcast %cst_48 : bf16 to vector<6x8x128xbf16>
    %c0_49 = arith.constant 0 : index
    %c0_50 = arith.constant 0 : index
    %c0_51 = arith.constant 0 : index
    %60 = vector.load %arg7[%c0_49, %c0_50, %c0_51] : memref<6x32x128xbf16, #tpu.memory_space<vmem>>, vector<6x8x128xbf16>
    tpu.vector_store %arg7[%c0_49, %c0_50, %c0_51], %59 {strides = array<i32>} : memref<6x32x128xbf16, #tpu.memory_space<vmem>>, vector<6x8x128xbf16>,
    %cst_52 = arith.constant 0.000000e+00 : bf16
    %61 = vector.broadcast %cst_52 : bf16 to vector<6x8x128xbf16>
    %c0_53 = arith.constant 0 : index
    %c24 = arith.constant 24 : index
    %c0_54 = arith.constant 0 : index
    %62 = vector.load %arg7[%c0_53, %c24, %c0_54] : memref<6x32x128xbf16, #tpu.memory_space<vmem>>, vector<6x8x128xbf16>
    tpu.vector_store %arg7[%c0_53, %c24, %c0_54], %61 {strides = array<i32>} : memref<6x32x128xbf16, #tpu.memory_space<vmem>>, vector<6x8x128xbf16>,
    %c0_55 = arith.constant 0 : index
    %c8 = arith.constant 8 : index
    %c0_56 = arith.constant 0 : index
    %63 = vector.load %arg7[%c0_55, %c8, %c0_56] : memref<6x32x128xbf16, #tpu.memory_space<vmem>>, vector<6x16x128xbf16>
    tpu.vector_store %arg7[%c0_55, %c8, %c0_56], %58 {strides = array<i32>} : memref<6x32x128xbf16, #tpu.memory_space<vmem>>, vector<6x16x128xbf16>,
    %c0_i32_57 = arith.constant 0 : i32
    %64 = arith.cmpi eq, %arg1, %c0_i32_57 : i32
    %65 = arith.extui %64 : i1 to i32
    %c0_i32_58 = arith.constant 0 : i32
    %66 = arith.cmpi ne, %65, %c0_i32_58 : i32
    scf.if %66 {
      %cst_106 = arith.constant 0.000000e+00 : bf16
      %110 = vector.broadcast %cst_106 : bf16 to vector<1x16x128xbf16>
      %c0_107 = arith.constant 0 : index
      %c8_108 = arith.constant 8 : index
      %c0_109 = arith.constant 0 : index
      %111 = vector.load %arg7[%c0_107, %c8_108, %c0_109] : memref<6x32x128xbf16, #tpu.memory_space<vmem>>, vector<1x16x128xbf16>
      tpu.vector_store %arg7[%c0_107, %c8_108, %c0_109], %110 {strides = array<i32>} : memref<6x32x128xbf16, #tpu.memory_space<vmem>>, vector<1x16x128xbf16>,
    } else {
    }
    %c3_i32 = arith.constant 3 : i32
    %67 = arith.cmpi eq, %arg1, %c3_i32 : i32
    %68 = arith.extui %67 : i1 to i32
    %c0_i32_59 = arith.constant 0 : i32
    %69 = arith.cmpi ne, %68, %c0_i32_59 : i32
    scf.if %69 {
      %cst_106 = arith.constant 0.000000e+00 : bf16
      %110 = vector.broadcast %cst_106 : bf16 to vector<1x16x128xbf16>
      %c5 = arith.constant 5 : index
      %c8_107 = arith.constant 8 : index
      %c0_108 = arith.constant 0 : index
      %111 = vector.load %arg7[%c5, %c8_107, %c0_108] : memref<6x32x128xbf16, #tpu.memory_space<vmem>>, vector<1x16x128xbf16>
      tpu.vector_store %arg7[%c5, %c8_107, %c0_108], %110 {strides = array<i32>} : memref<6x32x128xbf16, #tpu.memory_space<vmem>>, vector<1x16x128xbf16>,
    } else {
    }
    %c0_60 = arith.constant 0 : index
    %c7 = arith.constant 7 : index
    %c0_61 = arith.constant 0 : index
    %70 = vector.load %arg7[%c0_60, %c7, %c0_61] : memref<6x32x128xbf16, #tpu.memory_space<vmem>>, vector<4x16x128xbf16>
    %c0_62 = arith.constant 0 : index
    %c8_63 = arith.constant 8 : index
    %c0_64 = arith.constant 0 : index
    %71 = vector.load %arg7[%c0_62, %c8_63, %c0_64] : memref<6x32x128xbf16, #tpu.memory_space<vmem>>, vector<4x16x128xbf16>
    %c0_65 = arith.constant 0 : index
    %c9 = arith.constant 9 : index
    %c0_66 = arith.constant 0 : index
    %72 = vector.load %arg7[%c0_65, %c9, %c0_66] : memref<6x32x128xbf16, #tpu.memory_space<vmem>>, vector<4x16x128xbf16>
    %73 = tpu.concatenate %70, %71, %72 in 2 : vector<4x16x128xbf16>, vector<4x16x128xbf16>, vector<4x16x128xbf16> -> vector<4x16x384xbf16>
    %74 = vector.shape_cast %73 : vector<4x16x384xbf16> to vector<64x384xbf16>
    %c0_67 = arith.constant 0 : index
    %c0_68 = arith.constant 0 : index
    %c0_69 = arith.constant 0 : index
    %75 = vector.load %arg4[%c0_67, %c0_68, %c0_69] : memref<3x384x128xbf16, #tpu.memory_space<vmem>>, vector<1x384x128xbf16>
    %76 = vector.shape_cast %75 : vector<1x384x128xbf16> to vector<384x128xbf16>
    %cst_70 = arith.constant dense<0.000000e+00> : vector<64x128xf32>
    %77 = tpu.matmul %74, %76, %cst_70 {dimension_numbers = #tpu.dot_dimension_numbers<[1], [0], [0], [1], [0, 0, 1, 1], [], []>} : vector<64x384xbf16>, vector<384x128xbf16>, vector<64x128xf32> -> vector<64x128xf32>
    %c1_71 = arith.constant 1 : index
    %c7_72 = arith.constant 7 : index
    %c0_73 = arith.constant 0 : index
    %78 = vector.load %arg7[%c1_71, %c7_72, %c0_73] : memref<6x32x128xbf16, #tpu.memory_space<vmem>>, vector<4x16x128xbf16>
    %c1_74 = arith.constant 1 : index
    %c8_75 = arith.constant 8 : index
    %c0_76 = arith.constant 0 : index
    %79 = vector.load %arg7[%c1_74, %c8_75, %c0_76] : memref<6x32x128xbf16, #tpu.memory_space<vmem>>, vector<4x16x128xbf16>
    %c1_77 = arith.constant 1 : index
    %c9_78 = arith.constant 9 : index
    %c0_79 = arith.constant 0 : index
    %80 = vector.load %arg7[%c1_77, %c9_78, %c0_79] : memref<6x32x128xbf16, #tpu.memory_space<vmem>>, vector<4x16x128xbf16>
    %81 = tpu.concatenate %78, %79, %80 in 2 : vector<4x16x128xbf16>, vector<4x16x128xbf16>, vector<4x16x128xbf16> -> vector<4x16x384xbf16>
    %82 = vector.shape_cast %81 : vector<4x16x384xbf16> to vector<64x384xbf16>
    %c1_80 = arith.constant 1 : index
    %c0_81 = arith.constant 0 : index
    %c0_82 = arith.constant 0 : index
    %83 = vector.load %arg4[%c1_80, %c0_81, %c0_82] : memref<3x384x128xbf16, #tpu.memory_space<vmem>>, vector<1x384x128xbf16>
    %84 = vector.shape_cast %83 : vector<1x384x128xbf16> to vector<384x128xbf16>
    %cst_83 = arith.constant dense<0.000000e+00> : vector<64x128xf32>
    %85 = tpu.matmul %82, %84, %cst_83 {dimension_numbers = #tpu.dot_dimension_numbers<[1], [0], [0], [1], [0, 0, 1, 1], [], []>} : vector<64x384xbf16>, vector<384x128xbf16>, vector<64x128xf32> -> vector<64x128xf32>
    %86 = arith.addf %77, %85 : vector<64x128xf32>
    %c2_84 = arith.constant 2 : index
    %c7_85 = arith.constant 7 : index
    %c0_86 = arith.constant 0 : index
    %87 = vector.load %arg7[%c2_84, %c7_85, %c0_86] : memref<6x32x128xbf16, #tpu.memory_space<vmem>>, vector<4x16x128xbf16>
    %c2_87 = arith.constant 2 : index
    %c8_88 = arith.constant 8 : index
    %c0_89 = arith.constant 0 : index
    %88 = vector.load %arg7[%c2_87, %c8_88, %c0_89] : memref<6x32x128xbf16, #tpu.memory_space<vmem>>, vector<4x16x128xbf16>
    %c2_90 = arith.constant 2 : index
    %c9_91 = arith.constant 9 : index
    %c0_92 = arith.constant 0 : index
    %89 = vector.load %arg7[%c2_90, %c9_91, %c0_92] : memref<6x32x128xbf16, #tpu.memory_space<vmem>>, vector<4x16x128xbf16>
    %90 = tpu.concatenate %87, %88, %89 in 2 : vector<4x16x128xbf16>, vector<4x16x128xbf16>, vector<4x16x128xbf16> -> vector<4x16x384xbf16>
    %91 = vector.shape_cast %90 : vector<4x16x384xbf16> to vector<64x384xbf16>
    %c2_93 = arith.constant 2 : index
    %c0_94 = arith.constant 0 : index
    %c0_95 = arith.constant 0 : index
    %92 = vector.load %arg4[%c2_93, %c0_94, %c0_95] : memref<3x384x128xbf16, #tpu.memory_space<vmem>>, vector<1x384x128xbf16>
    %93 = vector.shape_cast %92 : vector<1x384x128xbf16> to vector<384x128xbf16>
    %cst_96 = arith.constant dense<0.000000e+00> : vector<64x128xf32>
    %94 = tpu.matmul %91, %93, %cst_96 {dimension_numbers = #tpu.dot_dimension_numbers<[1], [0], [0], [1], [0, 0, 1, 1], [], []>} : vector<64x384xbf16>, vector<384x128xbf16>, vector<64x128xf32> -> vector<64x128xf32>
    %95 = arith.addf %86, %94 : vector<64x128xf32>
    %c2_i32_97 = arith.constant 2 : i32
    %96 = arith.addi %1, %c2_i32_97 : i32
    %c0_98 = arith.constant 0 : index
    %97 = arith.index_cast %96 : i32 to index
    %c1_99 = arith.constant 1 : index
    %c0_100 = arith.constant 0 : index
    %98 = vector.load %arg2[%c0_98, %97, %c1_99, %c0_100] : memref<1x20x18x128xbf16, #tpu.memory_space<vmem>>, vector<1x4x16x128xbf16>
    %99 = vector.shape_cast %98 : vector<1x4x16x128xbf16> to vector<4x16x128xbf16>
    %100 = vector.shape_cast %99 : vector<4x16x128xbf16> to vector<64x128xbf16>
    %101 = arith.extf %100 : vector<64x128xbf16> to vector<64x128xf32>
    %102 = arith.addf %95, %101 : vector<64x128xf32>
    %cst_101 = arith.constant 0.000000e+00 : f32
    %103 = vector.broadcast %cst_101 : f32 to vector<64x128xf32>
    %104 = arith.maximumf %102, %103 : vector<64x128xf32>
    %105 = vector.shape_cast %104 : vector<64x128xf32> to vector<4x16x128xf32>
    %106 = arith.truncf %105 : vector<4x16x128xf32> to vector<4x16x128xbf16>
    %c0_102 = arith.constant 0 : index
    %c0_103 = arith.constant 0 : index
    %c0_104 = arith.constant 0 : index
    %c0_105 = arith.constant 0 : index
    %107 = vector.load %arg5[%c0_102, %c0_103, %c0_104, %c0_105] : memref<1x4x16x128xbf16, #tpu.memory_space<vmem>>, vector<1x4x16x128xbf16>
    %108 = vector.shape_cast %107 : vector<1x4x16x128xbf16> to vector<4x16x128xbf16>
    %109 = vector.shape_cast %106 : vector<4x16x128xbf16> to vector<1x4x16x128xbf16>
    tpu.vector_store %arg5[%c0_102, %c0_103, %c0_104, %c0_105], %109 {strides = array<i32>} : memref<1x4x16x128xbf16, #tpu.memory_space<vmem>>, vector<1x4x16x128xbf16>,
    return
  }
  func.func @transform_0(%arg0: i32, %arg1: i32) -> (i32, i32, i32, i32) {
    %c0_i32 = arith.constant 0 : i32
    %c0_i32_0 = arith.constant 0 : i32
    %c0_i32_1 = arith.constant 0 : i32
    %c0_i32_2 = arith.constant 0 : i32
    return %arg0, %c0_i32, %c0_i32_0, %c0_i32_1 : i32, i32, i32, i32
  }
  func.func @transform_1(%arg0: i32, %arg1: i32) -> (i32, i32, i32) {
    %c0_i32 = arith.constant 0 : i32
    %c0_i32_0 = arith.constant 0 : i32
    %c0_i32_1 = arith.constant 0 : i32
    %c0_i32_2 = arith.constant 0 : i32
    return %c0_i32, %c0_i32_0, %c0_i32_1 : i32, i32, i32
  }
  func.func @transform_2(%arg0: i32, %arg1: i32) -> (i32, i32, i32) {
    %c0_i32 = arith.constant 0 : i32
    %c0_i32_0 = arith.constant 0 : i32
    %c0_i32_1 = arith.constant 0 : i32
    %c0_i32_2 = arith.constant 0 : i32
    return %c0_i32, %c0_i32_0, %c0_i32_1 : i32, i32, i32
  }
  func.func @transform_3(%arg0: i32, %arg1: i32) -> (i32, i32, i32, i32) {
    %c0_i32 = arith.constant 0 : i32
    %c0_i32_0 = arith.constant 0 : i32
    %c0_i32_1 = arith.constant 0 : i32
    return %arg0, %arg1, %c0_i32, %c0_i32_0 : i32, i32, i32, i32
  }
}

</mosaic_0001>

<llo_original>
// kernel: tpu_custom_call.1
$region0: #{tpu_custom_call.1}
  #allocation0 [shape = 'u32[]', space=smem, size = 0x4, offset = 0x4, fixed_abs, tag = 'smem constant byte address 0x4 - core index']
  #allocation1 [shape = 'u32[72,128]{1,0:T(1,128)}', space=vmem, size = 0x9000, scoped, tag = 'internal scratch']
  #allocation2 [shape = 'f32[96,128]{1,0:T(8,128)}', space=vmem, size = 0xc000, scoped, tag = 'scratch operand']
  #allocation3 [shape = 'bf16[6,32,128]{2,1,0:T(8,128)(2,1)}', space=vmem, size = 0xc000, scoped, tag = 'scratch operand']
  %s0 = inlined_call_operand.vmem [shape: bf16[2,20,18,128], index: 0, kind: input, shape index: {}]
  %s1 = inlined_call_operand.vmem [shape: bf16[3,384,128], index: 1, kind: input, shape index: {}]
  %s2 = inlined_call_operand.hbm [shape: bf16[3,384,128], index: 2, kind: input, shape index: {}]
  %s3 = inlined_call_operand.hbm [shape: bf16[2,16,16,128], index: 3, kind: output, shape index: {}]
  %s4 = sld [smem:[#allocation0]]
  $region57: #{tpu_custom_call.1} parent=0
    _
  %s6 = ssub.s32 1, %s4
  %s7 = scalar_select 0, %s6, %s4
  $region1: #{tpu_custom_call.1} parent=0
    #allocation4 [shape = 'u8[294912]{0}', space=vmem, size = 0x48000, scoped, tag = 'input window, operand 2, single buffered']
    #allocation5 [shape = 's32[2]{0}', space=sflag, size = 0x8, scoped, tag = 'scoped memory for tpu_custom_call.1']
    #allocation6 [shape = 's32[2]{0}', space=sflag, size = 0x8, scoped, tag = 'scoped memory for tpu_custom_call.1']
    #allocation7 [shape = 'u8[32768]{0}', space=vmem, size = 0x8000, scoped, tag = 'output window, operand 0']
    %8 = vsyncpa [#allocation5], 0
    %9 = vsyncpa [#allocation6], 0
    %s10 = scalar_lea.sflag [#allocation6], 1
    %11 = vsyncpa %s10, 0
    loop: start=0, step=1, limit=10
    $region2: #{tpu_custom_call.1} parent=1 // loop_pre_header
      _
    $region3: #{tpu_custom_call.1} parent=1 // loop_header
      %s13 = sphi 0, %s17
      %p14 = scmp.ge.s32.totalorder %s13, 10
      %s20 = sphi 0, %s32
      %s21 = sphi 0, %s28
      %s22 = sphi 0, %s20
      %s23 = sphi 0, %s21
      %s24 = sphi 0, %s22
      %s25 = sphi 0, %s23
      %s35 = sphi 0, %s37
      %s38 = sphi 0, %s35
      %s39 = sphi 0, %s38
      %s55 = sphi 0, %s39
      %s59 = sphi 0, %s59
      %s61 = sphi 0, %s59
      %s62 = sphi 0, %s61
      %s76 = sphi 0, %s62
      %s80 = sphi 0, %s80
      %s82 = sphi 0, %s80
      %s83 = sphi 0, %s82
      %s97 = sphi 0, %s83
      %s105 = sphi 0, %s107
      %s108 = sphi 0, %s105
      %s109 = sphi 0, %s108
      %s125 = sphi 0, %s109
    $region4: #{tpu_custom_call.1} parent=1 // loop_header_branch
      %16 = sbr.rel (%p14) target = $region8
    $region5: #{tpu_custom_call.1} parent=1 // loop_body
      %s18 = ssub.s32 %s13, 1
      %s19 = ssub.s32 %s13, 2
      %s26 = sadd.s32 1, %s21
      %p27 = scmp.ge.s32.totalorder %s26, 4
      %s28 = scalar_select %p27, 0, %s26
      %s29 = sadd.s32 1, %s20
      %s30 = scalar_select %p27, %s29, %s20
      %p31 = scmp.ge.s32.totalorder %s30, 2
      %s32 = scalar_select %p31, 0, %s30
      %s33 = ssub.s32 %s20, %s32
      %p34 = scmp.eq.s32.totalorder %s33, 0
      %s36 = sadd.s32 %s35, 1
      %s37 = scalar_select %p34, %s35, %s36
      %p40 = pneg %p34
      %p41 = scmp.eq.s32.totalorder %s13, 7
      %p42 = por %p40, %p41
      %p43 = scmp.ne.s32.totalorder %s35, %s38
      %p44 = scmp.eq.s32.totalorder %s13, 0
      %p45 = por %p43, %p44
      %p46 = scmp.ne.s32.totalorder %s35, %s38
      %p47 = scmp.eq.s32.totalorder %s18, 7
      %p48 = por %p46, %p47
      %p49 = scmp.ne.s32.totalorder %s38, %s39
      %p50 = scmp.eq.s32.totalorder %s18, 0
      %p51 = por %p49, %p50
      %p52 = scmp.ne.s32.totalorder %s38, %s39
      %p53 = scmp.eq.s32.totalorder %s19, 7
      %p54 = por %p52, %p53
      %p56 = scmp.ne.s32.totalorder %s39, %s55
      %p57 = scmp.eq.s32.totalorder %s19, 0
      %p58 = por %p56, %p57
      %s60 = sadd.s32 %s59, 1
      %p63 = scmp.eq.s32.totalorder %s13, 7
      %p64 = scmp.ne.s32.totalorder %s59, %s61
      %p65 = scmp.eq.s32.totalorder %s13, 0
      %p66 = por %p64, %p65
      %p67 = scmp.ne.s32.totalorder %s59, %s61
      %p68 = scmp.eq.s32.totalorder %s18, 7
      %p69 = por %p67, %p68
      %p70 = scmp.ne.s32.totalorder %s61, %s62
      %p71 = scmp.eq.s32.totalorder %s18, 0
      %p72 = por %p70, %p71
      %p73 = scmp.ne.s32.totalorder %s61, %s62
      %p74 = scmp.eq.s32.totalorder %s19, 7
      %p75 = por %p73, %p74
      %p77 = scmp.ne.s32.totalorder %s62, %s76
      %p78 = scmp.eq.s32.totalorder %s19, 0
      %p79 = por %p77, %p78
      %s81 = sadd.s32 %s80, 1
      %p84 = scmp.eq.s32.totalorder %s13, 7
      %p85 = scmp.ne.s32.totalorder %s80, %s82
      %p86 = scmp.eq.s32.totalorder %s13, 0
      %p87 = por %p85, %p86
      %p88 = scmp.ne.s32.totalorder %s80, %s82
      %p89 = scmp.eq.s32.totalorder %s18, 7
      %p90 = por %p88, %p89
      %p91 = scmp.ne.s32.totalorder %s82, %s83
      %p92 = scmp.eq.s32.totalorder %s18, 0
      %p93 = por %p91, %p92
      %p94 = scmp.ne.s32.totalorder %s82, %s83
      %p95 = scmp.eq.s32.totalorder %s19, 7
      %p96 = por %p94, %p95
      %p98 = scmp.ne.s32.totalorder %s83, %s97
      %p99 = scmp.eq.s32.totalorder %s19, 0
      %p100 = por %p98, %p99
      %s101 = ssub.s32 %s20, %s32
      %s102 = ssub.s32 %s21, %s28
      %s103 = sor.u32 %s101, %s102
      %p104 = scmp.eq.s32.totalorder %s103, 0
      %s106 = sadd.s32 %s105, 1
      %s107 = scalar_select %p104, %s105, %s106
      %p110 = pneg %p104
      %p111 = scmp.eq.s32.totalorder %s13, 7
      %p112 = por %p110, %p111
      %p113 = scmp.ne.s32.totalorder %s105, %s108
      %p114 = scmp.eq.s32.totalorder %s13, 0
      %p115 = por %p113, %p114
      %p116 = scmp.ne.s32.totalorder %s105, %s108
      %p117 = scmp.eq.s32.totalorder %s18, 7
      %p118 = por %p116, %p117
      %p119 = scmp.ne.s32.totalorder %s108, %s109
      %p120 = scmp.eq.s32.totalorder %s18, 0
      %p121 = por %p119, %p120
      %p122 = scmp.ne.s32.totalorder %s108, %s109
      %p123 = scmp.eq.s32.totalorder %s19, 7
      %p124 = por %p122, %p123
      %p126 = scmp.ne.s32.totalorder %s109, %s125
      %p127 = scmp.eq.s32.totalorder %s19, 0
      %p128 = por %p126, %p127
      %p129 = scmp.le.s32.totalorder 1, %s13
      %p130 = scmp.lt.s32.totalorder %s13, 9
      %p131 = pnand %p129, %p130
      %p132 = pneg %p131
      // Predicated region
      $region9: #{tpu_custom_call.1} parent=5 // pred_check
        _
      $region10: #{tpu_custom_call.1} parent=5 // pred_check_branch
        %134 = sbr.rel (%p131) target = $region12
      $region11: #{tpu_custom_call.1} parent=5 // pred_region
        %s135 = ssub.s32 %s13, 1
        // Predicated region
        $region13: #{tpu_custom_call.1} parent=11 // pred_check
          %p136 = pneg %p72
        $region14: #{tpu_custom_call.1} parent=11 // pred_check_branch
          %138 = sbr.rel (%p136) target = $region16
        $region15: #{tpu_custom_call.1} parent=11 // pred_region
          _
        $region16: #{tpu_custom_call.1} parent=11 // pred_fallthru
          _
        // Predicated region
        $region17: #{tpu_custom_call.1} parent=11 // pred_check
          %p139 = pneg %p93
        $region18: #{tpu_custom_call.1} parent=11 // pred_check_branch
          %141 = sbr.rel (%p139) target = $region20
        $region19: #{tpu_custom_call.1} parent=11 // pred_region
          %143 = vsyncadd [#allocation5], 0
          %s144 = sshll.u32 %s2, 4
          %s145 = int_to_ptr.hbm [resolvable:$true] %s144
          %s146 = sshll.u32 [#allocation4], 4
          %s147 = int_to_ptr.vmem [resolvable:$true] %s146
          %152 = dma.hbm_to_vmem [thread:$0]  %s145, 9216, %s147, [#allocation5], 64, 64, 4
        $region20: #{tpu_custom_call.1} parent=11 // pred_fallthru
          _
      $region12: #{tpu_custom_call.1} parent=5 // pred_fallthru
        _
      %p153 = scmp.lt.s32.totalorder %s13, 8
      // Predicated region
      $region21: #{tpu_custom_call.1} parent=5 // pred_check
        %p154 = pneg %p153
      $region22: #{tpu_custom_call.1} parent=5 // pred_check_branch
        %156 = sbr.rel (%p154) target = $region24
      $region23: #{tpu_custom_call.1} parent=5 // pred_region
        // Predicated region
        $region25: #{tpu_custom_call.1} parent=23 // pred_check
          %p157 = pneg %p45
        $region26: #{tpu_custom_call.1} parent=23 // pred_check_branch
          %159 = sbr.rel (%p157) target = $region28
        $region27: #{tpu_custom_call.1} parent=23 // pred_region
          %p160 = scmp.lt.s32.totalorder %s20, 1
          %s161 = scalar_select %p160, %s20, 1
          %s162 = smul.addr %s161, 60
          %s163 = smul.addr %s162, 4
          %s164 = scalar_lea.vmem %s0, %s163
        $region28: #{tpu_custom_call.1} parent=23 // pred_fallthru
          _
      $region24: #{tpu_custom_call.1} parent=5 // pred_fallthru
        _
      %p165 = scmp.le.s32.totalorder 1, %s13
      %p166 = scmp.lt.s32.totalorder %s13, 9
      %p167 = pnand %p165, %p166
      %p168 = pneg %p167
      // Predicated region
      $region29: #{tpu_custom_call.1} parent=5 // pred_check
        _
      $region30: #{tpu_custom_call.1} parent=5 // pred_check_branch
        %170 = sbr.rel (%p167) target = $region32
      $region31: #{tpu_custom_call.1} parent=5 // pred_region
        %s171 = ssub.s32 %s13, 1
        // Predicated region
        $region33: #{tpu_custom_call.1} parent=31 // pred_check
          %p172 = pneg %p93
        $region34: #{tpu_custom_call.1} parent=31 // pred_check_branch
          %174 = sbr.rel (%p172) target = $region36
        $region35: #{tpu_custom_call.1} parent=31 // pred_region
          %176 = dma.done [#allocation5], 9216
        $region36: #{tpu_custom_call.1} parent=31 // pred_fallthru
          _
        %p177 = scmp.lt.s32.totalorder %s22, 1
        %s178 = scalar_select %p177, %s22, 1
        %s179 = smul.addr %s178, 60
        %s180 = smul.addr %s179, 4
        %s181 = scalar_lea.vmem %s0, %s180
        %p182 = pneg %p51
        %p183 = pneg %p48
        %p184 = pneg %p72
        %p185 = pneg %p69
        %p186 = pneg %p93
        %p187 = pneg %p90
        %p188 = pneg %p121
        %p189 = pneg %p118
        %s190 = sand.u32 %s108, 1
        %s191 = scalar_lea.sflag [#allocation6], %s190
        %s192 = sand.u32 %s108, 1
        %s193 = smul.addr %s192, 32
        %s194 = scalar_lea.vmem [#allocation7], %s193
        %p195 = scmp.lt.s32.totalorder %s22, 1
        %s196 = scalar_select %p195, %s22, 1
        %s197 = smul.addr %s196, 60
        %s198 = smul.addr %s197, 4
        %s199 = scalar_lea.vmem %s0, %s198
        %s200 = smul.u32 4, %s23
        %s202 = smul.u32 %s23, 4
        %s203 = smul.u32 %s202, 3
        %s204 = smul.addr %s203, 4
        %s205 = scalar_lea.vmem %s199, %s204
        %v206 = vld [vmem:[%s205] sm:$0xf]
        %v207 = vld [vmem:[%s205 + $0x4] sm:$0xf]
        %v208 = vld [vmem:[%s205 + $0xc] sm:$0xf]
        %v209 = vld [vmem:[%s205 + $0x10] sm:$0xf]
        %v210 = vld [vmem:[%s205 + $0x18] sm:$0xf]
        %v211 = vld [vmem:[%s205 + $0x1c] sm:$0xf]
        %v212 = vld [vmem:[%s205 + $0x24] sm:$0xf]
        %v213 = vld [vmem:[%s205 + $0x28] sm:$0xf]
        %v214 = vld [vmem:[%s205 + $0x30] sm:$0xf]
        %v215 = vld [vmem:[%s205 + $0x34] sm:$0xf]
        %v216 = vld [vmem:[%s205 + $0x3c] sm:$0xf]
        %v217 = vld [vmem:[%s205 + $0x40] sm:$0xf]
        %v218 = vld [vmem:[%s205 + $0x8] sm:$0x1]
        %v219 = vld [vmem:[%s205 + $0x14] sm:$0x1]
        %v220 = vld [vmem:[%s205 + $0x20] sm:$0x1]
        %v221 = vld [vmem:[%s205 + $0x2c] sm:$0x1]
        %v222 = vld [vmem:[%s205 + $0x38] sm:$0x1]
        %v223 = vld [vmem:[%s205 + $0x44] sm:$0x1]
        %v224 = vld [vmem:[%s205] sm:$0xe]
        %v225 = vld [vmem:[%s205 + $0xc] sm:$0xe]
        %v226 = vld [vmem:[%s205 + $0x18] sm:$0xe]
        %v227 = vld [vmem:[%s205 + $0x24] sm:$0xe]
        %v228 = vld [vmem:[%s205 + $0x30] sm:$0xe]
        %v229 = vld [vmem:[%s205 + $0x3c] sm:$0xe]
        %v242 = vunpack.c.l.b16 %v206
        %v243 = vunpack.c.l.b16 %v207
        %v244 = vunpack.c.l.b16 %v208
        %v245 = vunpack.c.l.b16 %v209
        %v246 = vunpack.c.l.b16 %v210
        %v247 = vunpack.c.l.b16 %v211
        %v248 = vunpack.c.l.b16 %v212
        %v249 = vunpack.c.l.b16 %v213
        %v250 = vunpack.c.l.b16 %v214
        %v251 = vunpack.c.l.b16 %v215
        %v252 = vunpack.c.l.b16 %v216
        %v253 = vunpack.c.l.b16 %v217
        %v254 = vpack.c.b16 %v243, %v242
        %v255 = vpack.c.b16 %v245, %v244
        %v256 = vpack.c.b16 %v247, %v246
        %v257 = vpack.c.b16 %v249, %v248
        %v258 = vpack.c.b16 %v251, %v250
        %v259 = vpack.c.b16 %v253, %v252
        %v272 = vunpack.c.l.b16 %v218
        %v273 = vunpack.c.l.b16 %v219
        %v274 = vunpack.c.l.b16 %v220
        %v275 = vunpack.c.l.b16 %v221
        %v276 = vunpack.c.l.b16 %v222
        %v277 = vunpack.c.l.b16 %v223
        %v278 = vpack.c.b16 %v272, %v272
        %v279 = vpack.c.b16 %v273, %v273
        %v280 = vpack.c.b16 %v274, %v274
        %v281 = vpack.c.b16 %v275, %v275
        %v282 = vpack.c.b16 %v276, %v276
        %v283 = vpack.c.b16 %v277, %v277
        %vm284 = vsmask.f32 7424
        %v286 = vshrl.u32 %v254, 16
        %v288 = vshll.u32 %v254, 16
        %v290 = vrot.slane %v288, 1
        %v291 = vor.u32 %v286, %v290
        %v293 = vshll.u32 %v278, 16
        %v295 = vrot.slane %v293, 1
        %v296 = vsel %vm284, %v291, %v295
        %v298 = vshrl.u32 %v255, 16
        %v300 = vshll.u32 %v255, 16
        %v302 = vrot.slane %v300, 1
        %v303 = vor.u32 %v298, %v302
        %v305 = vshll.u32 %v279, 16
        %v307 = vrot.slane %v305, 1
        %v308 = vsel %vm284, %v303, %v307
        %v310 = vshrl.u32 %v256, 16
        %v312 = vshll.u32 %v256, 16
        %v314 = vrot.slane %v312, 1
        %v315 = vor.u32 %v310, %v314
        %v317 = vshll.u32 %v280, 16
        %v319 = vrot.slane %v317, 1
        %v320 = vsel %vm284, %v315, %v319
        %v322 = vshrl.u32 %v257, 16
        %v324 = vshll.u32 %v257, 16
        %v326 = vrot.slane %v324, 1
        %v327 = vor.u32 %v322, %v326
        %v329 = vshll.u32 %v281, 16
        %v331 = vrot.slane %v329, 1
        %v332 = vsel %vm284, %v327, %v331
        %v334 = vshrl.u32 %v258, 16
        %v336 = vshll.u32 %v258, 16
        %v338 = vrot.slane %v336, 1
        %v339 = vor.u32 %v334, %v338
        %v341 = vshll.u32 %v282, 16
        %v343 = vrot.slane %v341, 1
        %v344 = vsel %vm284, %v339, %v343
        %v346 = vshrl.u32 %v259, 16
        %v348 = vshll.u32 %v259, 16
        %v350 = vrot.slane %v348, 1
        %v351 = vor.u32 %v346, %v350
        %v353 = vshll.u32 %v283, 16
        %v355 = vrot.slane %v353, 1
        %v356 = vsel %vm284, %v351, %v355
        %v369 = vunpack.c.l.b16 %v224
        %v370 = vunpack.c.l.b16 %v225
        %v371 = vunpack.c.l.b16 %v226
        %v372 = vunpack.c.l.b16 %v227
        %v373 = vunpack.c.l.b16 %v228
        %v374 = vunpack.c.l.b16 %v229
        %v375 = vpack.c.b16 %v243, %v369
        %v376 = vpack.c.b16 %v245, %v370
        %v377 = vpack.c.b16 %v247, %v371
        %v378 = vpack.c.b16 %v249, %v372
        %v379 = vpack.c.b16 %v251, %v373
        %v380 = vpack.c.b16 %v253, %v374
        %vm381 = vcmask 1046528
        %v382 = vrot.slane %v375, 1
        %v383 = vrot.slane %v278, 1
        %v384 = vsel %vm381, %v382, %v383
        %v385 = vrot.slane %v376, 1
        %v386 = vrot.slane %v279, 1
        %v387 = vsel %vm381, %v385, %v386
        %v388 = vrot.slane %v377, 1
        %v389 = vrot.slane %v280, 1
        %v390 = vsel %vm381, %v388, %v389
        %v391 = vrot.slane %v378, 1
        %v392 = vrot.slane %v281, 1
        %v393 = vsel %vm381, %v391, %v392
        %v394 = vrot.slane %v379, 1
        %v395 = vrot.slane %v282, 1
        %v396 = vsel %vm381, %v394, %v395
        %v397 = vrot.slane %v380, 1
        %v398 = vrot.slane %v283, 1
        %v399 = vsel %vm381, %v397, %v398
        %v406 = vld [vmem:[%s1] sm:$0xf]
        %v407 = vld [vmem:[%s1 + $0x4] sm:$0xf]
        %v408 = vld [vmem:[%s1 + $0x8] sm:$0xf]
        %v409 = vld [vmem:[%s1 + $0xc] sm:$0xf]
        %v410 = vld [vmem:[%s1 + $0x10] sm:$0xf]
        %v411 = vld [vmem:[%s1 + $0x14] sm:$0xf]
        %v412 = vld [vmem:[%s1 + $0x18] sm:$0xf]
        %v413 = vld [vmem:[%s1 + $0x1c] sm:$0xf]
        %v414 = vld [vmem:[%s1 + $0x20] sm:$0xf]
        %v415 = vld [vmem:[%s1 + $0x24] sm:$0xf]
        %v416 = vld [vmem:[%s1 + $0x28] sm:$0xf]
        %v417 = vld [vmem:[%s1 + $0x2c] sm:$0xf]
        %v418 = vld [vmem:[%s1 + $0x30] sm:$0xf]
        %v419 = vld [vmem:[%s1 + $0x34] sm:$0xf]
        %v420 = vld [vmem:[%s1 + $0x38] sm:$0xf]
        %v421 = vld [vmem:[%s1 + $0x3c] sm:$0xf]
        %v422 = vld [vmem:[%s1 + $0x40] sm:$0xf]
        %v423 = vld [vmem:[%s1 + $0x44] sm:$0xf]
        %v424 = vld [vmem:[%s1 + $0x48] sm:$0xf]
        %v425 = vld [vmem:[%s1 + $0x4c] sm:$0xf]
        %v426 = vld [vmem:[%s1 + $0x50] sm:$0xf]
        %v427 = vld [vmem:[%s1 + $0x54] sm:$0xf]
        %v428 = vld [vmem:[%s1 + $0x58] sm:$0xf]
        %v429 = vld [vmem:[%s1 + $0x5c] sm:$0xf]
        %v430 = vld [vmem:[%s1 + $0x60] sm:$0xf]
        %v431 = vld [vmem:[%s1 + $0x64] sm:$0xf]
        %v432 = vld [vmem:[%s1 + $0x68] sm:$0xf]
        %v433 = vld [vmem:[%s1 + $0x6c] sm:$0xf]
        %v434 = vld [vmem:[%s1 + $0x70] sm:$0xf]
        %v435 = vld [vmem:[%s1 + $0x74] sm:$0xf]
        %v436 = vld [vmem:[%s1 + $0x78] sm:$0xf]
        %v437 = vld [vmem:[%s1 + $0x7c] sm:$0xf]
        %v438 = vld [vmem:[%s1 + $0x80] sm:$0xf]
        %v439 = vld [vmem:[%s1 + $0x84] sm:$0xf]
        %v440 = vld [vmem:[%s1 + $0x88] sm:$0xf]
        %v441 = vld [vmem:[%s1 + $0x8c] sm:$0xf]
        %v442 = vld [vmem:[%s1 + $0x90] sm:$0xf]
        %v443 = vld [vmem:[%s1 + $0x94] sm:$0xf]
        %v444 = vld [vmem:[%s1 + $0x98] sm:$0xf]
        %v445 = vld [vmem:[%s1 + $0x9c] sm:$0xf]
        %v446 = vld [vmem:[%s1 + $0xa0] sm:$0xf]
        %v447 = vld [vmem:[%s1 + $0xa4] sm:$0xf]
        %v448 = vld [vmem:[%s1 + $0xa8] sm:$0xf]
        %v449 = vld [vmem:[%s1 + $0xac] sm:$0xf]
        %v450 = vld [vmem:[%s1 + $0xb0] sm:$0xf]
        %v451 = vld [vmem:[%s1 + $0xb4] sm:$0xf]
        %v452 = vld [vmem:[%s1 + $0xb8] sm:$0xf]
        %v453 = vld [vmem:[%s1 + $0xbc] sm:$0xf]
        %v502 = vunpack.c.l.b16 %v406
        %v503 = vunpack.c.l.b16 %v407
        %v504 = vunpack.c.l.b16 %v408
        %v505 = vunpack.c.l.b16 %v409
        %v506 = vunpack.c.l.b16 %v410
        %v507 = vunpack.c.l.b16 %v411
        %v508 = vunpack.c.l.b16 %v412
        %v509 = vunpack.c.l.b16 %v413
        %v510 = vunpack.c.l.b16 %v414
        %v511 = vunpack.c.l.b16 %v415
        %v512 = vunpack.c.l.b16 %v416
        %v513 = vunpack.c.l.b16 %v417
        %v514 = vunpack.c.l.b16 %v418
        %v515 = vunpack.c.l.b16 %v419
        %v516 = vunpack.c.l.b16 %v420
        %v517 = vunpack.c.l.b16 %v421
        %v518 = vunpack.c.l.b16 %v422
        %v519 = vunpack.c.l.b16 %v423
        %v520 = vunpack.c.l.b16 %v424
        %v521 = vunpack.c.l.b16 %v425
        %v522 = vunpack.c.l.b16 %v426
        %v523 = vunpack.c.l.b16 %v427
        %v524 = vunpack.c.l.b16 %v428
        %v525 = vunpack.c.l.b16 %v429
        %v526 = vunpack.c.l.b16 %v430
        %v527 = vunpack.c.l.b16 %v431
        %v528 = vunpack.c.l.b16 %v432
        %v529 = vunpack.c.l.b16 %v433
        %v530 = vunpack.c.l.b16 %v434
        %v531 = vunpack.c.l.b16 %v435
        %v532 = vunpack.c.l.b16 %v436
        %v533 = vunpack.c.l.b16 %v437
        %v534 = vunpack.c.l.b16 %v438
        %v535 = vunpack.c.l.b16 %v439
        %v536 = vunpack.c.l.b16 %v440
        %v537 = vunpack.c.l.b16 %v441
        %v538 = vunpack.c.l.b16 %v442
        %v539 = vunpack.c.l.b16 %v443
        %v540 = vunpack.c.l.b16 %v444
        %v541 = vunpack.c.l.b16 %v445
        %v542 = vunpack.c.l.b16 %v446
        %v543 = vunpack.c.l.b16 %v447
        %v544 = vunpack.c.l.b16 %v448
        %v545 = vunpack.c.l.b16 %v449
        %v546 = vunpack.c.l.b16 %v450
        %v547 = vunpack.c.l.b16 %v451
        %v548 = vunpack.c.l.b16 %v452
        %v549 = vunpack.c.l.b16 %v453
        %v550 = vpack.c.b16 %v503, %v502
        %v551 = vpack.c.b16 %v505, %v504
        %v552 = vpack.c.b16 %v507, %v506
        %v553 = vpack.c.b16 %v509, %v508
        %v554 = vpack.c.b16 %v511, %v510
        %v555 = vpack.c.b16 %v513, %v512
        %v556 = vpack.c.b16 %v515, %v514
        %v557 = vpack.c.b16 %v517, %v516
        %v558 = vpack.c.b16 %v519, %v518
        %v559 = vpack.c.b16 %v521, %v520
        %v560 = vpack.c.b16 %v523, %v522
        %v561 = vpack.c.b16 %v525, %v524
        %v562 = vpack.c.b16 %v527, %v526
        %v563 = vpack.c.b16 %v529, %v528
        %v564 = vpack.c.b16 %v531, %v530
        %v565 = vpack.c.b16 %v533, %v532
        %v566 = vpack.c.b16 %v535, %v534
        %v567 = vpack.c.b16 %v537, %v536
        %v568 = vpack.c.b16 %v539, %v538
        %v569 = vpack.c.b16 %v541, %v540
        %v570 = vpack.c.b16 %v543, %v542
        %v571 = vpack.c.b16 %v545, %v544
        %v572 = vpack.c.b16 %v547, %v546
        %v573 = vpack.c.b16 %v549, %v548
        %598 = vmatpush.bf16.msra.mxu0 %v557
        %599 = vmatpush.bf16.msra.mxu0 %v556
        %600 = vmatpush.bf16.msra.mxu0 %v555
        %601 = vmatpush.bf16.msra.mxu0 %v554
        %602 = vmatpush.bf16.msra.mxu0 %v553
        %603 = vmatpush.bf16.msra.mxu0 %v552
        %604 = vmatpush.bf16.msra.mxu0 %v551
        %605 = vmatpush.bf16.msra.mxu0 %v550
        %606 = vmatmul.bf16.gmra.mxu0 %v254
        %v607 = vpop.f32.mrf.mxu0
        %v608 = vadd.f32 0.0, %v607
        %v609 = vpop.f32.mrf.mxu0
        %v610 = vadd.f32 0.0, %v609
        %611 = vmatmul.bf16.gmra.mxu0 %v255
        %v612 = vpop.f32.mrf.mxu0
        %v613 = vadd.f32 0.0, %v612
        %v614 = vpop.f32.mrf.mxu0
        %v615 = vadd.f32 0.0, %v614
        %616 = vmatmul.bf16.gmra.mxu0 %v256
        %v617 = vpop.f32.mrf.mxu0
        %v618 = vadd.f32 0.0, %v617
        %v619 = vpop.f32.mrf.mxu0
        %v620 = vadd.f32 0.0, %v619
        %621 = vmatmul.bf16.gmra.mxu0 %v257
        %v622 = vpop.f32.mrf.mxu0
        %v623 = vadd.f32 0.0, %v622
        %v624 = vpop.f32.mrf.mxu0
        %v625 = vadd.f32 0.0, %v624
        %626 = vmatmul.bf16.gmra.mxu0 %v258
        %v627 = vpop.f32.mrf.mxu0
        %v628 = vadd.f32 0.0, %v627
        %v629 = vpop.f32.mrf.mxu0
        %v630 = vadd.f32 0.0, %v629
        %631 = vmatmul.bf16.gmra.mxu0 %v259
        %v632 = vpop.f32.mrf.mxu0
        %v633 = vadd.f32 0.0, %v632
        %v634 = vpop.f32.mrf.mxu0
        %v635 = vadd.f32 0.0, %v634
        %636 = vdwg.mxu0
        %637 = vmatpush.bf16.msra.mxu0 %v565
        %638 = vmatpush.bf16.msra.mxu0 %v564
        %639 = vmatpush.bf16.msra.mxu0 %v563
        %640 = vmatpush.bf16.msra.mxu0 %v562
        %641 = vmatpush.bf16.msra.mxu0 %v561
        %642 = vmatpush.bf16.msra.mxu0 %v560
        %643 = vmatpush.bf16.msra.mxu0 %v559
        %644 = vmatpush.bf16.msra.mxu0 %v558
        %645 = vmatmul.bf16.gmra.mxu0 %v296
        %v646 = vpop.f32.mrf.mxu0
        %v647 = vadd.f32 %v608, %v646
        %v648 = vpop.f32.mrf.mxu0
        %v649 = vadd.f32 %v610, %v648
        %650 = vmatmul.bf16.gmra.mxu0 %v308
        %v651 = vpop.f32.mrf.mxu0
        %v652 = vadd.f32 %v613, %v651
        %v653 = vpop.f32.mrf.mxu0
        %v654 = vadd.f32 %v615, %v653
        %655 = vmatmul.bf16.gmra.mxu0 %v320
        %v656 = vpop.f32.mrf.mxu0
        %v657 = vadd.f32 %v618, %v656
        %v658 = vpop.f32.mrf.mxu0
        %v659 = vadd.f32 %v620, %v658
        %660 = vmatmul.bf16.gmra.mxu0 %v332
        %v661 = vpop.f32.mrf.mxu0
        %v662 = vadd.f32 %v623, %v661
        %v663 = vpop.f32.mrf.mxu0
        %v664 = vadd.f32 %v625, %v663
        %665 = vmatmul.bf16.gmra.mxu0 %v344
        %v666 = vpop.f32.mrf.mxu0
        %v667 = vadd.f32 %v628, %v666
        %v668 = vpop.f32.mrf.mxu0
        %v669 = vadd.f32 %v630, %v668
        %670 = vmatmul.bf16.gmra.mxu0 %v356
        %v671 = vpop.f32.mrf.mxu0
        %v672 = vadd.f32 %v633, %v671
        %v673 = vpop.f32.mrf.mxu0
        %v674 = vadd.f32 %v635, %v673
        %675 = vdwg.mxu0
        %676 = vmatpush.bf16.msra.mxu0 %v573
        %677 = vmatpush.bf16.msra.mxu0 %v572
        %678 = vmatpush.bf16.msra.mxu0 %v571
        %679 = vmatpush.bf16.msra.mxu0 %v570
        %680 = vmatpush.bf16.msra.mxu0 %v569
        %681 = vmatpush.bf16.msra.mxu0 %v568
        %682 = vmatpush.bf16.msra.mxu0 %v567
        %683 = vmatpush.bf16.msra.mxu0 %v566
        %684 = vmatmul.bf16.gmra.mxu0 %v384
        %v685 = vpop.f32.mrf.mxu0
        %v686 = vadd.f32 %v647, %v685
        %v687 = vpop.f32.mrf.mxu0
        %v688 = vadd.f32 %v649, %v687
        %689 = vmatmul.bf16.gmra.mxu0 %v387
        %v690 = vpop.f32.mrf.mxu0
        %v691 = vadd.f32 %v652, %v690
        %v692 = vpop.f32.mrf.mxu0
        %v693 = vadd.f32 %v654, %v692
        %694 = vmatmul.bf16.gmra.mxu0 %v390
        %v695 = vpop.f32.mrf.mxu0
        %v696 = vadd.f32 %v657, %v695
        %v697 = vpop.f32.mrf.mxu0
        %v698 = vadd.f32 %v659, %v697
        %699 = vmatmul.bf16.gmra.mxu0 %v393
        %v700 = vpop.f32.mrf.mxu0
        %v701 = vadd.f32 %v662, %v700
        %v702 = vpop.f32.mrf.mxu0
        %v703 = vadd.f32 %v664, %v702
        %704 = vmatmul.bf16.gmra.mxu0 %v396
        %v705 = vpop.f32.mrf.mxu0
        %v706 = vadd.f32 %v667, %v705
        %v707 = vpop.f32.mrf.mxu0
        %v708 = vadd.f32 %v669, %v707
        %709 = vmatmul.bf16.gmra.mxu0 %v399
        %v710 = vpop.f32.mrf.mxu0
        %v711 = vadd.f32 %v672, %v710
        %v712 = vpop.f32.mrf.mxu0
        %v713 = vadd.f32 %v674, %v712
        %714 = vdwg.mxu0
        %715 = vst [vmem:[#allocation2] sm:$0xff] %v686
        %716 = vst [vmem:[#allocation2 + $0x8] sm:$0xff] %v688
        %717 = vst [vmem:[#allocation2 + $0x10] sm:$0xff] %v691
        %718 = vst [vmem:[#allocation2 + $0x18] sm:$0xff] %v693
        %719 = vst [vmem:[#allocation2 + $0x20] sm:$0xff] %v696
        %720 = vst [vmem:[#allocation2 + $0x28] sm:$0xff] %v698
        %721 = vst [vmem:[#allocation2 + $0x30] sm:$0xff] %v701
        %722 = vst [vmem:[#allocation2 + $0x38] sm:$0xff] %v703
        %723 = vst [vmem:[#allocation2 + $0x40] sm:$0xff] %v706
        %724 = vst [vmem:[#allocation2 + $0x48] sm:$0xff] %v708
        %725 = vst [vmem:[#allocation2 + $0x50] sm:$0xff] %v711
        %726 = vst [vmem:[#allocation2 + $0x58] sm:$0xff] %v713
        %s727 = sadd.s32 %s202, 1
        %s728 = smul.u32 %s727, 3
        %s729 = smul.addr %s728, 4
        %s730 = scalar_lea.vmem %s199, %s729
        %v731 = vld [vmem:[%s730] sm:$0xf]
        %v732 = vld [vmem:[%s730 + $0x4] sm:$0xf]
        %v733 = vld [vmem:[%s730 + $0xc] sm:$0xf]
        %v734 = vld [vmem:[%s730 + $0x10] sm:$0xf]
        %v735 = vld [vmem:[%s730 + $0x18] sm:$0xf]
        %v736 = vld [vmem:[%s730 + $0x1c] sm:$0xf]
        %v737 = vld [vmem:[%s730 + $0x24] sm:$0xf]
        %v738 = vld [vmem:[%s730 + $0x28] sm:$0xf]
        %v739 = vld [vmem:[%s730 + $0x30] sm:$0xf]
        %v740 = vld [vmem:[%s730 + $0x34] sm:$0xf]
        %v741 = vld [vmem:[%s730 + $0x3c] sm:$0xf]
        %v742 = vld [vmem:[%s730 + $0x40] sm:$0xf]
        %v743 = vld [vmem:[%s730 + $0x8] sm:$0x1]
        %v744 = vld [vmem:[%s730 + $0x14] sm:$0x1]
        %v745 = vld [vmem:[%s730 + $0x20] sm:$0x1]
        %v746 = vld [vmem:[%s730 + $0x2c] sm:$0x1]
        %v747 = vld [vmem:[%s730 + $0x38] sm:$0x1]
        %v748 = vld [vmem:[%s730 + $0x44] sm:$0x1]
        %v749 = vld [vmem:[%s730] sm:$0xe]
        %v750 = vld [vmem:[%s730 + $0xc] sm:$0xe]
        %v751 = vld [vmem:[%s730 + $0x18] sm:$0xe]
        %v752 = vld [vmem:[%s730 + $0x24] sm:$0xe]
        %v753 = vld [vmem:[%s730 + $0x30] sm:$0xe]
        %v754 = vld [vmem:[%s730 + $0x3c] sm:$0xe]
        %v767 = vunpack.c.l.b16 %v731
        %v768 = vunpack.c.l.b16 %v732
        %v769 = vunpack.c.l.b16 %v733
        %v770 = vunpack.c.l.b16 %v734
        %v771 = vunpack.c.l.b16 %v735
        %v772 = vunpack.c.l.b16 %v736
        %v773 = vunpack.c.l.b16 %v737
        %v774 = vunpack.c.l.b16 %v738
        %v775 = vunpack.c.l.b16 %v739
        %v776 = vunpack.c.l.b16 %v740
        %v777 = vunpack.c.l.b16 %v741
        %v778 = vunpack.c.l.b16 %v742
        %v779 = vpack.c.b16 %v768, %v767
        %v780 = vpack.c.b16 %v770, %v769
        %v781 = vpack.c.b16 %v772, %v771
        %v782 = vpack.c.b16 %v774, %v773
        %v783 = vpack.c.b16 %v776, %v775
        %v784 = vpack.c.b16 %v778, %v777
        %v797 = vunpack.c.l.b16 %v743
        %v798 = vunpack.c.l.b16 %v744
        %v799 = vunpack.c.l.b16 %v745
        %v800 = vunpack.c.l.b16 %v746
        %v801 = vunpack.c.l.b16 %v747
        %v802 = vunpack.c.l.b16 %v748
        %v803 = vpack.c.b16 %v797, %v797
        %v804 = vpack.c.b16 %v798, %v798
        %v805 = vpack.c.b16 %v799, %v799
        %v806 = vpack.c.b16 %v800, %v800
        %v807 = vpack.c.b16 %v801, %v801
        %v808 = vpack.c.b16 %v802, %v802
        %v810 = vshrl.u32 %v779, 16
        %v812 = vshll.u32 %v779, 16
        %v814 = vrot.slane %v812, 1
        %v815 = vor.u32 %v810, %v814
        %v817 = vshll.u32 %v803, 16
        %v819 = vrot.slane %v817, 1
        %v820 = vsel %vm284, %v815, %v819
        %v822 = vshrl.u32 %v780, 16
        %v824 = vshll.u32 %v780, 16
        %v826 = vrot.slane %v824, 1
        %v827 = vor.u32 %v822, %v826
        %v829 = vshll.u32 %v804, 16
        %v831 = vrot.slane %v829, 1
        %v832 = vsel %vm284, %v827, %v831
        %v834 = vshrl.u32 %v781, 16
        %v836 = vshll.u32 %v781, 16
        %v838 = vrot.slane %v836, 1
        %v839 = vor.u32 %v834, %v838
        %v841 = vshll.u32 %v805, 16
        %v843 = vrot.slane %v841, 1
        %v844 = vsel %vm284, %v839, %v843
        %v846 = vshrl.u32 %v782, 16
        %v848 = vshll.u32 %v782, 16
        %v850 = vrot.slane %v848, 1
        %v851 = vor.u32 %v846, %v850
        %v853 = vshll.u32 %v806, 16
        %v855 = vrot.slane %v853, 1
        %v856 = vsel %vm284, %v851, %v855
        %v858 = vshrl.u32 %v783, 16
        %v860 = vshll.u32 %v783, 16
        %v862 = vrot.slane %v860, 1
        %v863 = vor.u32 %v858, %v862
        %v865 = vshll.u32 %v807, 16
        %v867 = vrot.slane %v865, 1
        %v868 = vsel %vm284, %v863, %v867
        %v870 = vshrl.u32 %v784, 16
        %v872 = vshll.u32 %v784, 16
        %v874 = vrot.slane %v872, 1
        %v875 = vor.u32 %v870, %v874
        %v877 = vshll.u32 %v808, 16
        %v879 = vrot.slane %v877, 1
        %v880 = vsel %vm284, %v875, %v879
        %v893 = vunpack.c.l.b16 %v749
        %v894 = vunpack.c.l.b16 %v750
        %v895 = vunpack.c.l.b16 %v751
        %v896 = vunpack.c.l.b16 %v752
        %v897 = vunpack.c.l.b16 %v753
        %v898 = vunpack.c.l.b16 %v754
        %v899 = vpack.c.b16 %v768, %v893
        %v900 = vpack.c.b16 %v770, %v894
        %v901 = vpack.c.b16 %v772, %v895
        %v902 = vpack.c.b16 %v774, %v896
        %v903 = vpack.c.b16 %v776, %v897
        %v904 = vpack.c.b16 %v778, %v898
        %v905 = vrot.slane %v899, 1
        %v906 = vrot.slane %v803, 1
        %v907 = vsel %vm381, %v905, %v906
        %v908 = vrot.slane %v900, 1
        %v909 = vrot.slane %v804, 1
        %v910 = vsel %vm381, %v908, %v909
        %v911 = vrot.slane %v901, 1
        %v912 = vrot.slane %v805, 1
        %v913 = vsel %vm381, %v911, %v912
        %v914 = vrot.slane %v902, 1
        %v915 = vrot.slane %v806, 1
        %v916 = vsel %vm381, %v914, %v915
        %v917 = vrot.slane %v903, 1
        %v918 = vrot.slane %v807, 1
        %v919 = vsel %vm381, %v917, %v918
        %v920 = vrot.slane %v904, 1
        %v921 = vrot.slane %v808, 1
        %v922 = vsel %vm381, %v920, %v921
        %s929 = scalar_lea.vmem %s1, 192
        %v930 = vld [vmem:[%s929] sm:$0xf]
        %v931 = vld [vmem:[%s929 + $0x4] sm:$0xf]
        %v932 = vld [vmem:[%s929 + $0x8] sm:$0xf]
        %v933 = vld [vmem:[%s929 + $0xc] sm:$0xf]
        %v934 = vld [vmem:[%s929 + $0x10] sm:$0xf]
        %v935 = vld [vmem:[%s929 + $0x14] sm:$0xf]
        %v936 = vld [vmem:[%s929 + $0x18] sm:$0xf]
        %v937 = vld [vmem:[%s929 + $0x1c] sm:$0xf]
        %v938 = vld [vmem:[%s929 + $0x20] sm:$0xf]
        %v939 = vld [vmem:[%s929 + $0x24] sm:$0xf]
        %v940 = vld [vmem:[%s929 + $0x28] sm:$0xf]
        %v941 = vld [vmem:[%s929 + $0x2c] sm:$0xf]
        %v942 = vld [vmem:[%s929 + $0x30] sm:$0xf]
        %v943 = vld [vmem:[%s929 + $0x34] sm:$0xf]
        %v944 = vld [vmem:[%s929 + $0x38] sm:$0xf]
        %v945 = vld [vmem:[%s929 + $0x3c] sm:$0xf]
        %v946 = vld [vmem:[%s929 + $0x40] sm:$0xf]
        %v947 = vld [vmem:[%s929 + $0x44] sm:$0xf]
        %v948 = vld [vmem:[%s929 + $0x48] sm:$0xf]
        %v949 = vld [vmem:[%s929 + $0x4c] sm:$0xf]
        %v950 = vld [vmem:[%s929 + $0x50] sm:$0xf]
        %v951 = vld [vmem:[%s929 + $0x54] sm:$0xf]
        %v952 = vld [vmem:[%s929 + $0x58] sm:$0xf]
        %v953 = vld [vmem:[%s929 + $0x5c] sm:$0xf]
        %v954 = vld [vmem:[%s929 + $0x60] sm:$0xf]
        %v955 = vld [vmem:[%s929 + $0x64] sm:$0xf]
        %v956 = vld [vmem:[%s929 + $0x68] sm:$0xf]
        %v957 = vld [vmem:[%s929 + $0x6c] sm:$0xf]
        %v958 = vld [vmem:[%s929 + $0x70] sm:$0xf]
        %v959 = vld [vmem:[%s929 + $0x74] sm:$0xf]
        %v960 = vld [vmem:[%s929 + $0x78] sm:$0xf]
        %v961 = vld [vmem:[%s929 + $0x7c] sm:$0xf]
        %v962 = vld [vmem:[%s929 + $0x80] sm:$0xf]
        %v963 = vld [vmem:[%s929 + $0x84] sm:$0xf]
        %v964 = vld [vmem:[%s929 + $0x88] sm:$0xf]
        %v965 = vld [vmem:[%s929 + $0x8c] sm:$0xf]
        %v966 = vld [vmem:[%s929 + $0x90] sm:$0xf]
        %v967 = vld [vmem:[%s929 + $0x94] sm:$0xf]
        %v968 = vld [vmem:[%s929 + $0x98] sm:$0xf]
        %v969 = vld [vmem:[%s929 + $0x9c] sm:$0xf]
        %v970 = vld [vmem:[%s929 + $0xa0] sm:$0xf]
        %v971 = vld [vmem:[%s929 + $0xa4] sm:$0xf]
        %v972 = vld [vmem:[%s929 + $0xa8] sm:$0xf]
        %v973 = vld [vmem:[%s929 + $0xac] sm:$0xf]
        %v974 = vld [vmem:[%s929 + $0xb0] sm:$0xf]
        %v975 = vld [vmem:[%s929 + $0xb4] sm:$0xf]
        %v976 = vld [vmem:[%s929 + $0xb8] sm:$0xf]
        %v977 = vld [vmem:[%s929 + $0xbc] sm:$0xf]
        %v1026 = vunpack.c.l.b16 %v930
        %v1027 = vunpack.c.l.b16 %v931
        %v1028 = vunpack.c.l.b16 %v932
        %v1029 = vunpack.c.l.b16 %v933
        %v1030 = vunpack.c.l.b16 %v934
        %v1031 = vunpack.c.l.b16 %v935
        %v1032 = vunpack.c.l.b16 %v936
        %v1033 = vunpack.c.l.b16 %v937
        %v1034 = vunpack.c.l.b16 %v938
        %v1035 = vunpack.c.l.b16 %v939
        %v1036 = vunpack.c.l.b16 %v940
        %v1037 = vunpack.c.l.b16 %v941
        %v1038 = vunpack.c.l.b16 %v942
        %v1039 = vunpack.c.l.b16 %v943
        %v1040 = vunpack.c.l.b16 %v944
        %v1041 = vunpack.c.l.b16 %v945
        %v1042 = vunpack.c.l.b16 %v946
        %v1043 = vunpack.c.l.b16 %v947
        %v1044 = vunpack.c.l.b16 %v948
        %v1045 = vunpack.c.l.b16 %v949
        %v1046 = vunpack.c.l.b16 %v950
        %v1047 = vunpack.c.l.b16 %v951
        %v1048 = vunpack.c.l.b16 %v952
        %v1049 = vunpack.c.l.b16 %v953
        %v1050 = vunpack.c.l.b16 %v954
        %v1051 = vunpack.c.l.b16 %v955
        %v1052 = vunpack.c.l.b16 %v956
        %v1053 = vunpack.c.l.b16 %v957
        %v1054 = vunpack.c.l.b16 %v958
        %v1055 = vunpack.c.l.b16 %v959
        %v1056 = vunpack.c.l.b16 %v960
        %v1057 = vunpack.c.l.b16 %v961
        %v1058 = vunpack.c.l.b16 %v962
        %v1059 = vunpack.c.l.b16 %v963
        %v1060 = vunpack.c.l.b16 %v964
        %v1061 = vunpack.c.l.b16 %v965
        %v1062 = vunpack.c.l.b16 %v966
        %v1063 = vunpack.c.l.b16 %v967
        %v1064 = vunpack.c.l.b16 %v968
        %v1065 = vunpack.c.l.b16 %v969
        %v1066 = vunpack.c.l.b16 %v970
        %v1067 = vunpack.c.l.b16 %v971
        %v1068 = vunpack.c.l.b16 %v972
        %v1069 = vunpack.c.l.b16 %v973
        %v1070 = vunpack.c.l.b16 %v974
        %v1071 = vunpack.c.l.b16 %v975
        %v1072 = vunpack.c.l.b16 %v976
        %v1073 = vunpack.c.l.b16 %v977
        %v1074 = vpack.c.b16 %v1027, %v1026
        %v1075 = vpack.c.b16 %v1029, %v1028
        %v1076 = vpack.c.b16 %v1031, %v1030
        %v1077 = vpack.c.b16 %v1033, %v1032
        %v1078 = vpack.c.b16 %v1035, %v1034
        %v1079 = vpack.c.b16 %v1037, %v1036
        %v1080 = vpack.c.b16 %v1039, %v1038
        %v1081 = vpack.c.b16 %v1041, %v1040
        %v1082 = vpack.c.b16 %v1043, %v1042
        %v1083 = vpack.c.b16 %v1045, %v1044
        %v1084 = vpack.c.b16 %v1047, %v1046
        %v1085 = vpack.c.b16 %v1049, %v1048
        %v1086 = vpack.c.b16 %v1051, %v1050
        %v1087 = vpack.c.b16 %v1053, %v1052
        %v1088 = vpack.c.b16 %v1055, %v1054
        %v1089 = vpack.c.b16 %v1057, %v1056
        %v1090 = vpack.c.b16 %v1059, %v1058
        %v1091 = vpack.c.b16 %v1061, %v1060
        %v1092 = vpack.c.b16 %v1063, %v1062
        %v1093 = vpack.c.b16 %v1065, %v1064
        %v1094 = vpack.c.b16 %v1067, %v1066
        %v1095 = vpack.c.b16 %v1069, %v1068
        %v1096 = vpack.c.b16 %v1071, %v1070
        %v1097 = vpack.c.b16 %v1073, %v1072
        %1122 = vmatpush.bf16.msra.mxu0 %v1081
        %1123 = vmatpush.bf16.msra.mxu0 %v1080
        %1124 = vmatpush.bf16.msra.mxu0 %v1079
        %1125 = vmatpush.bf16.msra.mxu0 %v1078
        %1126 = vmatpush.bf16.msra.mxu0 %v1077
        %1127 = vmatpush.bf16.msra.mxu0 %v1076
        %1128 = vmatpush.bf16.msra.mxu0 %v1075
        %1129 = vmatpush.bf16.msra.mxu0 %v1074
        %1130 = vmatmul.bf16.gmra.mxu0 %v779
        %v1131 = vpop.f32.mrf.mxu0
        %v1132 = vadd.f32 0.0, %v1131
        %v1133 = vpop.f32.mrf.mxu0
        %v1134 = vadd.f32 0.0, %v1133
        %1135 = vmatmul.bf16.gmra.mxu0 %v780
        %v1136 = vpop.f32.mrf.mxu0
        %v1137 = vadd.f32 0.0, %v1136
        %v1138 = vpop.f32.mrf.mxu0
        %v1139 = vadd.f32 0.0, %v1138
        %1140 = vmatmul.bf16.gmra.mxu0 %v781
        %v1141 = vpop.f32.mrf.mxu0
        %v1142 = vadd.f32 0.0, %v1141
        %v1143 = vpop.f32.mrf.mxu0
        %v1144 = vadd.f32 0.0, %v1143
        %1145 = vmatmul.bf16.gmra.mxu0 %v782
        %v1146 = vpop.f32.mrf.mxu0
        %v1147 = vadd.f32 0.0, %v1146
        %v1148 = vpop.f32.mrf.mxu0
        %v1149 = vadd.f32 0.0, %v1148
        %1150 = vmatmul.bf16.gmra.mxu0 %v783
        %v1151 = vpop.f32.mrf.mxu0
        %v1152 = vadd.f32 0.0, %v1151
        %v1153 = vpop.f32.mrf.mxu0
        %v1154 = vadd.f32 0.0, %v1153
        %1155 = vmatmul.bf16.gmra.mxu0 %v784
        %v1156 = vpop.f32.mrf.mxu0
        %v1157 = vadd.f32 0.0, %v1156
        %v1158 = vpop.f32.mrf.mxu0
        %v1159 = vadd.f32 0.0, %v1158
        %1160 = vdwg.mxu0
        %1161 = vmatpush.bf16.msra.mxu0 %v1089
        %1162 = vmatpush.bf16.msra.mxu0 %v1088
        %1163 = vmatpush.bf16.msra.mxu0 %v1087
        %1164 = vmatpush.bf16.msra.mxu0 %v1086
        %1165 = vmatpush.bf16.msra.mxu0 %v1085
        %1166 = vmatpush.bf16.msra.mxu0 %v1084
        %1167 = vmatpush.bf16.msra.mxu0 %v1083
        %1168 = vmatpush.bf16.msra.mxu0 %v1082
        %1169 = vmatmul.bf16.gmra.mxu0 %v820
        %v1170 = vpop.f32.mrf.mxu0
        %v1171 = vadd.f32 %v1132, %v1170
        %v1172 = vpop.f32.mrf.mxu0
        %v1173 = vadd.f32 %v1134, %v1172
        %1174 = vmatmul.bf16.gmra.mxu0 %v832
        %v1175 = vpop.f32.mrf.mxu0
        %v1176 = vadd.f32 %v1137, %v1175
        %v1177 = vpop.f32.mrf.mxu0
        %v1178 = vadd.f32 %v1139, %v1177
        %1179 = vmatmul.bf16.gmra.mxu0 %v844
        %v1180 = vpop.f32.mrf.mxu0
        %v1181 = vadd.f32 %v1142, %v1180
        %v1182 = vpop.f32.mrf.mxu0
        %v1183 = vadd.f32 %v1144, %v1182
        %1184 = vmatmul.bf16.gmra.mxu0 %v856
        %v1185 = vpop.f32.mrf.mxu0
        %v1186 = vadd.f32 %v1147, %v1185
        %v1187 = vpop.f32.mrf.mxu0
        %v1188 = vadd.f32 %v1149, %v1187
        %1189 = vmatmul.bf16.gmra.mxu0 %v868
        %v1190 = vpop.f32.mrf.mxu0
        %v1191 = vadd.f32 %v1152, %v1190
        %v1192 = vpop.f32.mrf.mxu0
        %v1193 = vadd.f32 %v1154, %v1192
        %1194 = vmatmul.bf16.gmra.mxu0 %v880
        %v1195 = vpop.f32.mrf.mxu0
        %v1196 = vadd.f32 %v1157, %v1195
        %v1197 = vpop.f32.mrf.mxu0
        %v1198 = vadd.f32 %v1159, %v1197
        %1199 = vdwg.mxu0
        %1200 = vmatpush.bf16.msra.mxu0 %v1097
        %1201 = vmatpush.bf16.msra.mxu0 %v1096
        %1202 = vmatpush.bf16.msra.mxu0 %v1095
        %1203 = vmatpush.bf16.msra.mxu0 %v1094
        %1204 = vmatpush.bf16.msra.mxu0 %v1093
        %1205 = vmatpush.bf16.msra.mxu0 %v1092
        %1206 = vmatpush.bf16.msra.mxu0 %v1091
        %1207 = vmatpush.bf16.msra.mxu0 %v1090
        %1208 = vmatmul.bf16.gmra.mxu0 %v907
        %v1209 = vpop.f32.mrf.mxu0
        %v1210 = vadd.f32 %v1171, %v1209
        %v1211 = vpop.f32.mrf.mxu0
        %v1212 = vadd.f32 %v1173, %v1211
        %1213 = vmatmul.bf16.gmra.mxu0 %v910
        %v1214 = vpop.f32.mrf.mxu0
        %v1215 = vadd.f32 %v1176, %v1214
        %v1216 = vpop.f32.mrf.mxu0
        %v1217 = vadd.f32 %v1178, %v1216
        %1218 = vmatmul.bf16.gmra.mxu0 %v913
        %v1219 = vpop.f32.mrf.mxu0
        %v1220 = vadd.f32 %v1181, %v1219
        %v1221 = vpop.f32.mrf.mxu0
        %v1222 = vadd.f32 %v1183, %v1221
        %1223 = vmatmul.bf16.gmra.mxu0 %v916
        %v1224 = vpop.f32.mrf.mxu0
        %v1225 = vadd.f32 %v1186, %v1224
        %v1226 = vpop.f32.mrf.mxu0
        %v1227 = vadd.f32 %v1188, %v1226
        %1228 = vmatmul.bf16.gmra.mxu0 %v919
        %v1229 = vpop.f32.mrf.mxu0
        %v1230 = vadd.f32 %v1191, %v1229
        %v1231 = vpop.f32.mrf.mxu0
        %v1232 = vadd.f32 %v1193, %v1231
        %1233 = vmatmul.bf16.gmra.mxu0 %v922
        %v1234 = vpop.f32.mrf.mxu0
        %v1235 = vadd.f32 %v1196, %v1234
        %v1236 = vpop.f32.mrf.mxu0
        %v1237 = vadd.f32 %v1198, %v1236
        %1238 = vdwg.mxu0
        %v1239 = vld [vmem:[#allocation2] sm:$0xff]
        %v1240 = vld [vmem:[#allocation2 + $0x8] sm:$0xff]
        %v1241 = vld [vmem:[#allocation2 + $0x10] sm:$0xff]
        %v1242 = vld [vmem:[#allocation2 + $0x18] sm:$0xff]
        %v1243 = vld [vmem:[#allocation2 + $0x20] sm:$0xff]
        %v1244 = vld [vmem:[#allocation2 + $0x28] sm:$0xff]
        %v1245 = vld [vmem:[#allocation2 + $0x30] sm:$0xff]
        %v1246 = vld [vmem:[#allocation2 + $0x38] sm:$0xff]
        %v1247 = vld [vmem:[#allocation2 + $0x40] sm:$0xff]
        %v1248 = vld [vmem:[#allocation2 + $0x48] sm:$0xff]
        %v1249 = vld [vmem:[#allocation2 + $0x50] sm:$0xff]
        %v1250 = vld [vmem:[#allocation2 + $0x58] sm:$0xff]
        %v1251 = vadd.f32 %v1239, %v1210
        %v1252 = vadd.f32 %v1240, %v1212
        %v1253 = vadd.f32 %v1241, %v1215
        %v1254 = vadd.f32 %v1242, %v1217
        %v1255 = vadd.f32 %v1243, %v1220
        %v1256 = vadd.f32 %v1244, %v1222
        %v1257 = vadd.f32 %v1245, %v1225
        %v1258 = vadd.f32 %v1246, %v1227
        %v1259 = vadd.f32 %v1247, %v1230
        %v1260 = vadd.f32 %v1248, %v1232
        %v1261 = vadd.f32 %v1249, %v1235
        %v1262 = vadd.f32 %v1250, %v1237
        %1263 = vst [vmem:[#allocation2] sm:$0xff] %v1251
        %1264 = vst [vmem:[#allocation2 + $0x8] sm:$0xff] %v1252
        %1265 = vst [vmem:[#allocation2 + $0x10] sm:$0xff] %v1253
        %1266 = vst [vmem:[#allocation2 + $0x18] sm:$0xff] %v1254
        %1267 = vst [vmem:[#allocation2 + $0x20] sm:$0xff] %v1255
        %1268 = vst [vmem:[#allocation2 + $0x28] sm:$0xff] %v1256
        %1269 = vst [vmem:[#allocation2 + $0x30] sm:$0xff] %v1257
        %1270 = vst [vmem:[#allocation2 + $0x38] sm:$0xff] %v1258
        %1271 = vst [vmem:[#allocation2 + $0x40] sm:$0xff] %v1259
        %1272 = vst [vmem:[#allocation2 + $0x48] sm:$0xff] %v1260
        %1273 = vst [vmem:[#allocation2 + $0x50] sm:$0xff] %v1261
        %1274 = vst [vmem:[#allocation2 + $0x58] sm:$0xff] %v1262
        %s1275 = sadd.s32 %s202, 2
        %s1276 = smul.u32 %s1275, 3
        %s1277 = smul.addr %s1276, 4
        %s1278 = scalar_lea.vmem %s199, %s1277
        %v1279 = vld [vmem:[%s1278] sm:$0xf]
        %v1280 = vld [vmem:[%s1278 + $0x4] sm:$0xf]
        %v1281 = vld [vmem:[%s1278 + $0xc] sm:$0xf]
        %v1282 = vld [vmem:[%s1278 + $0x10] sm:$0xf]
        %v1283 = vld [vmem:[%s1278 + $0x18] sm:$0xf]
        %v1284 = vld [vmem:[%s1278 + $0x1c] sm:$0xf]
        %v1285 = vld [vmem:[%s1278 + $0x24] sm:$0xf]
        %v1286 = vld [vmem:[%s1278 + $0x28] sm:$0xf]
        %v1287 = vld [vmem:[%s1278 + $0x30] sm:$0xf]
        %v1288 = vld [vmem:[%s1278 + $0x34] sm:$0xf]
        %v1289 = vld [vmem:[%s1278 + $0x3c] sm:$0xf]
        %v1290 = vld [vmem:[%s1278 + $0x40] sm:$0xf]
        %v1291 = vld [vmem:[%s1278 + $0x8] sm:$0x1]
        %v1292 = vld [vmem:[%s1278 + $0x14] sm:$0x1]
        %v1293 = vld [vmem:[%s1278 + $0x20] sm:$0x1]
        %v1294 = vld [vmem:[%s1278 + $0x2c] sm:$0x1]
        %v1295 = vld [vmem:[%s1278 + $0x38] sm:$0x1]
        %v1296 = vld [vmem:[%s1278 + $0x44] sm:$0x1]
        %v1297 = vld [vmem:[%s1278] sm:$0xe]
        %v1298 = vld [vmem:[%s1278 + $0xc] sm:$0xe]
        %v1299 = vld [vmem:[%s1278 + $0x18] sm:$0xe]
        %v1300 = vld [vmem:[%s1278 + $0x24] sm:$0xe]
        %v1301 = vld [vmem:[%s1278 + $0x30] sm:$0xe]
        %v1302 = vld [vmem:[%s1278 + $0x3c] sm:$0xe]
        %v1315 = vunpack.c.l.b16 %v1279
        %v1316 = vunpack.c.l.b16 %v1280
        %v1317 = vunpack.c.l.b16 %v1281
        %v1318 = vunpack.c.l.b16 %v1282
        %v1319 = vunpack.c.l.b16 %v1283
        %v1320 = vunpack.c.l.b16 %v1284
        %v1321 = vunpack.c.l.b16 %v1285
        %v1322 = vunpack.c.l.b16 %v1286
        %v1323 = vunpack.c.l.b16 %v1287
        %v1324 = vunpack.c.l.b16 %v1288
        %v1325 = vunpack.c.l.b16 %v1289
        %v1326 = vunpack.c.l.b16 %v1290
        %v1327 = vpack.c.b16 %v1316, %v1315
        %v1328 = vpack.c.b16 %v1318, %v1317
        %v1329 = vpack.c.b16 %v1320, %v1319
        %v1330 = vpack.c.b16 %v1322, %v1321
        %v1331 = vpack.c.b16 %v1324, %v1323
        %v1332 = vpack.c.b16 %v1326, %v1325
        %v1345 = vunpack.c.l.b16 %v1291
        %v1346 = vunpack.c.l.b16 %v1292
        %v1347 = vunpack.c.l.b16 %v1293
        %v1348 = vunpack.c.l.b16 %v1294
        %v1349 = vunpack.c.l.b16 %v1295
        %v1350 = vunpack.c.l.b16 %v1296
        %v1351 = vpack.c.b16 %v1345, %v1345
        %v1352 = vpack.c.b16 %v1346, %v1346
        %v1353 = vpack.c.b16 %v1347, %v1347
        %v1354 = vpack.c.b16 %v1348, %v1348
        %v1355 = vpack.c.b16 %v1349, %v1349
        %v1356 = vpack.c.b16 %v1350, %v1350
        %v1358 = vshrl.u32 %v1327, 16
        %v1360 = vshll.u32 %v1327, 16
        %v1362 = vrot.slane %v1360, 1
        %v1363 = vor.u32 %v1358, %v1362
        %v1365 = vshll.u32 %v1351, 16
        %v1367 = vrot.slane %v1365, 1
        %v1368 = vsel %vm284, %v1363, %v1367
        %v1370 = vshrl.u32 %v1328, 16
        %v1372 = vshll.u32 %v1328, 16
        %v1374 = vrot.slane %v1372, 1
        %v1375 = vor.u32 %v1370, %v1374
        %v1377 = vshll.u32 %v1352, 16
        %v1379 = vrot.slane %v1377, 1
        %v1380 = vsel %vm284, %v1375, %v1379
        %v1382 = vshrl.u32 %v1329, 16
        %v1384 = vshll.u32 %v1329, 16
        %v1386 = vrot.slane %v1384, 1
        %v1387 = vor.u32 %v1382, %v1386
        %v1389 = vshll.u32 %v1353, 16
        %v1391 = vrot.slane %v1389, 1
        %v1392 = vsel %vm284, %v1387, %v1391
        %v1394 = vshrl.u32 %v1330, 16
        %v1396 = vshll.u32 %v1330, 16
        %v1398 = vrot.slane %v1396, 1
        %v1399 = vor.u32 %v1394, %v1398
        %v1401 = vshll.u32 %v1354, 16
        %v1403 = vrot.slane %v1401, 1
        %v1404 = vsel %vm284, %v1399, %v1403
        %v1406 = vshrl.u32 %v1331, 16
        %v1408 = vshll.u32 %v1331, 16
        %v1410 = vrot.slane %v1408, 1
        %v1411 = vor.u32 %v1406, %v1410
        %v1413 = vshll.u32 %v1355, 16
        %v1415 = vrot.slane %v1413, 1
        %v1416 = vsel %vm284, %v1411, %v1415
        %v1418 = vshrl.u32 %v1332, 16
        %v1420 = vshll.u32 %v1332, 16
        %v1422 = vrot.slane %v1420, 1
        %v1423 = vor.u32 %v1418, %v1422
        %v1425 = vshll.u32 %v1356, 16
        %v1427 = vrot.slane %v1425, 1
        %v1428 = vsel %vm284, %v1423, %v1427
        %v1441 = vunpack.c.l.b16 %v1297
        %v1442 = vunpack.c.l.b16 %v1298
        %v1443 = vunpack.c.l.b16 %v1299
        %v1444 = vunpack.c.l.b16 %v1300
        %v1445 = vunpack.c.l.b16 %v1301
        %v1446 = vunpack.c.l.b16 %v1302
        %v1447 = vpack.c.b16 %v1316, %v1441
        %v1448 = vpack.c.b16 %v1318, %v1442
        %v1449 = vpack.c.b16 %v1320, %v1443
        %v1450 = vpack.c.b16 %v1322, %v1444
        %v1451 = vpack.c.b16 %v1324, %v1445
        %v1452 = vpack.c.b16 %v1326, %v1446
        %v1453 = vrot.slane %v1447, 1
        %v1454 = vrot.slane %v1351, 1
        %v1455 = vsel %vm381, %v1453, %v1454
        %v1456 = vrot.slane %v1448, 1
        %v1457 = vrot.slane %v1352, 1
        %v1458 = vsel %vm381, %v1456, %v1457
        %v1459 = vrot.slane %v1449, 1
        %v1460 = vrot.slane %v1353, 1
        %v1461 = vsel %vm381, %v1459, %v1460
        %v1462 = vrot.slane %v1450, 1
        %v1463 = vrot.slane %v1354, 1
        %v1464 = vsel %vm381, %v1462, %v1463
        %v1465 = vrot.slane %v1451, 1
        %v1466 = vrot.slane %v1355, 1
        %v1467 = vsel %vm381, %v1465, %v1466
        %v1468 = vrot.slane %v1452, 1
        %v1469 = vrot.slane %v1356, 1
        %v1470 = vsel %vm381, %v1468, %v1469
        %s1477 = scalar_lea.vmem %s1, 384
        %v1478 = vld [vmem:[%s1477] sm:$0xf]
        %v1479 = vld [vmem:[%s1477 + $0x4] sm:$0xf]
        %v1480 = vld [vmem:[%s1477 + $0x8] sm:$0xf]
        %v1481 = vld [vmem:[%s1477 + $0xc] sm:$0xf]
        %v1482 = vld [vmem:[%s1477 + $0x10] sm:$0xf]
        %v1483 = vld [vmem:[%s1477 + $0x14] sm:$0xf]
        %v1484 = vld [vmem:[%s1477 + $0x18] sm:$0xf]
        %v1485 = vld [vmem:[%s1477 + $0x1c] sm:$0xf]
        %v1486 = vld [vmem:[%s1477 + $0x20] sm:$0xf]
        %v1487 = vld [vmem:[%s1477 + $0x24] sm:$0xf]
        %v1488 = vld [vmem:[%s1477 + $0x28] sm:$0xf]
        %v1489 = vld [vmem:[%s1477 + $0x2c] sm:$0xf]
        %v1490 = vld [vmem:[%s1477 + $0x30] sm:$0xf]
        %v1491 = vld [vmem:[%s1477 + $0x34] sm:$0xf]
        %v1492 = vld [vmem:[%s1477 + $0x38] sm:$0xf]
        %v1493 = vld [vmem:[%s1477 + $0x3c] sm:$0xf]
        %v1494 = vld [vmem:[%s1477 + $0x40] sm:$0xf]
        %v1495 = vld [vmem:[%s1477 + $0x44] sm:$0xf]
        %v1496 = vld [vmem:[%s1477 + $0x48] sm:$0xf]
        %v1497 = vld [vmem:[%s1477 + $0x4c] sm:$0xf]
        %v1498 = vld [vmem:[%s1477 + $0x50] sm:$0xf]
        %v1499 = vld [vmem:[%s1477 + $0x54] sm:$0xf]
        %v1500 = vld [vmem:[%s1477 + $0x58] sm:$0xf]
        %v1501 = vld [vmem:[%s1477 + $0x5c] sm:$0xf]
        %v1502 = vld [vmem:[%s1477 + $0x60] sm:$0xf]
        %v1503 = vld [vmem:[%s1477 + $0x64] sm:$0xf]
        %v1504 = vld [vmem:[%s1477 + $0x68] sm:$0xf]
        %v1505 = vld [vmem:[%s1477 + $0x6c] sm:$0xf]
        %v1506 = vld [vmem:[%s1477 + $0x70] sm:$0xf]
        %v1507 = vld [vmem:[%s1477 + $0x74] sm:$0xf]
        %v1508 = vld [vmem:[%s1477 + $0x78] sm:$0xf]
        %v1509 = vld [vmem:[%s1477 + $0x7c] sm:$0xf]
        %v1510 = vld [vmem:[%s1477 + $0x80] sm:$0xf]
        %v1511 = vld [vmem:[%s1477 + $0x84] sm:$0xf]
        %v1512 = vld [vmem:[%s1477 + $0x88] sm:$0xf]
        %v1513 = vld [vmem:[%s1477 + $0x8c] sm:$0xf]
        %v1514 = vld [vmem:[%s1477 + $0x90] sm:$0xf]
        %v1515 = vld [vmem:[%s1477 + $0x94] sm:$0xf]
        %v1516 = vld [vmem:[%s1477 + $0x98] sm:$0xf]
        %v1517 = vld [vmem:[%s1477 + $0x9c] sm:$0xf]
        %v1518 = vld [vmem:[%s1477 + $0xa0] sm:$0xf]
        %v1519 = vld [vmem:[%s1477 + $0xa4] sm:$0xf]
        %v1520 = vld [vmem:[%s1477 + $0xa8] sm:$0xf]
        %v1521 = vld [vmem:[%s1477 + $0xac] sm:$0xf]
        %v1522 = vld [vmem:[%s1477 + $0xb0] sm:$0xf]
        %v1523 = vld [vmem:[%s1477 + $0xb4] sm:$0xf]
        %v1524 = vld [vmem:[%s1477 + $0xb8] sm:$0xf]
        %v1525 = vld [vmem:[%s1477 + $0xbc] sm:$0xf]
        %v1574 = vunpack.c.l.b16 %v1478
        %v1575 = vunpack.c.l.b16 %v1479
        %v1576 = vunpack.c.l.b16 %v1480
        %v1577 = vunpack.c.l.b16 %v1481
        %v1578 = vunpack.c.l.b16 %v1482
        %v1579 = vunpack.c.l.b16 %v1483
        %v1580 = vunpack.c.l.b16 %v1484
        %v1581 = vunpack.c.l.b16 %v1485
        %v1582 = vunpack.c.l.b16 %v1486
        %v1583 = vunpack.c.l.b16 %v1487
        %v1584 = vunpack.c.l.b16 %v1488
        %v1585 = vunpack.c.l.b16 %v1489
        %v1586 = vunpack.c.l.b16 %v1490
        %v1587 = vunpack.c.l.b16 %v1491
        %v1588 = vunpack.c.l.b16 %v1492
        %v1589 = vunpack.c.l.b16 %v1493
        %v1590 = vunpack.c.l.b16 %v1494
        %v1591 = vunpack.c.l.b16 %v1495
        %v1592 = vunpack.c.l.b16 %v1496
        %v1593 = vunpack.c.l.b16 %v1497
        %v1594 = vunpack.c.l.b16 %v1498
        %v1595 = vunpack.c.l.b16 %v1499
        %v1596 = vunpack.c.l.b16 %v1500
        %v1597 = vunpack.c.l.b16 %v1501
        %v1598 = vunpack.c.l.b16 %v1502
        %v1599 = vunpack.c.l.b16 %v1503
        %v1600 = vunpack.c.l.b16 %v1504
        %v1601 = vunpack.c.l.b16 %v1505
        %v1602 = vunpack.c.l.b16 %v1506
        %v1603 = vunpack.c.l.b16 %v1507
        %v1604 = vunpack.c.l.b16 %v1508
        %v1605 = vunpack.c.l.b16 %v1509
        %v1606 = vunpack.c.l.b16 %v1510
        %v1607 = vunpack.c.l.b16 %v1511
        %v1608 = vunpack.c.l.b16 %v1512
        %v1609 = vunpack.c.l.b16 %v1513
        %v1610 = vunpack.c.l.b16 %v1514
        %v1611 = vunpack.c.l.b16 %v1515
        %v1612 = vunpack.c.l.b16 %v1516
        %v1613 = vunpack.c.l.b16 %v1517
        %v1614 = vunpack.c.l.b16 %v1518
        %v1615 = vunpack.c.l.b16 %v1519
        %v1616 = vunpack.c.l.b16 %v1520
        %v1617 = vunpack.c.l.b16 %v1521
        %v1618 = vunpack.c.l.b16 %v1522
        %v1619 = vunpack.c.l.b16 %v1523
        %v1620 = vunpack.c.l.b16 %v1524
        %v1621 = vunpack.c.l.b16 %v1525
        %v1622 = vpack.c.b16 %v1575, %v1574
        %v1623 = vpack.c.b16 %v1577, %v1576
        %v1624 = vpack.c.b16 %v1579, %v1578
        %v1625 = vpack.c.b16 %v1581, %v1580
        %v1626 = vpack.c.b16 %v1583, %v1582
        %v1627 = vpack.c.b16 %v1585, %v1584
        %v1628 = vpack.c.b16 %v1587, %v1586
        %v1629 = vpack.c.b16 %v1589, %v1588
        %v1630 = vpack.c.b16 %v1591, %v1590
        %v1631 = vpack.c.b16 %v1593, %v1592
        %v1632 = vpack.c.b16 %v1595, %v1594
        %v1633 = vpack.c.b16 %v1597, %v1596
        %v1634 = vpack.c.b16 %v1599, %v1598
        %v1635 = vpack.c.b16 %v1601, %v1600
        %v1636 = vpack.c.b16 %v1603, %v1602
        %v1637 = vpack.c.b16 %v1605, %v1604
        %v1638 = vpack.c.b16 %v1607, %v1606
        %v1639 = vpack.c.b16 %v1609, %v1608
        %v1640 = vpack.c.b16 %v1611, %v1610
        %v1641 = vpack.c.b16 %v1613, %v1612
        %v1642 = vpack.c.b16 %v1615, %v1614
        %v1643 = vpack.c.b16 %v1617, %v1616
        %v1644 = vpack.c.b16 %v1619, %v1618
        %v1645 = vpack.c.b16 %v1621, %v1620
        %1670 = vmatpush.bf16.msra.mxu0 %v1629
        %1671 = vmatpush.bf16.msra.mxu0 %v1628
        %1672 = vmatpush.bf16.msra.mxu0 %v1627
        %1673 = vmatpush.bf16.msra.mxu0 %v1626
        %1674 = vmatpush.bf16.msra.mxu0 %v1625
        %1675 = vmatpush.bf16.msra.mxu0 %v1624
        %1676 = vmatpush.bf16.msra.mxu0 %v1623
        %1677 = vmatpush.bf16.msra.mxu0 %v1622
        %1678 = vmatmul.bf16.gmra.mxu0 %v1327
        %v1679 = vpop.f32.mrf.mxu0
        %v1680 = vadd.f32 0.0, %v1679
        %v1681 = vpop.f32.mrf.mxu0
        %v1682 = vadd.f32 0.0, %v1681
        %1683 = vmatmul.bf16.gmra.mxu0 %v1328
        %v1684 = vpop.f32.mrf.mxu0
        %v1685 = vadd.f32 0.0, %v1684
        %v1686 = vpop.f32.mrf.mxu0
        %v1687 = vadd.f32 0.0, %v1686
        %1688 = vmatmul.bf16.gmra.mxu0 %v1329
        %v1689 = vpop.f32.mrf.mxu0
        %v1690 = vadd.f32 0.0, %v1689
        %v1691 = vpop.f32.mrf.mxu0
        %v1692 = vadd.f32 0.0, %v1691
        %1693 = vmatmul.bf16.gmra.mxu0 %v1330
        %v1694 = vpop.f32.mrf.mxu0
        %v1695 = vadd.f32 0.0, %v1694
        %v1696 = vpop.f32.mrf.mxu0
        %v1697 = vadd.f32 0.0, %v1696
        %1698 = vmatmul.bf16.gmra.mxu0 %v1331
        %v1699 = vpop.f32.mrf.mxu0
        %v1700 = vadd.f32 0.0, %v1699
        %v1701 = vpop.f32.mrf.mxu0
        %v1702 = vadd.f32 0.0, %v1701
        %1703 = vmatmul.bf16.gmra.mxu0 %v1332
        %v1704 = vpop.f32.mrf.mxu0
        %v1705 = vadd.f32 0.0, %v1704
        %v1706 = vpop.f32.mrf.mxu0
        %v1707 = vadd.f32 0.0, %v1706
        %1708 = vdwg.mxu0
        %1709 = vmatpush.bf16.msra.mxu0 %v1637
        %1710 = vmatpush.bf16.msra.mxu0 %v1636
        %1711 = vmatpush.bf16.msra.mxu0 %v1635
        %1712 = vmatpush.bf16.msra.mxu0 %v1634
        %1713 = vmatpush.bf16.msra.mxu0 %v1633
        %1714 = vmatpush.bf16.msra.mxu0 %v1632
        %1715 = vmatpush.bf16.msra.mxu0 %v1631
        %1716 = vmatpush.bf16.msra.mxu0 %v1630
        %1717 = vmatmul.bf16.gmra.mxu0 %v1368
        %v1718 = vpop.f32.mrf.mxu0
        %v1719 = vadd.f32 %v1680, %v1718
        %v1720 = vpop.f32.mrf.mxu0
        %v1721 = vadd.f32 %v1682, %v1720
        %1722 = vmatmul.bf16.gmra.mxu0 %v1380
        %v1723 = vpop.f32.mrf.mxu0
        %v1724 = vadd.f32 %v1685, %v1723
        %v1725 = vpop.f32.mrf.mxu0
        %v1726 = vadd.f32 %v1687, %v1725
        %1727 = vmatmul.bf16.gmra.mxu0 %v1392
        %v1728 = vpop.f32.mrf.mxu0
        %v1729 = vadd.f32 %v1690, %v1728
        %v1730 = vpop.f32.mrf.mxu0
        %v1731 = vadd.f32 %v1692, %v1730
        %1732 = vmatmul.bf16.gmra.mxu0 %v1404
        %v1733 = vpop.f32.mrf.mxu0
        %v1734 = vadd.f32 %v1695, %v1733
        %v1735 = vpop.f32.mrf.mxu0
        %v1736 = vadd.f32 %v1697, %v1735
        %1737 = vmatmul.bf16.gmra.mxu0 %v1416
        %v1738 = vpop.f32.mrf.mxu0
        %v1739 = vadd.f32 %v1700, %v1738
        %v1740 = vpop.f32.mrf.mxu0
        %v1741 = vadd.f32 %v1702, %v1740
        %1742 = vmatmul.bf16.gmra.mxu0 %v1428
        %v1743 = vpop.f32.mrf.mxu0
        %v1744 = vadd.f32 %v1705, %v1743
        %v1745 = vpop.f32.mrf.mxu0
        %v1746 = vadd.f32 %v1707, %v1745
        %1747 = vdwg.mxu0
        %1748 = vmatpush.bf16.msra.mxu0 %v1645
        %1749 = vmatpush.bf16.msra.mxu0 %v1644
        %1750 = vmatpush.bf16.msra.mxu0 %v1643
        %1751 = vmatpush.bf16.msra.mxu0 %v1642
        %1752 = vmatpush.bf16.msra.mxu0 %v1641
        %1753 = vmatpush.bf16.msra.mxu0 %v1640
        %1754 = vmatpush.bf16.msra.mxu0 %v1639
        %1755 = vmatpush.bf16.msra.mxu0 %v1638
        %1756 = vmatmul.bf16.gmra.mxu0 %v1455
        %v1757 = vpop.f32.mrf.mxu0
        %v1758 = vadd.f32 %v1719, %v1757
        %v1759 = vpop.f32.mrf.mxu0
        %v1760 = vadd.f32 %v1721, %v1759
        %1761 = vmatmul.bf16.gmra.mxu0 %v1458
        %v1762 = vpop.f32.mrf.mxu0
        %v1763 = vadd.f32 %v1724, %v1762
        %v1764 = vpop.f32.mrf.mxu0
        %v1765 = vadd.f32 %v1726, %v1764
        %1766 = vmatmul.bf16.gmra.mxu0 %v1461
        %v1767 = vpop.f32.mrf.mxu0
        %v1768 = vadd.f32 %v1729, %v1767
        %v1769 = vpop.f32.mrf.mxu0
        %v1770 = vadd.f32 %v1731, %v1769
        %1771 = vmatmul.bf16.gmra.mxu0 %v1464
        %v1772 = vpop.f32.mrf.mxu0
        %v1773 = vadd.f32 %v1734, %v1772
        %v1774 = vpop.f32.mrf.mxu0
        %v1775 = vadd.f32 %v1736, %v1774
        %1776 = vmatmul.bf16.gmra.mxu0 %v1467
        %v1777 = vpop.f32.mrf.mxu0
        %v1778 = vadd.f32 %v1739, %v1777
        %v1779 = vpop.f32.mrf.mxu0
        %v1780 = vadd.f32 %v1741, %v1779
        %1781 = vmatmul.bf16.gmra.mxu0 %v1470
        %v1782 = vpop.f32.mrf.mxu0
        %v1783 = vadd.f32 %v1744, %v1782
        %v1784 = vpop.f32.mrf.mxu0
        %v1785 = vadd.f32 %v1746, %v1784
        %1786 = vdwg.mxu0
        %v1787 = vld [vmem:[#allocation2] sm:$0xff]
        %v1788 = vld [vmem:[#allocation2 + $0x8] sm:$0xff]
        %v1789 = vld [vmem:[#allocation2 + $0x10] sm:$0xff]
        %v1790 = vld [vmem:[#allocation2 + $0x18] sm:$0xff]
        %v1791 = vld [vmem:[#allocation2 + $0x20] sm:$0xff]
        %v1792 = vld [vmem:[#allocation2 + $0x28] sm:$0xff]
        %v1793 = vld [vmem:[#allocation2 + $0x30] sm:$0xff]
        %v1794 = vld [vmem:[#allocation2 + $0x38] sm:$0xff]
        %v1795 = vld [vmem:[#allocation2 + $0x40] sm:$0xff]
        %v1796 = vld [vmem:[#allocation2 + $0x48] sm:$0xff]
        %v1797 = vld [vmem:[#allocation2 + $0x50] sm:$0xff]
        %v1798 = vld [vmem:[#allocation2 + $0x58] sm:$0xff]
        %v1799 = vadd.f32 %v1787, %v1758
        %v1800 = vadd.f32 %v1788, %v1760
        %v1801 = vadd.f32 %v1789, %v1763
        %v1802 = vadd.f32 %v1790, %v1765
        %v1803 = vadd.f32 %v1791, %v1768
        %v1804 = vadd.f32 %v1792, %v1770
        %v1805 = vadd.f32 %v1793, %v1773
        %v1806 = vadd.f32 %v1794, %v1775
        %v1807 = vadd.f32 %v1795, %v1778
        %v1808 = vadd.f32 %v1796, %v1780
        %v1809 = vadd.f32 %v1797, %v1783
        %v1810 = vadd.f32 %v1798, %v1785
        %1811 = vst [vmem:[#allocation2] sm:$0xff] %v1799
        %1812 = vst [vmem:[#allocation2 + $0x8] sm:$0xff] %v1800
        %1813 = vst [vmem:[#allocation2 + $0x10] sm:$0xff] %v1801
        %1814 = vst [vmem:[#allocation2 + $0x18] sm:$0xff] %v1802
        %1815 = vst [vmem:[#allocation2 + $0x20] sm:$0xff] %v1803
        %1816 = vst [vmem:[#allocation2 + $0x28] sm:$0xff] %v1804
        %1817 = vst [vmem:[#allocation2 + $0x30] sm:$0xff] %v1805
        %1818 = vst [vmem:[#allocation2 + $0x38] sm:$0xff] %v1806
        %1819 = vst [vmem:[#allocation2 + $0x40] sm:$0xff] %v1807
        %1820 = vst [vmem:[#allocation2 + $0x48] sm:$0xff] %v1808
        %1821 = vst [vmem:[#allocation2 + $0x50] sm:$0xff] %v1809
        %1822 = vst [vmem:[#allocation2 + $0x58] sm:$0xff] %v1810
        %v1823 = vld [vmem:[#allocation2] sm:$0xff]
        %v1824 = vld [vmem:[#allocation2 + $0x8] sm:$0xff]
        %v1825 = vld [vmem:[#allocation2 + $0x10] sm:$0xff]
        %v1826 = vld [vmem:[#allocation2 + $0x18] sm:$0xff]
        %v1827 = vld [vmem:[#allocation2 + $0x20] sm:$0xff]
        %v1828 = vld [vmem:[#allocation2 + $0x28] sm:$0xff]
        %v1829 = vld [vmem:[#allocation2 + $0x30] sm:$0xff]
        %v1830 = vld [vmem:[#allocation2 + $0x38] sm:$0xff]
        %v1831 = vld [vmem:[#allocation2 + $0x40] sm:$0xff]
        %v1832 = vld [vmem:[#allocation2 + $0x48] sm:$0xff]
        %v1833 = vld [vmem:[#allocation2 + $0x50] sm:$0xff]
        %v1834 = vld [vmem:[#allocation2 + $0x58] sm:$0xff]
        %v1835 = vmax.f32 %v1823, 0.0
        %v1836 = vmax.f32 %v1824, 0.0
        %v1837 = vmax.f32 %v1825, 0.0
        %v1838 = vmax.f32 %v1826, 0.0
        %v1839 = vmax.f32 %v1827, 0.0
        %v1840 = vmax.f32 %v1828, 0.0
        %v1841 = vmax.f32 %v1829, 0.0
        %v1842 = vmax.f32 %v1830, 0.0
        %v1843 = vmax.f32 %v1831, 0.0
        %v1844 = vmax.f32 %v1832, 0.0
        %v1845 = vmax.f32 %v1833, 0.0
        %v1846 = vmax.f32 %v1834, 0.0
        %v1847 = vpack.c.bf16 %v1835, %v1835
        %v1848 = vpack.c.bf16 %v1836, %v1836
        %v1849 = vpack.c.bf16 %v1837, %v1837
        %v1850 = vpack.c.bf16 %v1838, %v1838
        %v1851 = vpack.c.bf16 %v1839, %v1839
        %v1852 = vpack.c.bf16 %v1840, %v1840
        %v1853 = vpack.c.bf16 %v1841, %v1841
        %v1854 = vpack.c.bf16 %v1842, %v1842
        %v1855 = vpack.c.bf16 %v1843, %v1843
        %v1856 = vpack.c.bf16 %v1844, %v1844
        %v1857 = vpack.c.bf16 %v1845, %v1845
        %v1858 = vpack.c.bf16 %v1846, %v1846
        %1859 = vst [vmem:[#allocation3] sm:$0xf] 0
        %1860 = vst [vmem:[#allocation3 + $0x10] sm:$0xf] 0
        %1861 = vst [vmem:[#allocation3 + $0x20] sm:$0xf] 0
        %1862 = vst [vmem:[#allocation3 + $0x30] sm:$0xf] 0
        %1863 = vst [vmem:[#allocation3 + $0x40] sm:$0xf] 0
        %1864 = vst [vmem:[#allocation3 + $0x50] sm:$0xf] 0
        %1865 = vst [vmem:[#allocation3 + $0xc] sm:$0xf] 0
        %1866 = vst [vmem:[#allocation3 + $0x1c] sm:$0xf] 0
        %1867 = vst [vmem:[#allocation3 + $0x2c] sm:$0xf] 0
        %1868 = vst [vmem:[#allocation3 + $0x3c] sm:$0xf] 0
        %1869 = vst [vmem:[#allocation3 + $0x4c] sm:$0xf] 0
        %1870 = vst [vmem:[#allocation3 + $0x5c] sm:$0xf] 0
        %1871 = vst [vmem:[#allocation3 + $0x4] sm:$0xf] %v1847
        %1872 = vst [vmem:[#allocation3 + $0x8] sm:$0xf] %v1848
        %1873 = vst [vmem:[#allocation3 + $0x14] sm:$0xf] %v1849
        %1874 = vst [vmem:[#allocation3 + $0x18] sm:$0xf] %v1850
        %1875 = vst [vmem:[#allocation3 + $0x24] sm:$0xf] %v1851
        %1876 = vst [vmem:[#allocation3 + $0x28] sm:$0xf] %v1852
        %1877 = vst [vmem:[#allocation3 + $0x34] sm:$0xf] %v1853
        %1878 = vst [vmem:[#allocation3 + $0x38] sm:$0xf] %v1854
        %1879 = vst [vmem:[#allocation3 + $0x44] sm:$0xf] %v1855
        %1880 = vst [vmem:[#allocation3 + $0x48] sm:$0xf] %v1856
        %1881 = vst [vmem:[#allocation3 + $0x54] sm:$0xf] %v1857
        %1882 = vst [vmem:[#allocation3 + $0x58] sm:$0xf] %v1858
        %p1883 = scmp.eq.s32.totalorder %s23, 0
        // Predicated region
        $region37: #{tpu_custom_call.1} parent=31 // pred_check
          %p1884 = pneg %p1883
        $region38: #{tpu_custom_call.1} parent=31 // pred_check_branch
          %1886 = sbr.rel (%p1884) target = $region40
        $region39: #{tpu_custom_call.1} parent=31 // pred_region
          %1887 = vst [vmem:[#allocation3 + $0x4] sm:$0xf] 0
          %1888 = vst [vmem:[#allocation3 + $0x8] sm:$0xf] 0
        $region40: #{tpu_custom_call.1} parent=31 // pred_fallthru
          _
        %p1889 = scmp.eq.s32.totalorder %s23, 3
        // Predicated region
        $region41: #{tpu_custom_call.1} parent=31 // pred_check
          %p1890 = pneg %p1889
        $region42: #{tpu_custom_call.1} parent=31 // pred_check_branch
          %1892 = sbr.rel (%p1890) target = $region44
        $region43: #{tpu_custom_call.1} parent=31 // pred_region
          %s1893 = scalar_lea.vmem [#allocation3], 80
          %1894 = vst [vmem:[%s1893 + $0x4] sm:$0xf] 0
          %1895 = vst [vmem:[%s1893 + $0x8] sm:$0xf] 0
        $region44: #{tpu_custom_call.1} parent=31 // pred_fallthru
          _
        %v1896 = vld [vmem:[#allocation3] sm:$0x8]
        %v1897 = vld [vmem:[#allocation3 + $0x4] sm:$0xf]
        %v1898 = vld [vmem:[#allocation3 + $0x8] sm:$0xf]
        %v1899 = vld [vmem:[#allocation3 + $0x10] sm:$0x8]
        %v1900 = vld [vmem:[#allocation3 + $0x14] sm:$0xf]
        %v1901 = vld [vmem:[#allocation3 + $0x18] sm:$0xf]
        %v1902 = vld [vmem:[#allocation3 + $0x20] sm:$0x8]
        %v1903 = vld [vmem:[#allocation3 + $0x24] sm:$0xf]
        %v1904 = vld [vmem:[#allocation3 + $0x28] sm:$0xf]
        %v1905 = vld [vmem:[#allocation3 + $0x30] sm:$0x8]
        %v1906 = vld [vmem:[#allocation3 + $0x34] sm:$0xf]
        %v1907 = vld [vmem:[#allocation3 + $0x38] sm:$0xf]
        %v1908 = vld [vmem:[#allocation3 + $0xc] sm:$0x1]
        %v1909 = vld [vmem:[#allocation3 + $0x1c] sm:$0x1]
        %v1910 = vld [vmem:[#allocation3 + $0x2c] sm:$0x1]
        %v1911 = vld [vmem:[#allocation3 + $0x3c] sm:$0x1]
        %v1924 = vunpack.c.l.b16 %v1896
        %v1925 = vunpack.c.l.b16 %v1897
        %v1926 = vunpack.c.l.b16 %v1898
        %v1927 = vunpack.c.l.b16 %v1899
        %v1928 = vunpack.c.l.b16 %v1900
        %v1929 = vunpack.c.l.b16 %v1901
        %v1930 = vunpack.c.l.b16 %v1902
        %v1931 = vunpack.c.l.b16 %v1903
        %v1932 = vunpack.c.l.b16 %v1904
        %v1933 = vunpack.c.l.b16 %v1905
        %v1934 = vunpack.c.l.b16 %v1906
        %v1935 = vunpack.c.l.b16 %v1907
        %v1936 = vpack.c.b16 %v1925, %v1924
        %v1937 = vpack.c.b16 %v1926, %v1926
        %v1938 = vpack.c.b16 %v1928, %v1927
        %v1939 = vpack.c.b16 %v1929, %v1929
        %v1940 = vpack.c.b16 %v1931, %v1930
        %v1941 = vpack.c.b16 %v1932, %v1932
        %v1942 = vpack.c.b16 %v1934, %v1933
        %v1943 = vpack.c.b16 %v1935, %v1935
        %v1944 = vpack.c.b16 %v1926, %v1925
        %v1945 = vpack.c.b16 %v1929, %v1928
        %v1946 = vpack.c.b16 %v1932, %v1931
        %v1947 = vpack.c.b16 %v1935, %v1934
        %v1949 = vshrl.u32 %v1944, 16
        %v1951 = vrot.slane %v1949, 4
        %v1952 = vshll.u32 %v1944, 16
        %v1954 = vrot.slane %v1952, 5
        %v1955 = vor.u32 %v1951, %v1954
        %v1957 = vshrl.u32 %v1945, 16
        %v1959 = vrot.slane %v1957, 4
        %v1960 = vshll.u32 %v1945, 16
        %v1962 = vrot.slane %v1960, 5
        %v1963 = vor.u32 %v1959, %v1962
        %v1965 = vshrl.u32 %v1946, 16
        %v1967 = vrot.slane %v1965, 4
        %v1968 = vshll.u32 %v1946, 16
        %v1970 = vrot.slane %v1968, 5
        %v1971 = vor.u32 %v1967, %v1970
        %v1973 = vshrl.u32 %v1947, 16
        %v1975 = vrot.slane %v1973, 4
        %v1976 = vshll.u32 %v1947, 16
        %v1978 = vrot.slane %v1976, 5
        %v1979 = vor.u32 %v1975, %v1978
        %v1984 = vunpack.c.l.b16 %v1908
        %v1985 = vunpack.c.l.b16 %v1909
        %v1986 = vunpack.c.l.b16 %v1910
        %v1987 = vunpack.c.l.b16 %v1911
        %v1988 = vpack.c.b16 %v1984, %v1984
        %v1989 = vpack.c.b16 %v1985, %v1985
        %v1990 = vpack.c.b16 %v1986, %v1986
        %v1991 = vpack.c.b16 %v1987, %v1987
        %vm1992 = vcmask 1042432
        %v1993 = vrot.slane %v1944, 5
        %v1994 = vrot.slane %v1988, 5
        %v1995 = vsel %vm1992, %v1993, %v1994
        %v1996 = vrot.slane %v1945, 5
        %v1997 = vrot.slane %v1989, 5
        %v1998 = vsel %vm1992, %v1996, %v1997
        %v1999 = vrot.slane %v1946, 5
        %v2000 = vrot.slane %v1990, 5
        %v2001 = vsel %vm1992, %v1999, %v2000
        %v2002 = vrot.slane %v1947, 5
        %v2003 = vrot.slane %v1991, 5
        %v2004 = vsel %vm1992, %v2002, %v2003
        %vm2005 = vsmask.f32 4352
        %v2007 = vshrl.u32 %v1936, 16
        %v2009 = vrot.slane %v2007, 3
        %v2010 = vshll.u32 %v1936, 16
        %v2012 = vrot.slane %v2010, 4
        %v2013 = vor.u32 %v2009, %v2012
        %v2015 = vshrl.u32 %v1937, 16
        %v2017 = vrot.slane %v2015, 3
        %v2018 = vshll.u32 %v1937, 16
        %v2020 = vrot.slane %v2018, 4
        %v2021 = vor.u32 %v2017, %v2020
        %v2022 = vsel %vm2005, %v2013, %v2021
        %v2024 = vshrl.u32 %v1955, 16
        %v2026 = vrot.slane %v2024, 3
        %v2027 = vshll.u32 %v1955, 16
        %v2029 = vrot.slane %v2027, 4
        %v2030 = vor.u32 %v2026, %v2029
        %v2031 = vsel %vm2005, %v2030, %v2030
        %v2033 = vshrl.u32 %v1993, 16
        %v2035 = vrot.slane %v2033, 3
        %v2036 = vshll.u32 %v1993, 16
        %v2038 = vrot.slane %v2036, 4
        %v2039 = vor.u32 %v2035, %v2038
        %v2041 = vshrl.u32 %v1995, 16
        %v2043 = vrot.slane %v2041, 3
        %v2044 = vshll.u32 %v1995, 16
        %v2046 = vrot.slane %v2044, 4
        %v2047 = vor.u32 %v2043, %v2046
        %v2048 = vsel %vm2005, %v2039, %v2047
        %v2050 = vshrl.u32 %v1938, 16
        %v2052 = vrot.slane %v2050, 3
        %v2053 = vshll.u32 %v1938, 16
        %v2055 = vrot.slane %v2053, 4
        %v2056 = vor.u32 %v2052, %v2055
        %v2058 = vshrl.u32 %v1939, 16
        %v2060 = vrot.slane %v2058, 3
        %v2061 = vshll.u32 %v1939, 16
        %v2063 = vrot.slane %v2061, 4
        %v2064 = vor.u32 %v2060, %v2063
        %v2065 = vsel %vm2005, %v2056, %v2064
        %v2067 = vshrl.u32 %v1963, 16
        %v2069 = vrot.slane %v2067, 3
        %v2070 = vshll.u32 %v1963, 16
        %v2072 = vrot.slane %v2070, 4
        %v2073 = vor.u32 %v2069, %v2072
        %v2074 = vsel %vm2005, %v2073, %v2073
        %v2076 = vshrl.u32 %v1996, 16
        %v2078 = vrot.slane %v2076, 3
        %v2079 = vshll.u32 %v1996, 16
        %v2081 = vrot.slane %v2079, 4
        %v2082 = vor.u32 %v2078, %v2081
        %v2084 = vshrl.u32 %v1998, 16
        %v2086 = vrot.slane %v2084, 3
        %v2087 = vshll.u32 %v1998, 16
        %v2089 = vrot.slane %v2087, 4
        %v2090 = vor.u32 %v2086, %v2089
        %v2091 = vsel %vm2005, %v2082, %v2090
        %v2093 = vshrl.u32 %v1940, 16
        %v2095 = vrot.slane %v2093, 3
        %v2096 = vshll.u32 %v1940, 16
        %v2098 = vrot.slane %v2096, 4
        %v2099 = vor.u32 %v2095, %v2098
        %v2101 = vshrl.u32 %v1941, 16
        %v2103 = vrot.slane %v2101, 3
        %v2104 = vshll.u32 %v1941, 16
        %v2106 = vrot.slane %v2104, 4
        %v2107 = vor.u32 %v2103, %v2106
        %v2108 = vsel %vm2005, %v2099, %v2107
        %v2110 = vshrl.u32 %v1971, 16
        %v2112 = vrot.slane %v2110, 3
        %v2113 = vshll.u32 %v1971, 16
        %v2115 = vrot.slane %v2113, 4
        %v2116 = vor.u32 %v2112, %v2115
        %v2117 = vsel %vm2005, %v2116, %v2116
        %v2119 = vshrl.u32 %v1999, 16
        %v2121 = vrot.slane %v2119, 3
        %v2122 = vshll.u32 %v1999, 16
        %v2124 = vrot.slane %v2122, 4
        %v2125 = vor.u32 %v2121, %v2124
        %v2127 = vshrl.u32 %v2001, 16
        %v2129 = vrot.slane %v2127, 3
        %v2130 = vshll.u32 %v2001, 16
        %v2132 = vrot.slane %v2130, 4
        %v2133 = vor.u32 %v2129, %v2132
        %v2134 = vsel %vm2005, %v2125, %v2133
        %v2136 = vshrl.u32 %v1942, 16
        %v2138 = vrot.slane %v2136, 3
        %v2139 = vshll.u32 %v1942, 16
        %v2141 = vrot.slane %v2139, 4
        %v2142 = vor.u32 %v2138, %v2141
        %v2144 = vshrl.u32 %v1943, 16
        %v2146 = vrot.slane %v2144, 3
        %v2147 = vshll.u32 %v1943, 16
        %v2149 = vrot.slane %v2147, 4
        %v2150 = vor.u32 %v2146, %v2149
        %v2151 = vsel %vm2005, %v2142, %v2150
        %v2153 = vshrl.u32 %v1979, 16
        %v2155 = vrot.slane %v2153, 3
        %v2156 = vshll.u32 %v1979, 16
        %v2158 = vrot.slane %v2156, 4
        %v2159 = vor.u32 %v2155, %v2158
        %v2160 = vsel %vm2005, %v2159, %v2159
        %v2162 = vshrl.u32 %v2002, 16
        %v2164 = vrot.slane %v2162, 3
        %v2165 = vshll.u32 %v2002, 16
        %v2167 = vrot.slane %v2165, 4
        %v2168 = vor.u32 %v2164, %v2167
        %v2170 = vshrl.u32 %v2004, 16
        %v2172 = vrot.slane %v2170, 3
        %v2173 = vshll.u32 %v2004, 16
        %v2175 = vrot.slane %v2173, 4
        %v2176 = vor.u32 %v2172, %v2175
        %v2177 = vsel %vm2005, %v2168, %v2176
        %v2190 = vld [vmem:[#allocation4] sm:$0xf]
        %v2191 = vld [vmem:[#allocation4 + $0x4] sm:$0xf]
        %v2192 = vld [vmem:[#allocation4 + $0x8] sm:$0xf]
        %v2193 = vld [vmem:[#allocation4 + $0xc] sm:$0xf]
        %v2194 = vld [vmem:[#allocation4 + $0x10] sm:$0xf]
        %v2195 = vld [vmem:[#allocation4 + $0x14] sm:$0xf]
        %v2196 = vld [vmem:[#allocation4 + $0x18] sm:$0xf]
        %v2197 = vld [vmem:[#allocation4 + $0x1c] sm:$0xf]
        %v2198 = vld [vmem:[#allocation4 + $0x20] sm:$0xf]
        %v2199 = vld [vmem:[#allocation4 + $0x24] sm:$0xf]
        %v2200 = vld [vmem:[#allocation4 + $0x28] sm:$0xf]
        %v2201 = vld [vmem:[#allocation4 + $0x2c] sm:$0xf]
        %v2202 = vld [vmem:[#allocation4 + $0x30] sm:$0xf]
        %v2203 = vld [vmem:[#allocation4 + $0x34] sm:$0xf]
        %v2204 = vld [vmem:[#allocation4 + $0x38] sm:$0xf]
        %v2205 = vld [vmem:[#allocation4 + $0x3c] sm:$0xf]
        %v2206 = vld [vmem:[#allocation4 + $0x40] sm:$0xf]
        %v2207 = vld [vmem:[#allocation4 + $0x44] sm:$0xf]
        %v2208 = vld [vmem:[#allocation4 + $0x48] sm:$0xf]
        %v2209 = vld [vmem:[#allocation4 + $0x4c] sm:$0xf]
        %v2210 = vld [vmem:[#allocation4 + $0x50] sm:$0xf]
        %v2211 = vld [vmem:[#allocation4 + $0x54] sm:$0xf]
        %v2212 = vld [vmem:[#allocation4 + $0x58] sm:$0xf]
        %v2213 = vld [vmem:[#allocation4 + $0x5c] sm:$0xf]
        %v2214 = vld [vmem:[#allocation4 + $0x60] sm:$0xf]
        %v2215 = vld [vmem:[#allocation4 + $0x64] sm:$0xf]
        %v2216 = vld [vmem:[#allocation4 + $0x68] sm:$0xf]
        %v2217 = vld [vmem:[#allocation4 + $0x6c] sm:$0xf]
        %v2218 = vld [vmem:[#allocation4 + $0x70] sm:$0xf]
        %v2219 = vld [vmem:[#allocation4 + $0x74] sm:$0xf]
        %v2220 = vld [vmem:[#allocation4 + $0x78] sm:$0xf]
        %v2221 = vld [vmem:[#allocation4 + $0x7c] sm:$0xf]
        %v2222 = vld [vmem:[#allocation4 + $0x80] sm:$0xf]
        %v2223 = vld [vmem:[#allocation4 + $0x84] sm:$0xf]
        %v2224 = vld [vmem:[#allocation4 + $0x88] sm:$0xf]
        %v2225 = vld [vmem:[#allocation4 + $0x8c] sm:$0xf]
        %v2226 = vld [vmem:[#allocation4 + $0x90] sm:$0xf]
        %v2227 = vld [vmem:[#allocation4 + $0x94] sm:$0xf]
        %v2228 = vld [vmem:[#allocation4 + $0x98] sm:$0xf]
        %v2229 = vld [vmem:[#allocation4 + $0x9c] sm:$0xf]
        %v2230 = vld [vmem:[#allocation4 + $0xa0] sm:$0xf]
        %v2231 = vld [vmem:[#allocation4 + $0xa4] sm:$0xf]
        %v2232 = vld [vmem:[#allocation4 + $0xa8] sm:$0xf]
        %v2233 = vld [vmem:[#allocation4 + $0xac] sm:$0xf]
        %v2234 = vld [vmem:[#allocation4 + $0xb0] sm:$0xf]
        %v2235 = vld [vmem:[#allocation4 + $0xb4] sm:$0xf]
        %v2236 = vld [vmem:[#allocation4 + $0xb8] sm:$0xf]
        %v2237 = vld [vmem:[#allocation4 + $0xbc] sm:$0xf]
        %s2238 = scalar_lea.vmem [#allocation3], 16
        %v2239 = vld [vmem:[%s2238] sm:$0x8]
        %v2240 = vld [vmem:[%s2238 + $0x4] sm:$0xf]
        %v2241 = vld [vmem:[%s2238 + $0x8] sm:$0xf]
        %v2242 = vld [vmem:[%s2238 + $0x10] sm:$0x8]
        %v2243 = vld [vmem:[%s2238 + $0x14] sm:$0xf]
        %v2244 = vld [vmem:[%s2238 + $0x18] sm:$0xf]
        %v2245 = vld [vmem:[%s2238 + $0x20] sm:$0x8]
        %v2246 = vld [vmem:[%s2238 + $0x24] sm:$0xf]
        %v2247 = vld [vmem:[%s2238 + $0x28] sm:$0xf]
        %v2248 = vld [vmem:[%s2238 + $0x30] sm:$0x8]
        %v2249 = vld [vmem:[%s2238 + $0x34] sm:$0xf]
        %v2250 = vld [vmem:[%s2238 + $0x38] sm:$0xf]
        %v2251 = vld [vmem:[%s2238 + $0xc] sm:$0x1]
        %v2252 = vld [vmem:[%s2238 + $0x1c] sm:$0x1]
        %v2253 = vld [vmem:[%s2238 + $0x2c] sm:$0x1]
        %v2254 = vld [vmem:[%s2238 + $0x3c] sm:$0x1]
        %v2267 = vunpack.c.l.b16 %v2239
        %v2268 = vunpack.c.l.b16 %v2240
        %v2269 = vunpack.c.l.b16 %v2241
        %v2270 = vunpack.c.l.b16 %v2242
        %v2271 = vunpack.c.l.b16 %v2243
        %v2272 = vunpack.c.l.b16 %v2244
        %v2273 = vunpack.c.l.b16 %v2245
        %v2274 = vunpack.c.l.b16 %v2246
        %v2275 = vunpack.c.l.b16 %v2247
        %v2276 = vunpack.c.l.b16 %v2248
        %v2277 = vunpack.c.l.b16 %v2249
        %v2278 = vunpack.c.l.b16 %v2250
        %v2279 = vpack.c.b16 %v2268, %v2267
        %v2280 = vpack.c.b16 %v2269, %v2269
        %v2281 = vpack.c.b16 %v2271, %v2270
        %v2282 = vpack.c.b16 %v2272, %v2272
        %v2283 = vpack.c.b16 %v2274, %v2273
        %v2284 = vpack.c.b16 %v2275, %v2275
        %v2285 = vpack.c.b16 %v2277, %v2276
        %v2286 = vpack.c.b16 %v2278, %v2278
        %v2287 = vpack.c.b16 %v2269, %v2268
        %v2288 = vpack.c.b16 %v2272, %v2271
        %v2289 = vpack.c.b16 %v2275, %v2274
        %v2290 = vpack.c.b16 %v2278, %v2277
        %v2292 = vshrl.u32 %v2287, 16
        %v2294 = vrot.slane %v2292, 4
        %v2295 = vshll.u32 %v2287, 16
        %v2297 = vrot.slane %v2295, 5
        %v2298 = vor.u32 %v2294, %v2297
        %v2300 = vshrl.u32 %v2288, 16
        %v2302 = vrot.slane %v2300, 4
        %v2303 = vshll.u32 %v2288, 16
        %v2305 = vrot.slane %v2303, 5
        %v2306 = vor.u32 %v2302, %v2305
        %v2308 = vshrl.u32 %v2289, 16
        %v2310 = vrot.slane %v2308, 4
        %v2311 = vshll.u32 %v2289, 16
        %v2313 = vrot.slane %v2311, 5
        %v2314 = vor.u32 %v2310, %v2313
        %v2316 = vshrl.u32 %v2290, 16
        %v2318 = vrot.slane %v2316, 4
        %v2319 = vshll.u32 %v2290, 16
        %v2321 = vrot.slane %v2319, 5
        %v2322 = vor.u32 %v2318, %v2321
        %v2327 = vunpack.c.l.b16 %v2251
        %v2328 = vunpack.c.l.b16 %v2252
        %v2329 = vunpack.c.l.b16 %v2253
        %v2330 = vunpack.c.l.b16 %v2254
        %v2331 = vpack.c.b16 %v2327, %v2327
        %v2332 = vpack.c.b16 %v2328, %v2328
        %v2333 = vpack.c.b16 %v2329, %v2329
        %v2334 = vpack.c.b16 %v2330, %v2330
        %v2335 = vrot.slane %v2287, 5
        %v2336 = vrot.slane %v2331, 5
        %v2337 = vsel %vm1992, %v2335, %v2336
        %v2338 = vrot.slane %v2288, 5
        %v2339 = vrot.slane %v2332, 5
        %v2340 = vsel %vm1992, %v2338, %v2339
        %v2341 = vrot.slane %v2289, 5
        %v2342 = vrot.slane %v2333, 5
        %v2343 = vsel %vm1992, %v2341, %v2342
        %v2344 = vrot.slane %v2290, 5
        %v2345 = vrot.slane %v2334, 5
        %v2346 = vsel %vm1992, %v2344, %v2345
        %v2348 = vshrl.u32 %v2279, 16
        %v2350 = vrot.slane %v2348, 3
        %v2351 = vshll.u32 %v2279, 16
        %v2353 = vrot.slane %v2351, 4
        %v2354 = vor.u32 %v2350, %v2353
        %v2356 = vshrl.u32 %v2280, 16
        %v2358 = vrot.slane %v2356, 3
        %v2359 = vshll.u32 %v2280, 16
        %v2361 = vrot.slane %v2359, 4
        %v2362 = vor.u32 %v2358, %v2361
        %v2363 = vsel %vm2005, %v2354, %v2362
        %v2365 = vshrl.u32 %v2298, 16
        %v2367 = vrot.slane %v2365, 3
        %v2368 = vshll.u32 %v2298, 16
        %v2370 = vrot.slane %v2368, 4
        %v2371 = vor.u32 %v2367, %v2370
        %v2372 = vsel %vm2005, %v2371, %v2371
        %v2374 = vshrl.u32 %v2335, 16
        %v2376 = vrot.slane %v2374, 3
        %v2377 = vshll.u32 %v2335, 16
        %v2379 = vrot.slane %v2377, 4
        %v2380 = vor.u32 %v2376, %v2379
        %v2382 = vshrl.u32 %v2337, 16
        %v2384 = vrot.slane %v2382, 3
        %v2385 = vshll.u32 %v2337, 16
        %v2387 = vrot.slane %v2385, 4
        %v2388 = vor.u32 %v2384, %v2387
        %v2389 = vsel %vm2005, %v2380, %v2388
        %v2391 = vshrl.u32 %v2281, 16
        %v2393 = vrot.slane %v2391, 3
        %v2394 = vshll.u32 %v2281, 16
        %v2396 = vrot.slane %v2394, 4
        %v2397 = vor.u32 %v2393, %v2396
        %v2399 = vshrl.u32 %v2282, 16
        %v2401 = vrot.slane %v2399, 3
        %v2402 = vshll.u32 %v2282, 16
        %v2404 = vrot.slane %v2402, 4
        %v2405 = vor.u32 %v2401, %v2404
        %v2406 = vsel %vm2005, %v2397, %v2405
        %v2408 = vshrl.u32 %v2306, 16
        %v2410 = vrot.slane %v2408, 3
        %v2411 = vshll.u32 %v2306, 16
        %v2413 = vrot.slane %v2411, 4
        %v2414 = vor.u32 %v2410, %v2413
        %v2415 = vsel %vm2005, %v2414, %v2414
        %v2417 = vshrl.u32 %v2338, 16
        %v2419 = vrot.slane %v2417, 3
        %v2420 = vshll.u32 %v2338, 16
        %v2422 = vrot.slane %v2420, 4
        %v2423 = vor.u32 %v2419, %v2422
        %v2425 = vshrl.u32 %v2340, 16
        %v2427 = vrot.slane %v2425, 3
        %v2428 = vshll.u32 %v2340, 16
        %v2430 = vrot.slane %v2428, 4
        %v2431 = vor.u32 %v2427, %v2430
        %v2432 = vsel %vm2005, %v2423, %v2431
        %v2434 = vshrl.u32 %v2283, 16
        %v2436 = vrot.slane %v2434, 3
        %v2437 = vshll.u32 %v2283, 16
        %v2439 = vrot.slane %v2437, 4
        %v2440 = vor.u32 %v2436, %v2439
        %v2442 = vshrl.u32 %v2284, 16
        %v2444 = vrot.slane %v2442, 3
        %v2445 = vshll.u32 %v2284, 16
        %v2447 = vrot.slane %v2445, 4
        %v2448 = vor.u32 %v2444, %v2447
        %v2449 = vsel %vm2005, %v2440, %v2448
        %v2451 = vshrl.u32 %v2314, 16
        %v2453 = vrot.slane %v2451, 3
        %v2454 = vshll.u32 %v2314, 16
        %v2456 = vrot.slane %v2454, 4
        %v2457 = vor.u32 %v2453, %v2456
        %v2458 = vsel %vm2005, %v2457, %v2457
        %v2460 = vshrl.u32 %v2341, 16
        %v2462 = vrot.slane %v2460, 3
        %v2463 = vshll.u32 %v2341, 16
        %v2465 = vrot.slane %v2463, 4
        %v2466 = vor.u32 %v2462, %v2465
        %v2468 = vshrl.u32 %v2343, 16
        %v2470 = vrot.slane %v2468, 3
        %v2471 = vshll.u32 %v2343, 16
        %v2473 = vrot.slane %v2471, 4
        %v2474 = vor.u32 %v2470, %v2473
        %v2475 = vsel %vm2005, %v2466, %v2474
        %v2477 = vshrl.u32 %v2285, 16
        %v2479 = vrot.slane %v2477, 3
        %v2480 = vshll.u32 %v2285, 16
        %v2482 = vrot.slane %v2480, 4
        %v2483 = vor.u32 %v2479, %v2482
        %v2485 = vshrl.u32 %v2286, 16
        %v2487 = vrot.slane %v2485, 3
        %v2488 = vshll.u32 %v2286, 16
        %v2490 = vrot.slane %v2488, 4
        %v2491 = vor.u32 %v2487, %v2490
        %v2492 = vsel %vm2005, %v2483, %v2491
        %v2494 = vshrl.u32 %v2322, 16
        %v2496 = vrot.slane %v2494, 3
        %v2497 = vshll.u32 %v2322, 16
        %v2499 = vrot.slane %v2497, 4
        %v2500 = vor.u32 %v2496, %v2499
        %v2501 = vsel %vm2005, %v2500, %v2500
        %v2503 = vshrl.u32 %v2344, 16
        %v2505 = vrot.slane %v2503, 3
        %v2506 = vshll.u32 %v2344, 16
        %v2508 = vrot.slane %v2506, 4
        %v2509 = vor.u32 %v2505, %v2508
        %v2511 = vshrl.u32 %v2346, 16
        %v2513 = vrot.slane %v2511, 3
        %v2514 = vshll.u32 %v2346, 16
        %v2516 = vrot.slane %v2514, 4
        %v2517 = vor.u32 %v2513, %v2516
        %v2518 = vsel %vm2005, %v2509, %v2517
        %s2531 = scalar_lea.vmem [#allocation4], 192
        %v2532 = vld [vmem:[%s2531] sm:$0xf]
        %v2533 = vld [vmem:[%s2531 + $0x4] sm:$0xf]
        %v2534 = vld [vmem:[%s2531 + $0x8] sm:$0xf]
        %v2535 = vld [vmem:[%s2531 + $0xc] sm:$0xf]
        %v2536 = vld [vmem:[%s2531 + $0x10] sm:$0xf]
        %v2537 = vld [vmem:[%s2531 + $0x14] sm:$0xf]
        %v2538 = vld [vmem:[%s2531 + $0x18] sm:$0xf]
        %v2539 = vld [vmem:[%s2531 + $0x1c] sm:$0xf]
        %v2540 = vld [vmem:[%s2531 + $0x20] sm:$0xf]
        %v2541 = vld [vmem:[%s2531 + $0x24] sm:$0xf]
        %v2542 = vld [vmem:[%s2531 + $0x28] sm:$0xf]
        %v2543 = vld [vmem:[%s2531 + $0x2c] sm:$0xf]
        %v2544 = vld [vmem:[%s2531 + $0x30] sm:$0xf]
        %v2545 = vld [vmem:[%s2531 + $0x34] sm:$0xf]
        %v2546 = vld [vmem:[%s2531 + $0x38] sm:$0xf]
        %v2547 = vld [vmem:[%s2531 + $0x3c] sm:$0xf]
        %v2548 = vld [vmem:[%s2531 + $0x40] sm:$0xf]
        %v2549 = vld [vmem:[%s2531 + $0x44] sm:$0xf]
        %v2550 = vld [vmem:[%s2531 + $0x48] sm:$0xf]
        %v2551 = vld [vmem:[%s2531 + $0x4c] sm:$0xf]
        %v2552 = vld [vmem:[%s2531 + $0x50] sm:$0xf]
        %v2553 = vld [vmem:[%s2531 + $0x54] sm:$0xf]
        %v2554 = vld [vmem:[%s2531 + $0x58] sm:$0xf]
        %v2555 = vld [vmem:[%s2531 + $0x5c] sm:$0xf]
        %v2556 = vld [vmem:[%s2531 + $0x60] sm:$0xf]
        %v2557 = vld [vmem:[%s2531 + $0x64] sm:$0xf]
        %v2558 = vld [vmem:[%s2531 + $0x68] sm:$0xf]
        %v2559 = vld [vmem:[%s2531 + $0x6c] sm:$0xf]
        %v2560 = vld [vmem:[%s2531 + $0x70] sm:$0xf]
        %v2561 = vld [vmem:[%s2531 + $0x74] sm:$0xf]
        %v2562 = vld [vmem:[%s2531 + $0x78] sm:$0xf]
        %v2563 = vld [vmem:[%s2531 + $0x7c] sm:$0xf]
        %v2564 = vld [vmem:[%s2531 + $0x80] sm:$0xf]
        %v2565 = vld [vmem:[%s2531 + $0x84] sm:$0xf]
        %v2566 = vld [vmem:[%s2531 + $0x88] sm:$0xf]
        %v2567 = vld [vmem:[%s2531 + $0x8c] sm:$0xf]
        %v2568 = vld [vmem:[%s2531 + $0x90] sm:$0xf]
        %v2569 = vld [vmem:[%s2531 + $0x94] sm:$0xf]
        %v2570 = vld [vmem:[%s2531 + $0x98] sm:$0xf]
        %v2571 = vld [vmem:[%s2531 + $0x9c] sm:$0xf]
        %v2572 = vld [vmem:[%s2531 + $0xa0] sm:$0xf]
        %v2573 = vld [vmem:[%s2531 + $0xa4] sm:$0xf]
        %v2574 = vld [vmem:[%s2531 + $0xa8] sm:$0xf]
        %v2575 = vld [vmem:[%s2531 + $0xac] sm:$0xf]
        %v2576 = vld [vmem:[%s2531 + $0xb0] sm:$0xf]
        %v2577 = vld [vmem:[%s2531 + $0xb4] sm:$0xf]
        %v2578 = vld [vmem:[%s2531 + $0xb8] sm:$0xf]
        %v2579 = vld [vmem:[%s2531 + $0xbc] sm:$0xf]
        %v2628 = vunpack.c.l.b16 %v2532
        %v2629 = vunpack.c.l.b16 %v2533
        %v2630 = vunpack.c.l.b16 %v2534
        %v2631 = vunpack.c.l.b16 %v2535
        %v2632 = vunpack.c.l.b16 %v2536
        %v2633 = vunpack.c.l.b16 %v2537
        %v2634 = vunpack.c.l.b16 %v2538
        %v2635 = vunpack.c.l.b16 %v2539
        %v2636 = vunpack.c.l.b16 %v2540
        %v2637 = vunpack.c.l.b16 %v2541
        %v2638 = vunpack.c.l.b16 %v2542
        %v2639 = vunpack.c.l.b16 %v2543
        %v2640 = vunpack.c.l.b16 %v2544
        %v2641 = vunpack.c.l.b16 %v2545
        %v2642 = vunpack.c.l.b16 %v2546
        %v2643 = vunpack.c.l.b16 %v2547
        %v2644 = vunpack.c.l.b16 %v2548
        %v2645 = vunpack.c.l.b16 %v2549
        %v2646 = vunpack.c.l.b16 %v2550
        %v2647 = vunpack.c.l.b16 %v2551
        %v2648 = vunpack.c.l.b16 %v2552
        %v2649 = vunpack.c.l.b16 %v2553
        %v2650 = vunpack.c.l.b16 %v2554
        %v2651 = vunpack.c.l.b16 %v2555
        %v2652 = vunpack.c.l.b16 %v2556
        %v2653 = vunpack.c.l.b16 %v2557
        %v2654 = vunpack.c.l.b16 %v2558
        %v2655 = vunpack.c.l.b16 %v2559
        %v2656 = vunpack.c.l.b16 %v2560
        %v2657 = vunpack.c.l.b16 %v2561
        %v2658 = vunpack.c.l.b16 %v2562
        %v2659 = vunpack.c.l.b16 %v2563
        %v2660 = vunpack.c.l.b16 %v2564
        %v2661 = vunpack.c.l.b16 %v2565
        %v2662 = vunpack.c.l.b16 %v2566
        %v2663 = vunpack.c.l.b16 %v2567
        %v2664 = vunpack.c.l.b16 %v2568
        %v2665 = vunpack.c.l.b16 %v2569
        %v2666 = vunpack.c.l.b16 %v2570
        %v2667 = vunpack.c.l.b16 %v2571
        %v2668 = vunpack.c.l.b16 %v2572
        %v2669 = vunpack.c.l.b16 %v2573
        %v2670 = vunpack.c.l.b16 %v2574
        %v2671 = vunpack.c.l.b16 %v2575
        %v2672 = vunpack.c.l.b16 %v2576
        %v2673 = vunpack.c.l.b16 %v2577
        %v2674 = vunpack.c.l.b16 %v2578
        %v2675 = vunpack.c.l.b16 %v2579
        %v2676 = vpack.c.b16 %v2629, %v2628
        %v2677 = vpack.c.b16 %v2631, %v2630
        %v2678 = vpack.c.b16 %v2633, %v2632
        %v2679 = vpack.c.b16 %v2635, %v2634
        %v2680 = vpack.c.b16 %v2637, %v2636
        %v2681 = vpack.c.b16 %v2639, %v2638
        %v2682 = vpack.c.b16 %v2641, %v2640
        %v2683 = vpack.c.b16 %v2643, %v2642
        %v2684 = vpack.c.b16 %v2645, %v2644
        %v2685 = vpack.c.b16 %v2647, %v2646
        %v2686 = vpack.c.b16 %v2649, %v2648
        %v2687 = vpack.c.b16 %v2651, %v2650
        %v2688 = vpack.c.b16 %v2653, %v2652
        %v2689 = vpack.c.b16 %v2655, %v2654
        %v2690 = vpack.c.b16 %v2657, %v2656
        %v2691 = vpack.c.b16 %v2659, %v2658
        %v2692 = vpack.c.b16 %v2661, %v2660
        %v2693 = vpack.c.b16 %v2663, %v2662
        %v2694 = vpack.c.b16 %v2665, %v2664
        %v2695 = vpack.c.b16 %v2667, %v2666
        %v2696 = vpack.c.b16 %v2669, %v2668
        %v2697 = vpack.c.b16 %v2671, %v2670
        %v2698 = vpack.c.b16 %v2673, %v2672
        %v2699 = vpack.c.b16 %v2675, %v2674
        %2724 = vmatpush.bf16.msra.mxu0 %v2683
        %2725 = vmatpush.bf16.msra.mxu0 %v2682
        %2726 = vmatpush.bf16.msra.mxu0 %v2681
        %2727 = vmatpush.bf16.msra.mxu0 %v2680
        %2728 = vmatpush.bf16.msra.mxu0 %v2679
        %2729 = vmatpush.bf16.msra.mxu0 %v2678
        %2730 = vmatpush.bf16.msra.mxu0 %v2677
        %2731 = vmatpush.bf16.msra.mxu0 %v2676
        %2732 = vmatmul.bf16.gmra.mxu0 %v2363
        %v2733 = vpop.f32.mrf.mxu0
        %v2734 = vadd.f32 0.0, %v2733
        %v2735 = vpop.f32.mrf.mxu0
        %v2736 = vadd.f32 0.0, %v2735
        %2737 = vmatmul.bf16.gmra.mxu0 %v2406
        %v2738 = vpop.f32.mrf.mxu0
        %v2739 = vadd.f32 0.0, %v2738
        %v2740 = vpop.f32.mrf.mxu0
        %v2741 = vadd.f32 0.0, %v2740
        %2742 = vmatmul.bf16.gmra.mxu0 %v2449
        %v2743 = vpop.f32.mrf.mxu0
        %v2744 = vadd.f32 0.0, %v2743
        %v2745 = vpop.f32.mrf.mxu0
        %v2746 = vadd.f32 0.0, %v2745
        %2747 = vmatmul.bf16.gmra.mxu0 %v2492
        %v2748 = vpop.f32.mrf.mxu0
        %v2749 = vadd.f32 0.0, %v2748
        %v2750 = vpop.f32.mrf.mxu0
        %v2751 = vadd.f32 0.0, %v2750
        %2752 = vdwg.mxu0
        %2753 = vmatpush.bf16.msra.mxu0 %v2691
        %2754 = vmatpush.bf16.msra.mxu0 %v2690
        %2755 = vmatpush.bf16.msra.mxu0 %v2689
        %2756 = vmatpush.bf16.msra.mxu0 %v2688
        %2757 = vmatpush.bf16.msra.mxu0 %v2687
        %2758 = vmatpush.bf16.msra.mxu0 %v2686
        %2759 = vmatpush.bf16.msra.mxu0 %v2685
        %2760 = vmatpush.bf16.msra.mxu0 %v2684
        %2761 = vmatmul.bf16.gmra.mxu0 %v2372
        %v2762 = vpop.f32.mrf.mxu0
        %v2763 = vadd.f32 %v2734, %v2762
        %v2764 = vpop.f32.mrf.mxu0
        %v2765 = vadd.f32 %v2736, %v2764
        %2766 = vmatmul.bf16.gmra.mxu0 %v2415
        %v2767 = vpop.f32.mrf.mxu0
        %v2768 = vadd.f32 %v2739, %v2767
        %v2769 = vpop.f32.mrf.mxu0
        %v2770 = vadd.f32 %v2741, %v2769
        %2771 = vmatmul.bf16.gmra.mxu0 %v2458
        %v2772 = vpop.f32.mrf.mxu0
        %v2773 = vadd.f32 %v2744, %v2772
        %v2774 = vpop.f32.mrf.mxu0
        %v2775 = vadd.f32 %v2746, %v2774
        %2776 = vmatmul.bf16.gmra.mxu0 %v2501
        %v2777 = vpop.f32.mrf.mxu0
        %v2778 = vadd.f32 %v2749, %v2777
        %v2779 = vpop.f32.mrf.mxu0
        %v2780 = vadd.f32 %v2751, %v2779
        %2781 = vdwg.mxu0
        %2782 = vmatpush.bf16.msra.mxu0 %v2699
        %2783 = vmatpush.bf16.msra.mxu0 %v2698
        %2784 = vmatpush.bf16.msra.mxu0 %v2697
        %2785 = vmatpush.bf16.msra.mxu0 %v2696
        %2786 = vmatpush.bf16.msra.mxu0 %v2695
        %2787 = vmatpush.bf16.msra.mxu0 %v2694
        %2788 = vmatpush.bf16.msra.mxu0 %v2693
        %2789 = vmatpush.bf16.msra.mxu0 %v2692
        %2790 = vmatmul.bf16.gmra.mxu0 %v2389
        %v2791 = vpop.f32.mrf.mxu0
        %v2792 = vadd.f32 %v2763, %v2791
        %v2793 = vpop.f32.mrf.mxu0
        %v2794 = vadd.f32 %v2765, %v2793
        %2795 = vmatmul.bf16.gmra.mxu0 %v2432
        %v2796 = vpop.f32.mrf.mxu0
        %v2797 = vadd.f32 %v2768, %v2796
        %v2798 = vpop.f32.mrf.mxu0
        %v2799 = vadd.f32 %v2770, %v2798
        %2800 = vmatmul.bf16.gmra.mxu0 %v2475
        %v2801 = vpop.f32.mrf.mxu0
        %v2802 = vadd.f32 %v2773, %v2801
        %v2803 = vpop.f32.mrf.mxu0
        %v2804 = vadd.f32 %v2775, %v2803
        %2805 = vmatmul.bf16.gmra.mxu0 %v2518
        %v2806 = vpop.f32.mrf.mxu0
        %v2807 = vadd.f32 %v2778, %v2806
        %v2808 = vpop.f32.mrf.mxu0
        %v2809 = vadd.f32 %v2780, %v2808
        %2810 = vdwg.mxu0
        %v2859 = vunpack.c.l.b16 %v2190
        %v2860 = vunpack.c.l.b16 %v2191
        %v2861 = vunpack.c.l.b16 %v2192
        %v2862 = vunpack.c.l.b16 %v2193
        %v2863 = vunpack.c.l.b16 %v2194
        %v2864 = vunpack.c.l.b16 %v2195
        %v2865 = vunpack.c.l.b16 %v2196
        %v2866 = vunpack.c.l.b16 %v2197
        %v2867 = vunpack.c.l.b16 %v2198
        %v2868 = vunpack.c.l.b16 %v2199
        %v2869 = vunpack.c.l.b16 %v2200
        %v2870 = vunpack.c.l.b16 %v2201
        %v2871 = vunpack.c.l.b16 %v2202
        %v2872 = vunpack.c.l.b16 %v2203
        %v2873 = vunpack.c.l.b16 %v2204
        %v2874 = vunpack.c.l.b16 %v2205
        %v2875 = vunpack.c.l.b16 %v2206
        %v2876 = vunpack.c.l.b16 %v2207
        %v2877 = vunpack.c.l.b16 %v2208
        %v2878 = vunpack.c.l.b16 %v2209
        %v2879 = vunpack.c.l.b16 %v2210
        %v2880 = vunpack.c.l.b16 %v2211
        %v2881 = vunpack.c.l.b16 %v2212
        %v2882 = vunpack.c.l.b16 %v2213
        %v2883 = vunpack.c.l.b16 %v2214
        %v2884 = vunpack.c.l.b16 %v2215
        %v2885 = vunpack.c.l.b16 %v2216
        %v2886 = vunpack.c.l.b16 %v2217
        %v2887 = vunpack.c.l.b16 %v2218
        %v2888 = vunpack.c.l.b16 %v2219
        %v2889 = vunpack.c.l.b16 %v2220
        %v2890 = vunpack.c.l.b16 %v2221
        %v2891 = vunpack.c.l.b16 %v2222
        %v2892 = vunpack.c.l.b16 %v2223
        %v2893 = vunpack.c.l.b16 %v2224
        %v2894 = vunpack.c.l.b16 %v2225
        %v2895 = vunpack.c.l.b16 %v2226
        %v2896 = vunpack.c.l.b16 %v2227
        %v2897 = vunpack.c.l.b16 %v2228
        %v2898 = vunpack.c.l.b16 %v2229
        %v2899 = vunpack.c.l.b16 %v2230
        %v2900 = vunpack.c.l.b16 %v2231
        %v2901 = vunpack.c.l.b16 %v2232
        %v2902 = vunpack.c.l.b16 %v2233
        %v2903 = vunpack.c.l.b16 %v2234
        %v2904 = vunpack.c.l.b16 %v2235
        %v2905 = vunpack.c.l.b16 %v2236
        %v2906 = vunpack.c.l.b16 %v2237
        %v2907 = vpack.c.b16 %v2860, %v2859
        %v2908 = vpack.c.b16 %v2862, %v2861
        %v2909 = vpack.c.b16 %v2864, %v2863
        %v2910 = vpack.c.b16 %v2866, %v2865
        %v2911 = vpack.c.b16 %v2868, %v2867
        %v2912 = vpack.c.b16 %v2870, %v2869
        %v2913 = vpack.c.b16 %v2872, %v2871
        %v2914 = vpack.c.b16 %v2874, %v2873
        %v2915 = vpack.c.b16 %v2876, %v2875
        %v2916 = vpack.c.b16 %v2878, %v2877
        %v2917 = vpack.c.b16 %v2880, %v2879
        %v2918 = vpack.c.b16 %v2882, %v2881
        %v2919 = vpack.c.b16 %v2884, %v2883
        %v2920 = vpack.c.b16 %v2886, %v2885
        %v2921 = vpack.c.b16 %v2888, %v2887
        %v2922 = vpack.c.b16 %v2890, %v2889
        %v2923 = vpack.c.b16 %v2892, %v2891
        %v2924 = vpack.c.b16 %v2894, %v2893
        %v2925 = vpack.c.b16 %v2896, %v2895
        %v2926 = vpack.c.b16 %v2898, %v2897
        %v2927 = vpack.c.b16 %v2900, %v2899
        %v2928 = vpack.c.b16 %v2902, %v2901
        %v2929 = vpack.c.b16 %v2904, %v2903
        %v2930 = vpack.c.b16 %v2906, %v2905
        %2955 = vmatpush.bf16.msra.mxu0 %v2914
        %2956 = vmatpush.bf16.msra.mxu0 %v2913
        %2957 = vmatpush.bf16.msra.mxu0 %v2912
        %2958 = vmatpush.bf16.msra.mxu0 %v2911
        %2959 = vmatpush.bf16.msra.mxu0 %v2910
        %2960 = vmatpush.bf16.msra.mxu0 %v2909
        %2961 = vmatpush.bf16.msra.mxu0 %v2908
        %2962 = vmatpush.bf16.msra.mxu0 %v2907
        %2963 = vmatmul.bf16.gmra.mxu0 %v2022
        %v2964 = vpop.f32.mrf.mxu0
        %v2965 = vadd.f32 %v2792, %v2964
        %v2966 = vpop.f32.mrf.mxu0
        %v2967 = vadd.f32 %v2794, %v2966
        %2968 = vmatmul.bf16.gmra.mxu0 %v2065
        %v2969 = vpop.f32.mrf.mxu0
        %v2970 = vadd.f32 %v2797, %v2969
        %v2971 = vpop.f32.mrf.mxu0
        %v2972 = vadd.f32 %v2799, %v2971
        %2973 = vmatmul.bf16.gmra.mxu0 %v2108
        %v2974 = vpop.f32.mrf.mxu0
        %v2975 = vadd.f32 %v2802, %v2974
        %v2976 = vpop.f32.mrf.mxu0
        %v2977 = vadd.f32 %v2804, %v2976
        %2978 = vmatmul.bf16.gmra.mxu0 %v2151
        %v2979 = vpop.f32.mrf.mxu0
        %v2980 = vadd.f32 %v2807, %v2979
        %v2981 = vpop.f32.mrf.mxu0
        %v2982 = vadd.f32 %v2809, %v2981
        %2983 = vdwg.mxu0
        %2984 = vmatpush.bf16.msra.mxu0 %v2922
        %2985 = vmatpush.bf16.msra.mxu0 %v2921
        %2986 = vmatpush.bf16.msra.mxu0 %v2920
        %2987 = vmatpush.bf16.msra.mxu0 %v2919
        %2988 = vmatpush.bf16.msra.mxu0 %v2918
        %2989 = vmatpush.bf16.msra.mxu0 %v2917
        %2990 = vmatpush.bf16.msra.mxu0 %v2916
        %2991 = vmatpush.bf16.msra.mxu0 %v2915
        %2992 = vmatmul.bf16.gmra.mxu0 %v2031
        %v2993 = vpop.f32.mrf.mxu0
        %v2994 = vadd.f32 %v2965, %v2993
        %v2995 = vpop.f32.mrf.mxu0
        %v2996 = vadd.f32 %v2967, %v2995
        %2997 = vmatmul.bf16.gmra.mxu0 %v2074
        %v2998 = vpop.f32.mrf.mxu0
        %v2999 = vadd.f32 %v2970, %v2998
        %v3000 = vpop.f32.mrf.mxu0
        %v3001 = vadd.f32 %v2972, %v3000
        %3002 = vmatmul.bf16.gmra.mxu0 %v2117
        %v3003 = vpop.f32.mrf.mxu0
        %v3004 = vadd.f32 %v2975, %v3003
        %v3005 = vpop.f32.mrf.mxu0
        %v3006 = vadd.f32 %v2977, %v3005
        %3007 = vmatmul.bf16.gmra.mxu0 %v2160
        %v3008 = vpop.f32.mrf.mxu0
        %v3009 = vadd.f32 %v2980, %v3008
        %v3010 = vpop.f32.mrf.mxu0
        %v3011 = vadd.f32 %v2982, %v3010
        %3012 = vdwg.mxu0
        %3013 = vmatpush.bf16.msra.mxu0 %v2930
        %3014 = vmatpush.bf16.msra.mxu0 %v2929
        %3015 = vmatpush.bf16.msra.mxu0 %v2928
        %3016 = vmatpush.bf16.msra.mxu0 %v2927
        %3017 = vmatpush.bf16.msra.mxu0 %v2926
        %3018 = vmatpush.bf16.msra.mxu0 %v2925
        %3019 = vmatpush.bf16.msra.mxu0 %v2924
        %3020 = vmatpush.bf16.msra.mxu0 %v2923
        %3021 = vmatmul.bf16.gmra.mxu0 %v2048
        %v3022 = vpop.f32.mrf.mxu0
        %v3023 = vadd.f32 %v2994, %v3022
        %v3024 = vpop.f32.mrf.mxu0
        %v3025 = vadd.f32 %v2996, %v3024
        %3026 = vmatmul.bf16.gmra.mxu0 %v2091
        %v3027 = vpop.f32.mrf.mxu0
        %v3028 = vadd.f32 %v2999, %v3027
        %v3029 = vpop.f32.mrf.mxu0
        %v3030 = vadd.f32 %v3001, %v3029
        %3031 = vmatmul.bf16.gmra.mxu0 %v2134
        %v3032 = vpop.f32.mrf.mxu0
        %v3033 = vadd.f32 %v3004, %v3032
        %v3034 = vpop.f32.mrf.mxu0
        %v3035 = vadd.f32 %v3006, %v3034
        %3036 = vmatmul.bf16.gmra.mxu0 %v2177
        %v3037 = vpop.f32.mrf.mxu0
        %v3038 = vadd.f32 %v3009, %v3037
        %v3039 = vpop.f32.mrf.mxu0
        %v3040 = vadd.f32 %v3011, %v3039
        %3041 = vdwg.mxu0
        %s3042 = scalar_lea.vmem [#allocation3], 32
        %v3043 = vld [vmem:[%s3042] sm:$0x8]
        %v3044 = vld [vmem:[%s3042 + $0x4] sm:$0xf]
        %v3045 = vld [vmem:[%s3042 + $0x8] sm:$0xf]
        %v3046 = vld [vmem:[%s3042 + $0x10] sm:$0x8]
        %v3047 = vld [vmem:[%s3042 + $0x14] sm:$0xf]
        %v3048 = vld [vmem:[%s3042 + $0x18] sm:$0xf]
        %v3049 = vld [vmem:[%s3042 + $0x20] sm:$0x8]
        %v3050 = vld [vmem:[%s3042 + $0x24] sm:$0xf]
        %v3051 = vld [vmem:[%s3042 + $0x28] sm:$0xf]
        %v3052 = vld [vmem:[%s3042 + $0x30] sm:$0x8]
        %v3053 = vld [vmem:[%s3042 + $0x34] sm:$0xf]
        %v3054 = vld [vmem:[%s3042 + $0x38] sm:$0xf]
        %v3055 = vld [vmem:[%s3042 + $0xc] sm:$0x1]
        %v3056 = vld [vmem:[%s3042 + $0x1c] sm:$0x1]
        %v3057 = vld [vmem:[%s3042 + $0x2c] sm:$0x1]
        %v3058 = vld [vmem:[%s3042 + $0x3c] sm:$0x1]
        %v3071 = vunpack.c.l.b16 %v3043
        %v3072 = vunpack.c.l.b16 %v3044
        %v3073 = vunpack.c.l.b16 %v3045
        %v3074 = vunpack.c.l.b16 %v3046
        %v3075 = vunpack.c.l.b16 %v3047
        %v3076 = vunpack.c.l.b16 %v3048
        %v3077 = vunpack.c.l.b16 %v3049
        %v3078 = vunpack.c.l.b16 %v3050
        %v3079 = vunpack.c.l.b16 %v3051
        %v3080 = vunpack.c.l.b16 %v3052
        %v3081 = vunpack.c.l.b16 %v3053
        %v3082 = vunpack.c.l.b16 %v3054
        %v3083 = vpack.c.b16 %v3072, %v3071
        %v3084 = vpack.c.b16 %v3073, %v3073
        %v3085 = vpack.c.b16 %v3075, %v3074
        %v3086 = vpack.c.b16 %v3076, %v3076
        %v3087 = vpack.c.b16 %v3078, %v3077
        %v3088 = vpack.c.b16 %v3079, %v3079
        %v3089 = vpack.c.b16 %v3081, %v3080
        %v3090 = vpack.c.b16 %v3082, %v3082
        %v3091 = vpack.c.b16 %v3073, %v3072
        %v3092 = vpack.c.b16 %v3076, %v3075
        %v3093 = vpack.c.b16 %v3079, %v3078
        %v3094 = vpack.c.b16 %v3082, %v3081
        %v3096 = vshrl.u32 %v3091, 16
        %v3098 = vrot.slane %v3096, 4
        %v3099 = vshll.u32 %v3091, 16
        %v3101 = vrot.slane %v3099, 5
        %v3102 = vor.u32 %v3098, %v3101
        %v3104 = vshrl.u32 %v3092, 16
        %v3106 = vrot.slane %v3104, 4
        %v3107 = vshll.u32 %v3092, 16
        %v3109 = vrot.slane %v3107, 5
        %v3110 = vor.u32 %v3106, %v3109
        %v3112 = vshrl.u32 %v3093, 16
        %v3114 = vrot.slane %v3112, 4
        %v3115 = vshll.u32 %v3093, 16
        %v3117 = vrot.slane %v3115, 5
        %v3118 = vor.u32 %v3114, %v3117
        %v3120 = vshrl.u32 %v3094, 16
        %v3122 = vrot.slane %v3120, 4
        %v3123 = vshll.u32 %v3094, 16
        %v3125 = vrot.slane %v3123, 5
        %v3126 = vor.u32 %v3122, %v3125
        %v3131 = vunpack.c.l.b16 %v3055
        %v3132 = vunpack.c.l.b16 %v3056
        %v3133 = vunpack.c.l.b16 %v3057
        %v3134 = vunpack.c.l.b16 %v3058
        %v3135 = vpack.c.b16 %v3131, %v3131
        %v3136 = vpack.c.b16 %v3132, %v3132
        %v3137 = vpack.c.b16 %v3133, %v3133
        %v3138 = vpack.c.b16 %v3134, %v3134
        %v3139 = vrot.slane %v3091, 5
        %v3140 = vrot.slane %v3135, 5
        %v3141 = vsel %vm1992, %v3139, %v3140
        %v3142 = vrot.slane %v3092, 5
        %v3143 = vrot.slane %v3136, 5
        %v3144 = vsel %vm1992, %v3142, %v3143
        %v3145 = vrot.slane %v3093, 5
        %v3146 = vrot.slane %v3137, 5
        %v3147 = vsel %vm1992, %v3145, %v3146
        %v3148 = vrot.slane %v3094, 5
        %v3149 = vrot.slane %v3138, 5
        %v3150 = vsel %vm1992, %v3148, %v3149
        %v3152 = vshrl.u32 %v3083, 16
        %v3154 = vrot.slane %v3152, 3
        %v3155 = vshll.u32 %v3083, 16
        %v3157 = vrot.slane %v3155, 4
        %v3158 = vor.u32 %v3154, %v3157
        %v3160 = vshrl.u32 %v3084, 16
        %v3162 = vrot.slane %v3160, 3
        %v3163 = vshll.u32 %v3084, 16
        %v3165 = vrot.slane %v3163, 4
        %v3166 = vor.u32 %v3162, %v3165
        %v3167 = vsel %vm2005, %v3158, %v3166
        %v3169 = vshrl.u32 %v3102, 16
        %v3171 = vrot.slane %v3169, 3
        %v3172 = vshll.u32 %v3102, 16
        %v3174 = vrot.slane %v3172, 4
        %v3175 = vor.u32 %v3171, %v3174
        %v3176 = vsel %vm2005, %v3175, %v3175
        %v3178 = vshrl.u32 %v3139, 16
        %v3180 = vrot.slane %v3178, 3
        %v3181 = vshll.u32 %v3139, 16
        %v3183 = vrot.slane %v3181, 4
        %v3184 = vor.u32 %v3180, %v3183
        %v3186 = vshrl.u32 %v3141, 16
        %v3188 = vrot.slane %v3186, 3
        %v3189 = vshll.u32 %v3141, 16
        %v3191 = vrot.slane %v3189, 4
        %v3192 = vor.u32 %v3188, %v3191
        %v3193 = vsel %vm2005, %v3184, %v3192
        %v3195 = vshrl.u32 %v3085, 16
        %v3197 = vrot.slane %v3195, 3
        %v3198 = vshll.u32 %v3085, 16
        %v3200 = vrot.slane %v3198, 4
        %v3201 = vor.u32 %v3197, %v3200
        %v3203 = vshrl.u32 %v3086, 16
        %v3205 = vrot.slane %v3203, 3
        %v3206 = vshll.u32 %v3086, 16
        %v3208 = vrot.slane %v3206, 4
        %v3209 = vor.u32 %v3205, %v3208
        %v3210 = vsel %vm2005, %v3201, %v3209
        %v3212 = vshrl.u32 %v3110, 16
        %v3214 = vrot.slane %v3212, 3
        %v3215 = vshll.u32 %v3110, 16
        %v3217 = vrot.slane %v3215, 4
        %v3218 = vor.u32 %v3214, %v3217
        %v3219 = vsel %vm2005, %v3218, %v3218
        %v3221 = vshrl.u32 %v3142, 16
        %v3223 = vrot.slane %v3221, 3
        %v3224 = vshll.u32 %v3142, 16
        %v3226 = vrot.slane %v3224, 4
        %v3227 = vor.u32 %v3223, %v3226
        %v3229 = vshrl.u32 %v3144, 16
        %v3231 = vrot.slane %v3229, 3
        %v3232 = vshll.u32 %v3144, 16
        %v3234 = vrot.slane %v3232, 4
        %v3235 = vor.u32 %v3231, %v3234
        %v3236 = vsel %vm2005, %v3227, %v3235
        %v3238 = vshrl.u32 %v3087, 16
        %v3240 = vrot.slane %v3238, 3
        %v3241 = vshll.u32 %v3087, 16
        %v3243 = vrot.slane %v3241, 4
        %v3244 = vor.u32 %v3240, %v3243
        %v3246 = vshrl.u32 %v3088, 16
        %v3248 = vrot.slane %v3246, 3
        %v3249 = vshll.u32 %v3088, 16
        %v3251 = vrot.slane %v3249, 4
        %v3252 = vor.u32 %v3248, %v3251
        %v3253 = vsel %vm2005, %v3244, %v3252
        %v3255 = vshrl.u32 %v3118, 16
        %v3257 = vrot.slane %v3255, 3
        %v3258 = vshll.u32 %v3118, 16
        %v3260 = vrot.slane %v3258, 4
        %v3261 = vor.u32 %v3257, %v3260
        %v3262 = vsel %vm2005, %v3261, %v3261
        %v3264 = vshrl.u32 %v3145, 16
        %v3266 = vrot.slane %v3264, 3
        %v3267 = vshll.u32 %v3145, 16
        %v3269 = vrot.slane %v3267, 4
        %v3270 = vor.u32 %v3266, %v3269
        %v3272 = vshrl.u32 %v3147, 16
        %v3274 = vrot.slane %v3272, 3
        %v3275 = vshll.u32 %v3147, 16
        %v3277 = vrot.slane %v3275, 4
        %v3278 = vor.u32 %v3274, %v3277
        %v3279 = vsel %vm2005, %v3270, %v3278
        %v3281 = vshrl.u32 %v3089, 16
        %v3283 = vrot.slane %v3281, 3
        %v3284 = vshll.u32 %v3089, 16
        %v3286 = vrot.slane %v3284, 4
        %v3287 = vor.u32 %v3283, %v3286
        %v3289 = vshrl.u32 %v3090, 16
        %v3291 = vrot.slane %v3289, 3
        %v3292 = vshll.u32 %v3090, 16
        %v3294 = vrot.slane %v3292, 4
        %v3295 = vor.u32 %v3291, %v3294
        %v3296 = vsel %vm2005, %v3287, %v3295
        %v3298 = vshrl.u32 %v3126, 16
        %v3300 = vrot.slane %v3298, 3
        %v3301 = vshll.u32 %v3126, 16
        %v3303 = vrot.slane %v3301, 4
        %v3304 = vor.u32 %v3300, %v3303
        %v3305 = vsel %vm2005, %v3304, %v3304
        %v3307 = vshrl.u32 %v3148, 16
        %v3309 = vrot.slane %v3307, 3
        %v3310 = vshll.u32 %v3148, 16
        %v3312 = vrot.slane %v3310, 4
        %v3313 = vor.u32 %v3309, %v3312
        %v3315 = vshrl.u32 %v3150, 16
        %v3317 = vrot.slane %v3315, 3
        %v3318 = vshll.u32 %v3150, 16
        %v3320 = vrot.slane %v3318, 4
        %v3321 = vor.u32 %v3317, %v3320
        %v3322 = vsel %vm2005, %v3313, %v3321
        %s3335 = scalar_lea.vmem [#allocation4], 384
        %v3336 = vld [vmem:[%s3335] sm:$0xf]
        %v3337 = vld [vmem:[%s3335 + $0x4] sm:$0xf]
        %v3338 = vld [vmem:[%s3335 + $0x8] sm:$0xf]
        %v3339 = vld [vmem:[%s3335 + $0xc] sm:$0xf]
        %v3340 = vld [vmem:[%s3335 + $0x10] sm:$0xf]
        %v3341 = vld [vmem:[%s3335 + $0x14] sm:$0xf]
        %v3342 = vld [vmem:[%s3335 + $0x18] sm:$0xf]
        %v3343 = vld [vmem:[%s3335 + $0x1c] sm:$0xf]
        %v3344 = vld [vmem:[%s3335 + $0x20] sm:$0xf]
        %v3345 = vld [vmem:[%s3335 + $0x24] sm:$0xf]
        %v3346 = vld [vmem:[%s3335 + $0x28] sm:$0xf]
        %v3347 = vld [vmem:[%s3335 + $0x2c] sm:$0xf]
        %v3348 = vld [vmem:[%s3335 + $0x30] sm:$0xf]
        %v3349 = vld [vmem:[%s3335 + $0x34] sm:$0xf]
        %v3350 = vld [vmem:[%s3335 + $0x38] sm:$0xf]
        %v3351 = vld [vmem:[%s3335 + $0x3c] sm:$0xf]
        %v3352 = vld [vmem:[%s3335 + $0x40] sm:$0xf]
        %v3353 = vld [vmem:[%s3335 + $0x44] sm:$0xf]
        %v3354 = vld [vmem:[%s3335 + $0x48] sm:$0xf]
        %v3355 = vld [vmem:[%s3335 + $0x4c] sm:$0xf]
        %v3356 = vld [vmem:[%s3335 + $0x50] sm:$0xf]
        %v3357 = vld [vmem:[%s3335 + $0x54] sm:$0xf]
        %v3358 = vld [vmem:[%s3335 + $0x58] sm:$0xf]
        %v3359 = vld [vmem:[%s3335 + $0x5c] sm:$0xf]
        %v3360 = vld [vmem:[%s3335 + $0x60] sm:$0xf]
        %v3361 = vld [vmem:[%s3335 + $0x64] sm:$0xf]
        %v3362 = vld [vmem:[%s3335 + $0x68] sm:$0xf]
        %v3363 = vld [vmem:[%s3335 + $0x6c] sm:$0xf]
        %v3364 = vld [vmem:[%s3335 + $0x70] sm:$0xf]
        %v3365 = vld [vmem:[%s3335 + $0x74] sm:$0xf]
        %v3366 = vld [vmem:[%s3335 + $0x78] sm:$0xf]
        %v3367 = vld [vmem:[%s3335 + $0x7c] sm:$0xf]
        %v3368 = vld [vmem:[%s3335 + $0x80] sm:$0xf]
        %v3369 = vld [vmem:[%s3335 + $0x84] sm:$0xf]
        %v3370 = vld [vmem:[%s3335 + $0x88] sm:$0xf]
        %v3371 = vld [vmem:[%s3335 + $0x8c] sm:$0xf]
        %v3372 = vld [vmem:[%s3335 + $0x90] sm:$0xf]
        %v3373 = vld [vmem:[%s3335 + $0x94] sm:$0xf]
        %v3374 = vld [vmem:[%s3335 + $0x98] sm:$0xf]
        %v3375 = vld [vmem:[%s3335 + $0x9c] sm:$0xf]
        %v3376 = vld [vmem:[%s3335 + $0xa0] sm:$0xf]
        %v3377 = vld [vmem:[%s3335 + $0xa4] sm:$0xf]
        %v3378 = vld [vmem:[%s3335 + $0xa8] sm:$0xf]
        %v3379 = vld [vmem:[%s3335 + $0xac] sm:$0xf]
        %v3380 = vld [vmem:[%s3335 + $0xb0] sm:$0xf]
        %v3381 = vld [vmem:[%s3335 + $0xb4] sm:$0xf]
        %v3382 = vld [vmem:[%s3335 + $0xb8] sm:$0xf]
        %v3383 = vld [vmem:[%s3335 + $0xbc] sm:$0xf]
        %v3432 = vunpack.c.l.b16 %v3336
        %v3433 = vunpack.c.l.b16 %v3337
        %v3434 = vunpack.c.l.b16 %v3338
        %v3435 = vunpack.c.l.b16 %v3339
        %v3436 = vunpack.c.l.b16 %v3340
        %v3437 = vunpack.c.l.b16 %v3341
        %v3438 = vunpack.c.l.b16 %v3342
        %v3439 = vunpack.c.l.b16 %v3343
        %v3440 = vunpack.c.l.b16 %v3344
        %v3441 = vunpack.c.l.b16 %v3345
        %v3442 = vunpack.c.l.b16 %v3346
        %v3443 = vunpack.c.l.b16 %v3347
        %v3444 = vunpack.c.l.b16 %v3348
        %v3445 = vunpack.c.l.b16 %v3349
        %v3446 = vunpack.c.l.b16 %v3350
        %v3447 = vunpack.c.l.b16 %v3351
        %v3448 = vunpack.c.l.b16 %v3352
        %v3449 = vunpack.c.l.b16 %v3353
        %v3450 = vunpack.c.l.b16 %v3354
        %v3451 = vunpack.c.l.b16 %v3355
        %v3452 = vunpack.c.l.b16 %v3356
        %v3453 = vunpack.c.l.b16 %v3357
        %v3454 = vunpack.c.l.b16 %v3358
        %v3455 = vunpack.c.l.b16 %v3359
        %v3456 = vunpack.c.l.b16 %v3360
        %v3457 = vunpack.c.l.b16 %v3361
        %v3458 = vunpack.c.l.b16 %v3362
        %v3459 = vunpack.c.l.b16 %v3363
        %v3460 = vunpack.c.l.b16 %v3364
        %v3461 = vunpack.c.l.b16 %v3365
        %v3462 = vunpack.c.l.b16 %v3366
        %v3463 = vunpack.c.l.b16 %v3367
        %v3464 = vunpack.c.l.b16 %v3368
        %v3465 = vunpack.c.l.b16 %v3369
        %v3466 = vunpack.c.l.b16 %v3370
        %v3467 = vunpack.c.l.b16 %v3371
        %v3468 = vunpack.c.l.b16 %v3372
        %v3469 = vunpack.c.l.b16 %v3373
        %v3470 = vunpack.c.l.b16 %v3374
        %v3471 = vunpack.c.l.b16 %v3375
        %v3472 = vunpack.c.l.b16 %v3376
        %v3473 = vunpack.c.l.b16 %v3377
        %v3474 = vunpack.c.l.b16 %v3378
        %v3475 = vunpack.c.l.b16 %v3379
        %v3476 = vunpack.c.l.b16 %v3380
        %v3477 = vunpack.c.l.b16 %v3381
        %v3478 = vunpack.c.l.b16 %v3382
        %v3479 = vunpack.c.l.b16 %v3383
        %v3480 = vpack.c.b16 %v3433, %v3432
        %v3481 = vpack.c.b16 %v3435, %v3434
        %v3482 = vpack.c.b16 %v3437, %v3436
        %v3483 = vpack.c.b16 %v3439, %v3438
        %v3484 = vpack.c.b16 %v3441, %v3440
        %v3485 = vpack.c.b16 %v3443, %v3442
        %v3486 = vpack.c.b16 %v3445, %v3444
        %v3487 = vpack.c.b16 %v3447, %v3446
        %v3488 = vpack.c.b16 %v3449, %v3448
        %v3489 = vpack.c.b16 %v3451, %v3450
        %v3490 = vpack.c.b16 %v3453, %v3452
        %v3491 = vpack.c.b16 %v3455, %v3454
        %v3492 = vpack.c.b16 %v3457, %v3456
        %v3493 = vpack.c.b16 %v3459, %v3458
        %v3494 = vpack.c.b16 %v3461, %v3460
        %v3495 = vpack.c.b16 %v3463, %v3462
        %v3496 = vpack.c.b16 %v3465, %v3464
        %v3497 = vpack.c.b16 %v3467, %v3466
        %v3498 = vpack.c.b16 %v3469, %v3468
        %v3499 = vpack.c.b16 %v3471, %v3470
        %v3500 = vpack.c.b16 %v3473, %v3472
        %v3501 = vpack.c.b16 %v3475, %v3474
        %v3502 = vpack.c.b16 %v3477, %v3476
        %v3503 = vpack.c.b16 %v3479, %v3478
        %3528 = vmatpush.bf16.msra.mxu0 %v3487
        %3529 = vmatpush.bf16.msra.mxu0 %v3486
        %3530 = vmatpush.bf16.msra.mxu0 %v3485
        %3531 = vmatpush.bf16.msra.mxu0 %v3484
        %3532 = vmatpush.bf16.msra.mxu0 %v3483
        %3533 = vmatpush.bf16.msra.mxu0 %v3482
        %3534 = vmatpush.bf16.msra.mxu0 %v3481
        %3535 = vmatpush.bf16.msra.mxu0 %v3480
        %3536 = vmatmul.bf16.gmra.mxu0 %v3167
        %v3537 = vpop.f32.mrf.mxu0
        %v3538 = vadd.f32 0.0, %v3537
        %v3539 = vpop.f32.mrf.mxu0
        %v3540 = vadd.f32 0.0, %v3539
        %3541 = vmatmul.bf16.gmra.mxu0 %v3210
        %v3542 = vpop.f32.mrf.mxu0
        %v3543 = vadd.f32 0.0, %v3542
        %v3544 = vpop.f32.mrf.mxu0
        %v3545 = vadd.f32 0.0, %v3544
        %3546 = vmatmul.bf16.gmra.mxu0 %v3253
        %v3547 = vpop.f32.mrf.mxu0
        %v3548 = vadd.f32 0.0, %v3547
        %v3549 = vpop.f32.mrf.mxu0
        %v3550 = vadd.f32 0.0, %v3549
        %3551 = vmatmul.bf16.gmra.mxu0 %v3296
        %v3552 = vpop.f32.mrf.mxu0
        %v3553 = vadd.f32 0.0, %v3552
        %v3554 = vpop.f32.mrf.mxu0
        %v3555 = vadd.f32 0.0, %v3554
        %3556 = vdwg.mxu0
        %3557 = vmatpush.bf16.msra.mxu0 %v3495
        %3558 = vmatpush.bf16.msra.mxu0 %v3494
        %3559 = vmatpush.bf16.msra.mxu0 %v3493
        %3560 = vmatpush.bf16.msra.mxu0 %v3492
        %3561 = vmatpush.bf16.msra.mxu0 %v3491
        %3562 = vmatpush.bf16.msra.mxu0 %v3490
        %3563 = vmatpush.bf16.msra.mxu0 %v3489
        %3564 = vmatpush.bf16.msra.mxu0 %v3488
        %3565 = vmatmul.bf16.gmra.mxu0 %v3176
        %v3566 = vpop.f32.mrf.mxu0
        %v3567 = vadd.f32 %v3538, %v3566
        %v3568 = vpop.f32.mrf.mxu0
        %v3569 = vadd.f32 %v3540, %v3568
        %3570 = vmatmul.bf16.gmra.mxu0 %v3219
        %v3571 = vpop.f32.mrf.mxu0
        %v3572 = vadd.f32 %v3543, %v3571
        %v3573 = vpop.f32.mrf.mxu0
        %v3574 = vadd.f32 %v3545, %v3573
        %3575 = vmatmul.bf16.gmra.mxu0 %v3262
        %v3576 = vpop.f32.mrf.mxu0
        %v3577 = vadd.f32 %v3548, %v3576
        %v3578 = vpop.f32.mrf.mxu0
        %v3579 = vadd.f32 %v3550, %v3578
        %3580 = vmatmul.bf16.gmra.mxu0 %v3305
        %v3581 = vpop.f32.mrf.mxu0
        %v3582 = vadd.f32 %v3553, %v3581
        %v3583 = vpop.f32.mrf.mxu0
        %v3584 = vadd.f32 %v3555, %v3583
        %3585 = vdwg.mxu0
        %3586 = vmatpush.bf16.msra.mxu0 %v3503
        %3587 = vmatpush.bf16.msra.mxu0 %v3502
        %3588 = vmatpush.bf16.msra.mxu0 %v3501
        %3589 = vmatpush.bf16.msra.mxu0 %v3500
        %3590 = vmatpush.bf16.msra.mxu0 %v3499
        %3591 = vmatpush.bf16.msra.mxu0 %v3498
        %3592 = vmatpush.bf16.msra.mxu0 %v3497
        %3593 = vmatpush.bf16.msra.mxu0 %v3496
        %3594 = vmatmul.bf16.gmra.mxu0 %v3193
        %v3595 = vpop.f32.mrf.mxu0
        %v3596 = vadd.f32 %v3567, %v3595
        %v3597 = vpop.f32.mrf.mxu0
        %v3598 = vadd.f32 %v3569, %v3597
        %3599 = vmatmul.bf16.gmra.mxu0 %v3236
        %v3600 = vpop.f32.mrf.mxu0
        %v3601 = vadd.f32 %v3572, %v3600
        %v3602 = vpop.f32.mrf.mxu0
        %v3603 = vadd.f32 %v3574, %v3602
        %3604 = vmatmul.bf16.gmra.mxu0 %v3279
        %v3605 = vpop.f32.mrf.mxu0
        %v3606 = vadd.f32 %v3577, %v3605
        %v3607 = vpop.f32.mrf.mxu0
        %v3608 = vadd.f32 %v3579, %v3607
        %3609 = vmatmul.bf16.gmra.mxu0 %v3322
        %v3610 = vpop.f32.mrf.mxu0
        %v3611 = vadd.f32 %v3582, %v3610
        %v3612 = vpop.f32.mrf.mxu0
        %v3613 = vadd.f32 %v3584, %v3612
        %3614 = vdwg.mxu0
        %v3615 = vadd.f32 %v3023, %v3596
        %v3616 = vadd.f32 %v3025, %v3598
        %v3617 = vadd.f32 %v3028, %v3601
        %v3618 = vadd.f32 %v3030, %v3603
        %v3619 = vadd.f32 %v3033, %v3606
        %v3620 = vadd.f32 %v3035, %v3608
        %v3621 = vadd.f32 %v3038, %v3611
        %v3622 = vadd.f32 %v3040, %v3613
        %v3623 = vld [vmem:[%s1278] sm:$0xf]
        %v3624 = vld [vmem:[%s1278 + $0x4] sm:$0xf]
        %v3625 = vld [vmem:[%s1278 + $0x8] sm:$0x1]
        %v3626 = vld [vmem:[%s1278 + $0xc] sm:$0xf]
        %v3627 = vld [vmem:[%s1278 + $0x10] sm:$0xf]
        %v3628 = vld [vmem:[%s1278 + $0x14] sm:$0x1]
        %v3629 = vld [vmem:[%s1278 + $0x18] sm:$0xf]
        %v3630 = vld [vmem:[%s1278 + $0x1c] sm:$0xf]
        %v3631 = vld [vmem:[%s1278 + $0x20] sm:$0x1]
        %v3632 = vld [vmem:[%s1278 + $0x24] sm:$0xf]
        %v3633 = vld [vmem:[%s1278 + $0x28] sm:$0xf]
        %v3634 = vld [vmem:[%s1278 + $0x2c] sm:$0x1]
        %vm3635 = vsmask.f32 3328
        %vm3636 = vsmask.f32 7440
        %vm3637 = vmor %vm3635, %vm3636
        %v3639 = vshrl.u32 %v3623, 16
        %v3641 = vrot.slane %v3639, 4
        %v3642 = vshll.u32 %v3623, 16
        %v3644 = vrot.slane %v3642, 5
        %v3645 = vor.u32 %v3641, %v3644
        %v3646 = vrot.slane %v3645, 4
        %v3648 = vshll.u32 %v3624, 16
        %v3650 = vrot.slane %v3648, 5
        %v3651 = vsel %vm3637, %v3646, %v3650
        %v3652 = vshrl.u32 %v3624, 16
        %v3654 = vrot.slane %v3652, 4
        %v3655 = vor.u32 %v3654, %v3650
        %v3656 = vrot.slane %v3655, 4
        %v3658 = vshll.u32 %v3625, 16
        %v3660 = vrot.slane %v3658, 5
        %v3661 = vsel %vm3637, %v3656, %v3660
        %v3663 = vshrl.u32 %v3626, 16
        %v3665 = vrot.slane %v3663, 4
        %v3666 = vshll.u32 %v3626, 16
        %v3668 = vrot.slane %v3666, 5
        %v3669 = vor.u32 %v3665, %v3668
        %v3670 = vrot.slane %v3669, 4
        %v3672 = vshll.u32 %v3627, 16
        %v3674 = vrot.slane %v3672, 5
        %v3675 = vsel %vm3637, %v3670, %v3674
        %v3676 = vshrl.u32 %v3627, 16
        %v3678 = vrot.slane %v3676, 4
        %v3679 = vor.u32 %v3678, %v3674
        %v3680 = vrot.slane %v3679, 4
        %v3682 = vshll.u32 %v3628, 16
        %v3684 = vrot.slane %v3682, 5
        %v3685 = vsel %vm3637, %v3680, %v3684
        %v3687 = vshrl.u32 %v3629, 16
        %v3689 = vrot.slane %v3687, 4
        %v3690 = vshll.u32 %v3629, 16
        %v3692 = vrot.slane %v3690, 5
        %v3693 = vor.u32 %v3689, %v3692
        %v3694 = vrot.slane %v3693, 4
        %v3696 = vshll.u32 %v3630, 16
        %v3698 = vrot.slane %v3696, 5
        %v3699 = vsel %vm3637, %v3694, %v3698
        %v3700 = vshrl.u32 %v3630, 16
        %v3702 = vrot.slane %v3700, 4
        %v3703 = vor.u32 %v3702, %v3698
        %v3704 = vrot.slane %v3703, 4
        %v3706 = vshll.u32 %v3631, 16
        %v3708 = vrot.slane %v3706, 5
        %v3709 = vsel %vm3637, %v3704, %v3708
        %v3711 = vshrl.u32 %v3632, 16
        %v3713 = vrot.slane %v3711, 4
        %v3714 = vshll.u32 %v3632, 16
        %v3716 = vrot.slane %v3714, 5
        %v3717 = vor.u32 %v3713, %v3716
        %v3718 = vrot.slane %v3717, 4
        %v3720 = vshll.u32 %v3633, 16
        %v3722 = vrot.slane %v3720, 5
        %v3723 = vsel %vm3637, %v3718, %v3722
        %v3724 = vshrl.u32 %v3633, 16
        %v3726 = vrot.slane %v3724, 4
        %v3727 = vor.u32 %v3726, %v3722
        %v3728 = vrot.slane %v3727, 4
        %v3730 = vshll.u32 %v3634, 16
        %v3732 = vrot.slane %v3730, 5
        %v3733 = vsel %vm3637, %v3728, %v3732
        %v3742 = vunpack.c.l.bf16 %v3651
        %v3743 = vunpack.c.l.bf16 %v3661
        %v3744 = vunpack.c.l.bf16 %v3675
        %v3745 = vunpack.c.l.bf16 %v3685
        %v3746 = vunpack.c.l.bf16 %v3699
        %v3747 = vunpack.c.l.bf16 %v3709
        %v3748 = vunpack.c.l.bf16 %v3723
        %v3749 = vunpack.c.l.bf16 %v3733
        %v3750 = vadd.f32 %v3615, %v3742
        %v3751 = vadd.f32 %v3616, %v3743
        %v3752 = vadd.f32 %v3617, %v3744
        %v3753 = vadd.f32 %v3618, %v3745
        %v3754 = vadd.f32 %v3619, %v3746
        %v3755 = vadd.f32 %v3620, %v3747
        %v3756 = vadd.f32 %v3621, %v3748
        %v3757 = vadd.f32 %v3622, %v3749
        %v3758 = vmax.f32 %v3750, 0.0
        %v3759 = vmax.f32 %v3751, 0.0
        %v3760 = vmax.f32 %v3752, 0.0
        %v3761 = vmax.f32 %v3753, 0.0
        %v3762 = vmax.f32 %v3754, 0.0
        %v3763 = vmax.f32 %v3755, 0.0
        %v3764 = vmax.f32 %v3756, 0.0
        %v3765 = vmax.f32 %v3757, 0.0
        %v3766 = vpack.c.bf16 %v3758, %v3758
        %v3767 = vpack.c.bf16 %v3759, %v3759
        %v3768 = vpack.c.bf16 %v3760, %v3760
        %v3769 = vpack.c.bf16 %v3761, %v3761
        %v3770 = vpack.c.bf16 %v3762, %v3762
        %v3771 = vpack.c.bf16 %v3763, %v3763
        %v3772 = vpack.c.bf16 %v3764, %v3764
        %v3773 = vpack.c.bf16 %v3765, %v3765
        %3774 = vst [vmem:[%s194] sm:$0xf] %v3766
        %3775 = vst [vmem:[%s194 + $0x4] sm:$0xf] %v3767
        %3776 = vst [vmem:[%s194 + $0x8] sm:$0xf] %v3768
        %3777 = vst [vmem:[%s194 + $0xc] sm:$0xf] %v3769
        %3778 = vst [vmem:[%s194 + $0x10] sm:$0xf] %v3770
        %3779 = vst [vmem:[%s194 + $0x14] sm:$0xf] %v3771
        %3780 = vst [vmem:[%s194 + $0x18] sm:$0xf] %v3772
        %3781 = vst [vmem:[%s194 + $0x1c] sm:$0xf] %v3773
        %s3782 = sand.u32 %s108, 1
        %s3783 = scalar_lea.sflag [#allocation6], %s3782
        %s3784 = sand.u32 %s108, 1
        %s3785 = smul.addr %s3784, 32
        %s3786 = scalar_lea.vmem [#allocation7], %s3785
        // Predicated region
        $region45: #{tpu_custom_call.1} parent=31 // pred_check
          %p3787 = pneg %p118
        $region46: #{tpu_custom_call.1} parent=31 // pred_check_branch
          %3789 = sbr.rel (%p3787) target = $region48
        $region47: #{tpu_custom_call.1} parent=31 // pred_region
          %s3790 = smul.u32 4, %s23
          %3792 = vsyncadd %s3783, 0
          %s3793 = smul.addr %s3790, 2
          %s3794 = smul.addr %s22, 32
          %s3795 = sadd.s32 %s3793, %s3794
          %s3796 = smul.addr %s3795, 4
          %s3797 = scalar_lea.hbm %s3, %s3796
          %s3798 = sshll.u32 %s3786, 4
          %s3799 = int_to_ptr.vmem [resolvable:$true] %s3798
          %s3800 = sshll.u32 %s3797, 4
          %s3801 = int_to_ptr.hbm [resolvable:$true] %s3800
          %3806 = dma.vmem_to_hbm [thread:$0]  %s3799, 512, %s3801, %s3783, 64, 64, 4
        $region48: #{tpu_custom_call.1} parent=31 // pred_fallthru
          _
      $region32: #{tpu_custom_call.1} parent=5 // pred_fallthru
        _
      %p3807 = scmp.le.s32.totalorder 2, %s13
      // Predicated region
      $region49: #{tpu_custom_call.1} parent=5 // pred_check
        %p3808 = pneg %p3807
      $region50: #{tpu_custom_call.1} parent=5 // pred_check_branch
        %3810 = sbr.rel (%p3808) target = $region52
      $region51: #{tpu_custom_call.1} parent=5 // pred_region
        %s3811 = ssub.s32 %s13, 2
        // Predicated region
        $region53: #{tpu_custom_call.1} parent=51 // pred_check
          %p3812 = pneg %p124
        $region54: #{tpu_custom_call.1} parent=51 // pred_check_branch
          %3814 = sbr.rel (%p3812) target = $region56
        $region55: #{tpu_custom_call.1} parent=51 // pred_region
          %s3815 = sand.u32 %s109, 1
          %s3816 = scalar_lea.sflag [#allocation6], %s3815
          %s3817 = sand.u32 %s109, 1
          %s3818 = smul.addr %s3817, 32
          %s3819 = scalar_lea.vmem [#allocation7], %s3818
          %3821 = dma.done %s3816, 512
        $region56: #{tpu_custom_call.1} parent=51 // pred_fallthru
          _
      $region52: #{tpu_custom_call.1} parent=5 // pred_fallthru
        _
    $region6: #{tpu_custom_call.1} parent=1 // loop_footer
      %s17 = sadd.s32 1, %s13
    $region7: #{tpu_custom_call.1} parent=1 // loop_footer_branch
      %12 = sbr.rel target = $region3
    $region8: #{tpu_custom_call.1} parent=1 // loop_exit
      _
    %3822 = vsyncpa [#allocation5], 1
    %s3823 = scalar_lea.sflag [#allocation5], 1
    %3824 = vsyncpa %s3823, 1
    %3825 = vsyncpa [#allocation6], 1
    %s3826 = scalar_lea.sflag [#allocation6], 1
    %3827 = vsyncpa %s3826, 1

</llo_original>
